<compile_context>
chip_gen: v6e
topology: v6e:2x2x1
jax: 0.10.0
libtpu: 0.0.40
codegen_flags: <defaults>
</compile_context>

<pallas_src>
import jax
import jax.numpy as jnp
from jax.experimental import pallas as pl
from jax.experimental.pallas import tpu as pltpu


# ------------------------------ fused kernel ---------------------------------

def _sketch_rnn_kernel(x_ref, eps_ref,
                       enc_w_ih_ref, enc_w_hh_ref, enc_b_ref,
                       mu_w_ref, mu_b_ref, sig_w_ref, sig_b_ref,
                       fc_w_ref, fc_b_ref,
                       dec_w_x_ref, dec_w_z_ref, dec_w_hh_ref, dec_b_ref,
                       out_w_ref, out_b_ref,
                       y_ref, mu_ref, sig_ref):
    # x_ref:        [T*B, 2D]   time-major rows; lanes = [x_t , x_{T-1-t}]
    # eps_ref:      [B, Z]
    # enc_w_ih_ref: [2D, 8He]   block-structured: fwd-x rows feed dir0 columns,
    #                           reversed-x rows feed dir1 columns; column layout
    #                           [i_d0|i_d1 | f_d0|f_d1 | o_d0|o_d1 | g_d0|g_d1]
    # enc_w_hh_ref: [2He, 8He]  block-structured (h_d0 rows -> dir0 cols, etc.)
    # enc_b_ref:    [1, 8He]
    # mu_w/sig_w:   [2He, Z], mu_b/sig_b: [1, Z]
    # fc_w_ref:     [Z, 2Hd], fc_b_ref: [1, 2Hd]
    # dec_w_x_ref:  [2D, 4Hd]   reversed-x rows are zero; columns [i|f|o|g]
    # dec_w_z_ref:  [Z, 4Hd]; dec_w_hh_ref: [Hd, 4Hd]; dec_b_ref: [1, 4Hd]
    # out_w_ref:    [Hd, O]; out_b_ref: [1, O]
    # y_ref:        [T*B, O]; mu_ref / sig_ref: [B, Z]
    B, Z = eps_ref.shape
    TB = x_ref.shape[0]
    T = TB // B
    He2 = enc_w_hh_ref.shape[0]          # 2 * enc_h (both directions stacked)
    Hd = dec_w_hh_ref.shape[0]

    x = x_ref[...]                        # [T*B, 2D]

    # ---------------- encoder: both directions in one recurrence ----------------
    # Hoisted input->hidden gates for ALL steps and BOTH directions: one matmul.
    xg = (jnp.dot(x, enc_w_ih_ref[...], preferred_element_type=jnp.float32)
          + enc_b_ref[...])               # [T*B, 8He]
    w_hh = enc_w_hh_ref[...]

    h = jnp.zeros((B, He2), jnp.float32)  # [fwd | bwd]
    c = jnp.zeros((B, He2), jnp.float32)
    for t in range(T):                    # tiny static trip count: fully unrolled
        lo = t * B
        pre = xg[lo:lo + B, :] + jnp.dot(h, w_hh,
                                         preferred_element_type=jnp.float32)
        sg = jax.nn.sigmoid(pre[:, :3 * He2])       # one EUP slab for i|f|o
        i_g = sg[:, :He2]
        f_g = sg[:, He2:2 * He2]
        o_g = sg[:, 2 * He2:]
        g_g = jnp.tanh(pre[:, 3 * He2:])            # one EUP slab for g
        c = f_g * c + i_g * g_g
        h = o_g * jnp.tanh(c)

    # ---------------- heads + reparameterization ----------------
    mu = jnp.dot(h, mu_w_ref[...], preferred_element_type=jnp.float32) + mu_b_ref[...]
    sig_hat = (jnp.dot(h, sig_w_ref[...], preferred_element_type=jnp.float32)
               + sig_b_ref[...])
    mu_ref[...] = mu
    sig_ref[...] = sig_hat
    z = mu + jnp.exp(sig_hat * 0.5) * eps_ref[...]  # [B, Z]

    # ---------------- decoder init: (h0, c0) = split(tanh(fc(z))) ----------------
    h_c = jnp.tanh(jnp.dot(z, fc_w_ref[...], preferred_element_type=jnp.float32)
                   + fc_b_ref[...])                 # [B, 2Hd]
    hd = h_c[:, :Hd]
    cd = h_c[:, Hd:]

    # ---------------- decoder recurrence (fused gates) ----------------
    # x part hoisted for all T steps (reversed-x rows of the weight are zero);
    # z part is time-invariant and computed once.
    xgd = jnp.dot(x, dec_w_x_ref[...], preferred_element_type=jnp.float32)   # [T*B, 4Hd]
    zg = (jnp.dot(z, dec_w_z_ref[...], preferred_element_type=jnp.float32)
          + dec_b_ref[...])                                                  # [B, 4Hd]
    w_hh_d = dec_w_hh_ref[...]

    hs = []
    for t in range(T):
        lo = t * B
        pre = xgd[lo:lo + B, :] + zg + jnp.dot(hd, w_hh_d,
                                               preferred_element_type=jnp.float32)
        sg = jax.nn.sigmoid(pre[:, :3 * Hd])
        i_g = sg[:, :Hd]
        f_g = sg[:, Hd:2 * Hd]
        o_g = sg[:, 2 * Hd:]
        g_g = jnp.tanh(pre[:, 3 * Hd:])
        cd = f_g * cd + i_g * g_g
        hd = o_g * jnp.tanh(cd)
        hs.append(hd)

    # Output projection hoisted out of the recurrence: one matmul, one store.
    h_all = jnp.concatenate(hs, axis=0)             # [T*B, Hd]
    y_ref[...] = (jnp.dot(h_all, out_w_ref[...], preferred_element_type=jnp.float32)
                  + out_b_ref[...])


# ------------------------------ public wrapper --------------------------------

def sketch_rnn_forward(packed, x_btd, eps):
    # x_btd: [B, T, input_size] (PyTorch batch-first), eps: [B, Z]
    B, T, D = x_btd.shape
    Z = eps.shape[-1]
    O = packed["out_w"].shape[-1]

    x_tbd = jnp.transpose(x_btd, (1, 0, 2))                       # [T, B, D]
    # Lanes = [x_t , x_{T-1-t}]: one input feeds both encoder directions
    # (block-structured weights pick the right half per direction).
    x_cat = jnp.concatenate([x_tbd, x_tbd[::-1]], axis=-1).reshape(T * B, 2 * D)

    args = (x_cat, eps,
            packed["enc_w_ih"], packed["enc_w_hh"], packed["enc_b"],
            packed["mu_w"], packed["mu_b"], packed["sig_w"], packed["sig_b"],
            packed["fc_w"], packed["fc_b"],
            packed["dec_w_x"], packed["dec_w_z"], packed["dec_w_hh"], packed["dec_b"],
            packed["out_w"], packed["out_b"])

    vmem = lambda: pl.BlockSpec(memory_space=pltpu.MemorySpace.VMEM)
    y_flat, mu, sig_hat = pl.pallas_call(
        _sketch_rnn_kernel,
        out_shape=(jax.ShapeDtypeStruct((T * B, O), jnp.float32),
                   jax.ShapeDtypeStruct((B, Z), jnp.float32),
                   jax.ShapeDtypeStruct((B, Z), jnp.float32)),
        in_specs=[vmem() for _ in args],
        out_specs=(vmem(), vmem(), vmem()),
    )(*args)

    y = jnp.transpose(y_flat.reshape(T, B, O), (1, 0, 2))         # [B, T, O]
    return y, mu, sig_hat


# --------------------- parameter init (natural layout) ------------------------
# Natural (PyTorch-like) layout: per direction / per gate, gate order (i, f, o, g).

def _uniform(key, shape, fan_in):
    k = 1.0 / (fan_in ** 0.5)
    return jax.random.uniform(key, shape, jnp.float32, -k, k)


def init_params(key, input_size, enc_h, dec_h, z_size, out_size):
    ks = iter(jax.random.split(key, 15))
    nat = {}
    nat["enc_w_ih"] = _uniform(next(ks), (2, 4, input_size, enc_h), enc_h)
    nat["enc_w_hh"] = _uniform(next(ks), (2, 4, enc_h, enc_h), enc_h)
    nat["enc_b"] = _uniform(next(ks), (2, 4, enc_h), enc_h)
    nat["mu_w"] = _uniform(next(ks), (2 * enc_h, z_size), 2 * enc_h)
    nat["mu_b"] = _uniform(next(ks), (1, z_size), 2 * enc_h)
    nat["sig_w"] = _uniform(next(ks), (2 * enc_h, z_size), 2 * enc_h)
    nat["sig_b"] = _uniform(next(ks), (1, z_size), 2 * enc_h)
    nat["fc_w"] = _uniform(next(ks), (z_size, 2 * dec_h), z_size)
    nat["fc_b"] = _uniform(next(ks), (1, 2 * dec_h), z_size)
    nat["dec_w_x"] = _uniform(next(ks), (4, input_size, dec_h), dec_h)
    nat["dec_w_z"] = _uniform(next(ks), (4, z_size, dec_h), dec_h)
    nat["dec_w_hh"] = _uniform(next(ks), (4, dec_h, dec_h), dec_h)
    nat["dec_b"] = _uniform(next(ks), (4, dec_h), dec_h)
    nat["out_w"] = _uniform(next(ks), (dec_h, out_size), dec_h)
    nat["out_b"] = _uniform(next(ks), (1, out_size), dec_h)
    return nat


def pack_params(nat):
    """Pack natural per-direction/per-gate weights into the fused kernel layout."""
    D = nat["enc_w_ih"].shape[2]
    He = nat["enc_w_hh"].shape[-1]
    Hd = nat["dec_w_hh"].shape[-1]
    Z = nat["dec_w_z"].shape[1]

    enc_w_ih = jnp.zeros((2 * D, 8 * He), jnp.float32)
    enc_w_hh = jnp.zeros((2 * He, 8 * He), jnp.float32)
    enc_b = jnp.zeros((1, 8 * He), jnp.float32)
    for d in range(2):
        for k in range(4):
            col = slice(k * 2 * He + d * He, k * 2 * He + (d + 1) * He)
            enc_w_ih = enc_w_ih.at[d * D:(d + 1) * D, col].set(nat["enc_w_ih"][d, k])
            enc_w_hh = enc_w_hh.at[d * He:(d + 1) * He, col].set(nat["enc_w_hh"][d, k])
            enc_b = enc_b.at[0, col].set(nat["enc_b"][d, k])

    dec_w_x = jnp.zeros((2 * D, 4 * Hd), jnp.float32)   # reversed-x rows stay zero
    dec_w_z = jnp.zeros((Z, 4 * Hd), jnp.float32)
    dec_w_hh = jnp.zeros((Hd, 4 * Hd), jnp.float32)
    dec_b = jnp.zeros((1, 4 * Hd), jnp.float32)
    for k in range(4):
        col = slice(k * Hd, (k + 1) * Hd)
        dec_w_x = dec_w_x.at[:D, col].set(nat["dec_w_x"][k])
        dec_w_z = dec_w_z.at[:, col].set(nat["dec_w_z"][k])
        dec_w_hh = dec_w_hh.at[:, col].set(nat["dec_w_hh"][k])
        dec_b = dec_b.at[0, col].set(nat["dec_b"][k])

    return {
        "enc_w_ih": enc_w_ih, "enc_w_hh": enc_w_hh, "enc_b": enc_b,
        "mu_w": nat["mu_w"], "mu_b": nat["mu_b"],
        "sig_w": nat["sig_w"], "sig_b": nat["sig_b"],
        "fc_w": nat["fc_w"], "fc_b": nat["fc_b"],
        "dec_w_x": dec_w_x, "dec_w_z": dec_w_z, "dec_w_hh": dec_w_hh, "dec_b": dec_b,
        "out_w": nat["out_w"], "out_b": nat["out_b"],
    }


# ------------------------------ pure-JAX reference -----------------------------

def _reference_forward(nat, x_btd, eps):
    B, T, _ = x_btd.shape
    Hd = nat["dec_w_hh"].shape[-1]
    x_tbd = jnp.transpose(x_btd, (1, 0, 2))

    def lstm_last(xs, w_ih, w_hh, b):       # gate order (i, f, o, g)
        H = w_hh.shape[-1]
        h = jnp.zeros((B, H), jnp.float32)
        c = jnp.zeros((B, H), jnp.float32)
        for t in range(T):
            pre = [xs[t] @ w_ih[k] + h @ w_hh[k] + b[k] for k in range(4)]
            i = jax.nn.sigmoid(pre[0]); f = jax.nn.sigmoid(pre[1])
            o = jax.nn.sigmoid(pre[2]); g = jnp.tanh(pre[3])
            c = f * c + i * g
            h = o * jnp.tanh(c)
        return h

    h_f = lstm_last(x_tbd, nat["enc_w_ih"][0], nat["enc_w_hh"][0], nat["enc_b"][0])
    h_b = lstm_last(x_tbd[::-1], nat["enc_w_ih"][1], nat["enc_w_hh"][1], nat["enc_b"][1])
    h_cat = jnp.concatenate([h_f, h_b], axis=-1)
    mu = h_cat @ nat["mu_w"] + nat["mu_b"]
    sig_hat = h_cat @ nat["sig_w"] + nat["sig_b"]
    z = mu + jnp.exp(sig_hat / 2.0) * eps

    h_c = jnp.tanh(z @ nat["fc_w"] + nat["fc_b"])
    h, c = h_c[:, :Hd], h_c[:, Hd:]
    ys = []
    for t in range(T):
        pre = [x_tbd[t] @ nat["dec_w_x"][k] + z @ nat["dec_w_z"][k]
               + h @ nat["dec_w_hh"][k] + nat["dec_b"][k] for k in range(4)]
        i = jax.nn.sigmoid(pre[0]); f = jax.nn.sigmoid(pre[1])
        o = jax.nn.sigmoid(pre[2]); g = jnp.tanh(pre[3])
        c = f * c + i * g
        h = o * jnp.tanh(c)
        ys.append(h @ nat["out_w"] + nat["out_b"])
    y = jnp.stack(ys, axis=1)               # [B, T, out]
    return y, mu, sig_hat


# ---------------------------------- main ---------------------------------------

if __name__ == "__main__":
    B, T = 2, 8
    input_size = 5
    enc_h = 32
    dec_h = 32
    z_size = 16
    dec_out_size = 6

    key = jax.random.PRNGKey(0)
    k_x, k_eps, k_params = jax.random.split(key, 3)
    x = jax.random.normal(k_x, (B, T, input_size), jnp.float32)
    eps = jax.random.normal(k_eps, (B, z_size), jnp.float32)
    nat = init_params(k_params, input_size, enc_h, dec_h, z_size, dec_out_size)
    packed = pack_params(nat)

    fwd = jax.jit(sketch_rnn_forward)
    y, mu, sig_hat = fwd(packed, x, eps)
    jax.block_until_ready((y, mu, sig_hat))

    assert y.shape == (B, T, dec_out_size)
    assert mu.shape == (B, z_size)
    assert sig_hat.shape == (B, z_size)

    y_ref, mu_ref, sig_ref = _reference_forward(nat, x, eps)
    assert jnp.allclose(mu, mu_ref, rtol=5e-3, atol=5e-3)
    assert jnp.allclose(sig_hat, sig_ref, rtol=5e-3, atol=5e-3)
    assert jnp.allclose(y, y_ref, rtol=5e-3, atol=5e-3)

    print("KERNEL_OK")
</pallas_src>

<mosaic_0001>
module attributes {stable_mosaic.version = 11 : i64} {
  func.func @_sketch_rnn_kernel(%arg0: memref<16x10xf32, #tpu.memory_space<vmem>>, %arg1: memref<2x16xf32, #tpu.memory_space<vmem>>, %arg2: memref<10x256xf32, #tpu.memory_space<vmem>>, %arg3: memref<64x256xf32, #tpu.memory_space<vmem>>, %arg4: memref<1x256xf32, #tpu.memory_space<vmem>>, %arg5: memref<64x16xf32, #tpu.memory_space<vmem>>, %arg6: memref<1x16xf32, #tpu.memory_space<vmem>>, %arg7: memref<64x16xf32, #tpu.memory_space<vmem>>, %arg8: memref<1x16xf32, #tpu.memory_space<vmem>>, %arg9: memref<16x64xf32, #tpu.memory_space<vmem>>, %arg10: memref<1x64xf32, #tpu.memory_space<vmem>>, %arg11: memref<10x128xf32, #tpu.memory_space<vmem>>, %arg12: memref<16x128xf32, #tpu.memory_space<vmem>>, %arg13: memref<32x128xf32, #tpu.memory_space<vmem>>, %arg14: memref<1x128xf32, #tpu.memory_space<vmem>>, %arg15: memref<32x6xf32, #tpu.memory_space<vmem>>, %arg16: memref<1x6xf32, #tpu.memory_space<vmem>>, %arg17: memref<16x6xf32, #tpu.memory_space<vmem>>, %arg18: memref<2x16xf32, #tpu.memory_space<vmem>>, %arg19: memref<2x16xf32, #tpu.memory_space<vmem>>) attributes {dimension_semantics = [], scalar_prefetch = 0 : i64, scratch_operands = 0 : i64, tpu.core_type = #tpu.core_type<tc>} {
    %c0 = arith.constant 0 : index
    %c0_0 = arith.constant 0 : index
    %0 = vector.load %arg0[%c0, %c0_0] : memref<16x10xf32, #tpu.memory_space<vmem>>, vector<16x10xf32>
    %c0_1 = arith.constant 0 : index
    %c0_2 = arith.constant 0 : index
    %1 = vector.load %arg2[%c0_1, %c0_2] : memref<10x256xf32, #tpu.memory_space<vmem>>, vector<10x256xf32>
    %cst = arith.constant dense<0.000000e+00> : vector<16x256xf32>
    %2 = tpu.matmul %0, %1, %cst {dimension_numbers = #tpu.dot_dimension_numbers<[1], [0], [0], [1], [0, 0, 1, 1], [], []>} : vector<16x10xf32>, vector<10x256xf32>, vector<16x256xf32> -> vector<16x256xf32>
    %c0_3 = arith.constant 0 : index
    %c0_4 = arith.constant 0 : index
    %3 = vector.load %arg4[%c0_3, %c0_4] : memref<1x256xf32, #tpu.memory_space<vmem>>, vector<1x256xf32>
    %4 = vector.broadcast %3 : vector<1x256xf32> to vector<16x256xf32>
    %5 = arith.addf %2, %4 : vector<16x256xf32>
    %c0_5 = arith.constant 0 : index
    %c0_6 = arith.constant 0 : index
    %6 = vector.load %arg3[%c0_5, %c0_6] : memref<64x256xf32, #tpu.memory_space<vmem>>, vector<64x256xf32>
    %cst_7 = arith.constant 0.000000e+00 : f32
    %7 = vector.broadcast %cst_7 : f32 to vector<2x64xf32>
    %cst_8 = arith.constant 0.000000e+00 : f32
    %8 = vector.broadcast %cst_8 : f32 to vector<2x64xf32>
    %9 = vector.extract_strided_slice %5 {offsets = [0, 0], sizes = [2, 256], strides = [1, 1]} : vector<16x256xf32> to vector<2x256xf32>
    %cst_9 = arith.constant dense<0.000000e+00> : vector<2x256xf32>
    %10 = tpu.matmul %7, %6, %cst_9 {dimension_numbers = #tpu.dot_dimension_numbers<[1], [0], [0], [1], [0, 0, 1, 1], [], []>} : vector<2x64xf32>, vector<64x256xf32>, vector<2x256xf32> -> vector<2x256xf32>
    %11 = arith.addf %9, %10 : vector<2x256xf32>
    %12 = vector.extract_strided_slice %11 {offsets = [0, 0], sizes = [2, 192], strides = [1, 1]} : vector<2x256xf32> to vector<2x192xf32>
    %13 = arith.negf %12 : vector<2x192xf32>
    %14 = math.exp %13 : vector<2x192xf32>
    %cst_10 = arith.constant 1.000000e+00 : f32
    %15 = vector.broadcast %cst_10 : f32 to vector<2x192xf32>
    %16 = arith.addf %15, %14 : vector<2x192xf32>
    %17 = arith.divf %15, %16 : vector<2x192xf32>
    %18 = vector.extract_strided_slice %17 {offsets = [0, 0], sizes = [2, 64], strides = [1, 1]} : vector<2x192xf32> to vector<2x64xf32>
    %19 = vector.extract_strided_slice %17 {offsets = [0, 64], sizes = [2, 64], strides = [1, 1]} : vector<2x192xf32> to vector<2x64xf32>
    %20 = vector.extract_strided_slice %17 {offsets = [0, 128], sizes = [2, 64], strides = [1, 1]} : vector<2x192xf32> to vector<2x64xf32>
    %21 = vector.extract_strided_slice %11 {offsets = [0, 192], sizes = [2, 64], strides = [1, 1]} : vector<2x256xf32> to vector<2x64xf32>
    %22 = math.tanh %21 : vector<2x64xf32>
    %23 = arith.mulf %19, %8 : vector<2x64xf32>
    %24 = arith.mulf %18, %22 : vector<2x64xf32>
    %25 = arith.addf %23, %24 : vector<2x64xf32>
    %26 = math.tanh %25 : vector<2x64xf32>
    %27 = arith.mulf %20, %26 : vector<2x64xf32>
    %28 = vector.extract_strided_slice %5 {offsets = [2, 0], sizes = [2, 256], strides = [1, 1]} : vector<16x256xf32> to vector<2x256xf32>
    %cst_11 = arith.constant dense<0.000000e+00> : vector<2x256xf32>
    %29 = tpu.matmul %27, %6, %cst_11 {dimension_numbers = #tpu.dot_dimension_numbers<[1], [0], [0], [1], [0, 0, 1, 1], [], []>} : vector<2x64xf32>, vector<64x256xf32>, vector<2x256xf32> -> vector<2x256xf32>
    %30 = arith.addf %28, %29 : vector<2x256xf32>
    %31 = vector.extract_strided_slice %30 {offsets = [0, 0], sizes = [2, 192], strides = [1, 1]} : vector<2x256xf32> to vector<2x192xf32>
    %32 = arith.negf %31 : vector<2x192xf32>
    %33 = math.exp %32 : vector<2x192xf32>
    %cst_12 = arith.constant 1.000000e+00 : f32
    %34 = vector.broadcast %cst_12 : f32 to vector<2x192xf32>
    %35 = arith.addf %34, %33 : vector<2x192xf32>
    %36 = arith.divf %34, %35 : vector<2x192xf32>
    %37 = vector.extract_strided_slice %36 {offsets = [0, 0], sizes = [2, 64], strides = [1, 1]} : vector<2x192xf32> to vector<2x64xf32>
    %38 = vector.extract_strided_slice %36 {offsets = [0, 64], sizes = [2, 64], strides = [1, 1]} : vector<2x192xf32> to vector<2x64xf32>
    %39 = vector.extract_strided_slice %36 {offsets = [0, 128], sizes = [2, 64], strides = [1, 1]} : vector<2x192xf32> to vector<2x64xf32>
    %40 = vector.extract_strided_slice %30 {offsets = [0, 192], sizes = [2, 64], strides = [1, 1]} : vector<2x256xf32> to vector<2x64xf32>
    %41 = math.tanh %40 : vector<2x64xf32>
    %42 = arith.mulf %38, %25 : vector<2x64xf32>
    %43 = arith.mulf %37, %41 : vector<2x64xf32>
    %44 = arith.addf %42, %43 : vector<2x64xf32>
    %45 = math.tanh %44 : vector<2x64xf32>
    %46 = arith.mulf %39, %45 : vector<2x64xf32>
    %47 = vector.extract_strided_slice %5 {offsets = [4, 0], sizes = [2, 256], strides = [1, 1]} : vector<16x256xf32> to vector<2x256xf32>
    %cst_13 = arith.constant dense<0.000000e+00> : vector<2x256xf32>
    %48 = tpu.matmul %46, %6, %cst_13 {dimension_numbers = #tpu.dot_dimension_numbers<[1], [0], [0], [1], [0, 0, 1, 1], [], []>} : vector<2x64xf32>, vector<64x256xf32>, vector<2x256xf32> -> vector<2x256xf32>
    %49 = arith.addf %47, %48 : vector<2x256xf32>
    %50 = vector.extract_strided_slice %49 {offsets = [0, 0], sizes = [2, 192], strides = [1, 1]} : vector<2x256xf32> to vector<2x192xf32>
    %51 = arith.negf %50 : vector<2x192xf32>
    %52 = math.exp %51 : vector<2x192xf32>
    %cst_14 = arith.constant 1.000000e+00 : f32
    %53 = vector.broadcast %cst_14 : f32 to vector<2x192xf32>
    %54 = arith.addf %53, %52 : vector<2x192xf32>
    %55 = arith.divf %53, %54 : vector<2x192xf32>
    %56 = vector.extract_strided_slice %55 {offsets = [0, 0], sizes = [2, 64], strides = [1, 1]} : vector<2x192xf32> to vector<2x64xf32>
    %57 = vector.extract_strided_slice %55 {offsets = [0, 64], sizes = [2, 64], strides = [1, 1]} : vector<2x192xf32> to vector<2x64xf32>
    %58 = vector.extract_strided_slice %55 {offsets = [0, 128], sizes = [2, 64], strides = [1, 1]} : vector<2x192xf32> to vector<2x64xf32>
    %59 = vector.extract_strided_slice %49 {offsets = [0, 192], sizes = [2, 64], strides = [1, 1]} : vector<2x256xf32> to vector<2x64xf32>
    %60 = math.tanh %59 : vector<2x64xf32>
    %61 = arith.mulf %57, %44 : vector<2x64xf32>
    %62 = arith.mulf %56, %60 : vector<2x64xf32>
    %63 = arith.addf %61, %62 : vector<2x64xf32>
    %64 = math.tanh %63 : vector<2x64xf32>
    %65 = arith.mulf %58, %64 : vector<2x64xf32>
    %66 = vector.extract_strided_slice %5 {offsets = [6, 0], sizes = [2, 256], strides = [1, 1]} : vector<16x256xf32> to vector<2x256xf32>
    %cst_15 = arith.constant dense<0.000000e+00> : vector<2x256xf32>
    %67 = tpu.matmul %65, %6, %cst_15 {dimension_numbers = #tpu.dot_dimension_numbers<[1], [0], [0], [1], [0, 0, 1, 1], [], []>} : vector<2x64xf32>, vector<64x256xf32>, vector<2x256xf32> -> vector<2x256xf32>
    %68 = arith.addf %66, %67 : vector<2x256xf32>
    %69 = vector.extract_strided_slice %68 {offsets = [0, 0], sizes = [2, 192], strides = [1, 1]} : vector<2x256xf32> to vector<2x192xf32>
    %70 = arith.negf %69 : vector<2x192xf32>
    %71 = math.exp %70 : vector<2x192xf32>
    %cst_16 = arith.constant 1.000000e+00 : f32
    %72 = vector.broadcast %cst_16 : f32 to vector<2x192xf32>
    %73 = arith.addf %72, %71 : vector<2x192xf32>
    %74 = arith.divf %72, %73 : vector<2x192xf32>
    %75 = vector.extract_strided_slice %74 {offsets = [0, 0], sizes = [2, 64], strides = [1, 1]} : vector<2x192xf32> to vector<2x64xf32>
    %76 = vector.extract_strided_slice %74 {offsets = [0, 64], sizes = [2, 64], strides = [1, 1]} : vector<2x192xf32> to vector<2x64xf32>
    %77 = vector.extract_strided_slice %74 {offsets = [0, 128], sizes = [2, 64], strides = [1, 1]} : vector<2x192xf32> to vector<2x64xf32>
    %78 = vector.extract_strided_slice %68 {offsets = [0, 192], sizes = [2, 64], strides = [1, 1]} : vector<2x256xf32> to vector<2x64xf32>
    %79 = math.tanh %78 : vector<2x64xf32>
    %80 = arith.mulf %76, %63 : vector<2x64xf32>
    %81 = arith.mulf %75, %79 : vector<2x64xf32>
    %82 = arith.addf %80, %81 : vector<2x64xf32>
    %83 = math.tanh %82 : vector<2x64xf32>
    %84 = arith.mulf %77, %83 : vector<2x64xf32>
    %85 = vector.extract_strided_slice %5 {offsets = [8, 0], sizes = [2, 256], strides = [1, 1]} : vector<16x256xf32> to vector<2x256xf32>
    %cst_17 = arith.constant dense<0.000000e+00> : vector<2x256xf32>
    %86 = tpu.matmul %84, %6, %cst_17 {dimension_numbers = #tpu.dot_dimension_numbers<[1], [0], [0], [1], [0, 0, 1, 1], [], []>} : vector<2x64xf32>, vector<64x256xf32>, vector<2x256xf32> -> vector<2x256xf32>
    %87 = arith.addf %85, %86 : vector<2x256xf32>
    %88 = vector.extract_strided_slice %87 {offsets = [0, 0], sizes = [2, 192], strides = [1, 1]} : vector<2x256xf32> to vector<2x192xf32>
    %89 = arith.negf %88 : vector<2x192xf32>
    %90 = math.exp %89 : vector<2x192xf32>
    %cst_18 = arith.constant 1.000000e+00 : f32
    %91 = vector.broadcast %cst_18 : f32 to vector<2x192xf32>
    %92 = arith.addf %91, %90 : vector<2x192xf32>
    %93 = arith.divf %91, %92 : vector<2x192xf32>
    %94 = vector.extract_strided_slice %93 {offsets = [0, 0], sizes = [2, 64], strides = [1, 1]} : vector<2x192xf32> to vector<2x64xf32>
    %95 = vector.extract_strided_slice %93 {offsets = [0, 64], sizes = [2, 64], strides = [1, 1]} : vector<2x192xf32> to vector<2x64xf32>
    %96 = vector.extract_strided_slice %93 {offsets = [0, 128], sizes = [2, 64], strides = [1, 1]} : vector<2x192xf32> to vector<2x64xf32>
    %97 = vector.extract_strided_slice %87 {offsets = [0, 192], sizes = [2, 64], strides = [1, 1]} : vector<2x256xf32> to vector<2x64xf32>
    %98 = math.tanh %97 : vector<2x64xf32>
    %99 = arith.mulf %95, %82 : vector<2x64xf32>
    %100 = arith.mulf %94, %98 : vector<2x64xf32>
    %101 = arith.addf %99, %100 : vector<2x64xf32>
    %102 = math.tanh %101 : vector<2x64xf32>
    %103 = arith.mulf %96, %102 : vector<2x64xf32>
    %104 = vector.extract_strided_slice %5 {offsets = [10, 0], sizes = [2, 256], strides = [1, 1]} : vector<16x256xf32> to vector<2x256xf32>
    %cst_19 = arith.constant dense<0.000000e+00> : vector<2x256xf32>
    %105 = tpu.matmul %103, %6, %cst_19 {dimension_numbers = #tpu.dot_dimension_numbers<[1], [0], [0], [1], [0, 0, 1, 1], [], []>} : vector<2x64xf32>, vector<64x256xf32>, vector<2x256xf32> -> vector<2x256xf32>
    %106 = arith.addf %104, %105 : vector<2x256xf32>
    %107 = vector.extract_strided_slice %106 {offsets = [0, 0], sizes = [2, 192], strides = [1, 1]} : vector<2x256xf32> to vector<2x192xf32>
    %108 = arith.negf %107 : vector<2x192xf32>
    %109 = math.exp %108 : vector<2x192xf32>
    %cst_20 = arith.constant 1.000000e+00 : f32
    %110 = vector.broadcast %cst_20 : f32 to vector<2x192xf32>
    %111 = arith.addf %110, %109 : vector<2x192xf32>
    %112 = arith.divf %110, %111 : vector<2x192xf32>
    %113 = vector.extract_strided_slice %112 {offsets = [0, 0], sizes = [2, 64], strides = [1, 1]} : vector<2x192xf32> to vector<2x64xf32>
    %114 = vector.extract_strided_slice %112 {offsets = [0, 64], sizes = [2, 64], strides = [1, 1]} : vector<2x192xf32> to vector<2x64xf32>
    %115 = vector.extract_strided_slice %112 {offsets = [0, 128], sizes = [2, 64], strides = [1, 1]} : vector<2x192xf32> to vector<2x64xf32>
    %116 = vector.extract_strided_slice %106 {offsets = [0, 192], sizes = [2, 64], strides = [1, 1]} : vector<2x256xf32> to vector<2x64xf32>
    %117 = math.tanh %116 : vector<2x64xf32>
    %118 = arith.mulf %114, %101 : vector<2x64xf32>
    %119 = arith.mulf %113, %117 : vector<2x64xf32>
    %120 = arith.addf %118, %119 : vector<2x64xf32>
    %121 = math.tanh %120 : vector<2x64xf32>
    %122 = arith.mulf %115, %121 : vector<2x64xf32>
    %123 = vector.extract_strided_slice %5 {offsets = [12, 0], sizes = [2, 256], strides = [1, 1]} : vector<16x256xf32> to vector<2x256xf32>
    %cst_21 = arith.constant dense<0.000000e+00> : vector<2x256xf32>
    %124 = tpu.matmul %122, %6, %cst_21 {dimension_numbers = #tpu.dot_dimension_numbers<[1], [0], [0], [1], [0, 0, 1, 1], [], []>} : vector<2x64xf32>, vector<64x256xf32>, vector<2x256xf32> -> vector<2x256xf32>
    %125 = arith.addf %123, %124 : vector<2x256xf32>
    %126 = vector.extract_strided_slice %125 {offsets = [0, 0], sizes = [2, 192], strides = [1, 1]} : vector<2x256xf32> to vector<2x192xf32>
    %127 = arith.negf %126 : vector<2x192xf32>
    %128 = math.exp %127 : vector<2x192xf32>
    %cst_22 = arith.constant 1.000000e+00 : f32
    %129 = vector.broadcast %cst_22 : f32 to vector<2x192xf32>
    %130 = arith.addf %129, %128 : vector<2x192xf32>
    %131 = arith.divf %129, %130 : vector<2x192xf32>
    %132 = vector.extract_strided_slice %131 {offsets = [0, 0], sizes = [2, 64], strides = [1, 1]} : vector<2x192xf32> to vector<2x64xf32>
    %133 = vector.extract_strided_slice %131 {offsets = [0, 64], sizes = [2, 64], strides = [1, 1]} : vector<2x192xf32> to vector<2x64xf32>
    %134 = vector.extract_strided_slice %131 {offsets = [0, 128], sizes = [2, 64], strides = [1, 1]} : vector<2x192xf32> to vector<2x64xf32>
    %135 = vector.extract_strided_slice %125 {offsets = [0, 192], sizes = [2, 64], strides = [1, 1]} : vector<2x256xf32> to vector<2x64xf32>
    %136 = math.tanh %135 : vector<2x64xf32>
    %137 = arith.mulf %133, %120 : vector<2x64xf32>
    %138 = arith.mulf %132, %136 : vector<2x64xf32>
    %139 = arith.addf %137, %138 : vector<2x64xf32>
    %140 = math.tanh %139 : vector<2x64xf32>
    %141 = arith.mulf %134, %140 : vector<2x64xf32>
    %142 = vector.extract_strided_slice %5 {offsets = [14, 0], sizes = [2, 256], strides = [1, 1]} : vector<16x256xf32> to vector<2x256xf32>
    %cst_23 = arith.constant dense<0.000000e+00> : vector<2x256xf32>
    %143 = tpu.matmul %141, %6, %cst_23 {dimension_numbers = #tpu.dot_dimension_numbers<[1], [0], [0], [1], [0, 0, 1, 1], [], []>} : vector<2x64xf32>, vector<64x256xf32>, vector<2x256xf32> -> vector<2x256xf32>
    %144 = arith.addf %142, %143 : vector<2x256xf32>
    %145 = vector.extract_strided_slice %144 {offsets = [0, 0], sizes = [2, 192], strides = [1, 1]} : vector<2x256xf32> to vector<2x192xf32>
    %146 = arith.negf %145 : vector<2x192xf32>
    %147 = math.exp %146 : vector<2x192xf32>
    %cst_24 = arith.constant 1.000000e+00 : f32
    %148 = vector.broadcast %cst_24 : f32 to vector<2x192xf32>
    %149 = arith.addf %148, %147 : vector<2x192xf32>
    %150 = arith.divf %148, %149 : vector<2x192xf32>
    %151 = vector.extract_strided_slice %150 {offsets = [0, 0], sizes = [2, 64], strides = [1, 1]} : vector<2x192xf32> to vector<2x64xf32>
    %152 = vector.extract_strided_slice %150 {offsets = [0, 64], sizes = [2, 64], strides = [1, 1]} : vector<2x192xf32> to vector<2x64xf32>
    %153 = vector.extract_strided_slice %150 {offsets = [0, 128], sizes = [2, 64], strides = [1, 1]} : vector<2x192xf32> to vector<2x64xf32>
    %154 = vector.extract_strided_slice %144 {offsets = [0, 192], sizes = [2, 64], strides = [1, 1]} : vector<2x256xf32> to vector<2x64xf32>
    %155 = math.tanh %154 : vector<2x64xf32>
    %156 = arith.mulf %152, %139 : vector<2x64xf32>
    %157 = arith.mulf %151, %155 : vector<2x64xf32>
    %158 = arith.addf %156, %157 : vector<2x64xf32>
    %159 = math.tanh %158 : vector<2x64xf32>
    %160 = arith.mulf %153, %159 : vector<2x64xf32>
    %c0_25 = arith.constant 0 : index
    %c0_26 = arith.constant 0 : index
    %161 = vector.load %arg5[%c0_25, %c0_26] : memref<64x16xf32, #tpu.memory_space<vmem>>, vector<64x16xf32>
    %cst_27 = arith.constant dense<0.000000e+00> : vector<2x16xf32>
    %162 = tpu.matmul %160, %161, %cst_27 {dimension_numbers = #tpu.dot_dimension_numbers<[1], [0], [0], [1], [0, 0, 1, 1], [], []>} : vector<2x64xf32>, vector<64x16xf32>, vector<2x16xf32> -> vector<2x16xf32>
    %c0_28 = arith.constant 0 : index
    %c0_29 = arith.constant 0 : index
    %163 = vector.load %arg6[%c0_28, %c0_29] : memref<1x16xf32, #tpu.memory_space<vmem>>, vector<1x16xf32>
    %164 = vector.broadcast %163 : vector<1x16xf32> to vector<2x16xf32>
    %165 = arith.addf %162, %164 : vector<2x16xf32>
    %c0_30 = arith.constant 0 : index
    %c0_31 = arith.constant 0 : index
    %166 = vector.load %arg7[%c0_30, %c0_31] : memref<64x16xf32, #tpu.memory_space<vmem>>, vector<64x16xf32>
    %cst_32 = arith.constant dense<0.000000e+00> : vector<2x16xf32>
    %167 = tpu.matmul %160, %166, %cst_32 {dimension_numbers = #tpu.dot_dimension_numbers<[1], [0], [0], [1], [0, 0, 1, 1], [], []>} : vector<2x64xf32>, vector<64x16xf32>, vector<2x16xf32> -> vector<2x16xf32>
    %c0_33 = arith.constant 0 : index
    %c0_34 = arith.constant 0 : index
    %168 = vector.load %arg8[%c0_33, %c0_34] : memref<1x16xf32, #tpu.memory_space<vmem>>, vector<1x16xf32>
    %169 = vector.broadcast %168 : vector<1x16xf32> to vector<2x16xf32>
    %170 = arith.addf %167, %169 : vector<2x16xf32>
    %c0_35 = arith.constant 0 : index
    %c0_36 = arith.constant 0 : index
    %171 = vector.load %arg18[%c0_35, %c0_36] : memref<2x16xf32, #tpu.memory_space<vmem>>, vector<2x16xf32>
    tpu.vector_store %arg18[%c0_35, %c0_36], %165 {strides = array<i32>} : memref<2x16xf32, #tpu.memory_space<vmem>>, vector<2x16xf32>,
    %c0_37 = arith.constant 0 : index
    %c0_38 = arith.constant 0 : index
    %172 = vector.load %arg19[%c0_37, %c0_38] : memref<2x16xf32, #tpu.memory_space<vmem>>, vector<2x16xf32>
    tpu.vector_store %arg19[%c0_37, %c0_38], %170 {strides = array<i32>} : memref<2x16xf32, #tpu.memory_space<vmem>>, vector<2x16xf32>,
    %cst_39 = arith.constant 5.000000e-01 : f32
    %173 = vector.broadcast %cst_39 : f32 to vector<2x16xf32>
    %174 = arith.mulf %170, %173 : vector<2x16xf32>
    %175 = math.exp %174 : vector<2x16xf32>
    %c0_40 = arith.constant 0 : index
    %c0_41 = arith.constant 0 : index
    %176 = vector.load %arg1[%c0_40, %c0_41] : memref<2x16xf32, #tpu.memory_space<vmem>>, vector<2x16xf32>
    %177 = arith.mulf %175, %176 : vector<2x16xf32>
    %178 = arith.addf %165, %177 : vector<2x16xf32>
    %c0_42 = arith.constant 0 : index
    %c0_43 = arith.constant 0 : index
    %179 = vector.load %arg9[%c0_42, %c0_43] : memref<16x64xf32, #tpu.memory_space<vmem>>, vector<16x64xf32>
    %cst_44 = arith.constant dense<0.000000e+00> : vector<2x64xf32>
    %180 = tpu.matmul %178, %179, %cst_44 {dimension_numbers = #tpu.dot_dimension_numbers<[1], [0], [0], [1], [0, 0, 1, 1], [], []>} : vector<2x16xf32>, vector<16x64xf32>, vector<2x64xf32> -> vector<2x64xf32>
    %c0_45 = arith.constant 0 : index
    %c0_46 = arith.constant 0 : index
    %181 = vector.load %arg10[%c0_45, %c0_46] : memref<1x64xf32, #tpu.memory_space<vmem>>, vector<1x64xf32>
    %182 = vector.broadcast %181 : vector<1x64xf32> to vector<2x64xf32>
    %183 = arith.addf %180, %182 : vector<2x64xf32>
    %184 = math.tanh %183 : vector<2x64xf32>
    %185 = vector.extract_strided_slice %184 {offsets = [0, 0], sizes = [2, 32], strides = [1, 1]} : vector<2x64xf32> to vector<2x32xf32>
    %186 = vector.extract_strided_slice %184 {offsets = [0, 32], sizes = [2, 32], strides = [1, 1]} : vector<2x64xf32> to vector<2x32xf32>
    %c0_47 = arith.constant 0 : index
    %c0_48 = arith.constant 0 : index
    %187 = vector.load %arg11[%c0_47, %c0_48] : memref<10x128xf32, #tpu.memory_space<vmem>>, vector<10x128xf32>
    %cst_49 = arith.constant dense<0.000000e+00> : vector<16x128xf32>
    %188 = tpu.matmul %0, %187, %cst_49 {dimension_numbers = #tpu.dot_dimension_numbers<[1], [0], [0], [1], [0, 0, 1, 1], [], []>} : vector<16x10xf32>, vector<10x128xf32>, vector<16x128xf32> -> vector<16x128xf32>
    %c0_50 = arith.constant 0 : index
    %c0_51 = arith.constant 0 : index
    %189 = vector.load %arg12[%c0_50, %c0_51] : memref<16x128xf32, #tpu.memory_space<vmem>>, vector<16x128xf32>
    %cst_52 = arith.constant dense<0.000000e+00> : vector<2x128xf32>
    %190 = tpu.matmul %178, %189, %cst_52 {dimension_numbers = #tpu.dot_dimension_numbers<[1], [0], [0], [1], [0, 0, 1, 1], [], []>} : vector<2x16xf32>, vector<16x128xf32>, vector<2x128xf32> -> vector<2x128xf32>
    %c0_53 = arith.constant 0 : index
    %c0_54 = arith.constant 0 : index
    %191 = vector.load %arg14[%c0_53, %c0_54] : memref<1x128xf32, #tpu.memory_space<vmem>>, vector<1x128xf32>
    %192 = vector.broadcast %191 : vector<1x128xf32> to vector<2x128xf32>
    %193 = arith.addf %190, %192 : vector<2x128xf32>
    %c0_55 = arith.constant 0 : index
    %c0_56 = arith.constant 0 : index
    %194 = vector.load %arg13[%c0_55, %c0_56] : memref<32x128xf32, #tpu.memory_space<vmem>>, vector<32x128xf32>
    %195 = vector.extract_strided_slice %188 {offsets = [0, 0], sizes = [2, 128], strides = [1, 1]} : vector<16x128xf32> to vector<2x128xf32>
    %196 = arith.addf %195, %193 : vector<2x128xf32>
    %cst_57 = arith.constant dense<0.000000e+00> : vector<2x128xf32>
    %197 = tpu.matmul %185, %194, %cst_57 {dimension_numbers = #tpu.dot_dimension_numbers<[1], [0], [0], [1], [0, 0, 1, 1], [], []>} : vector<2x32xf32>, vector<32x128xf32>, vector<2x128xf32> -> vector<2x128xf32>
    %198 = arith.addf %196, %197 : vector<2x128xf32>
    %199 = vector.extract_strided_slice %198 {offsets = [0, 0], sizes = [2, 96], strides = [1, 1]} : vector<2x128xf32> to vector<2x96xf32>
    %200 = arith.negf %199 : vector<2x96xf32>
    %201 = math.exp %200 : vector<2x96xf32>
    %cst_58 = arith.constant 1.000000e+00 : f32
    %202 = vector.broadcast %cst_58 : f32 to vector<2x96xf32>
    %203 = arith.addf %202, %201 : vector<2x96xf32>
    %204 = arith.divf %202, %203 : vector<2x96xf32>
    %205 = vector.extract_strided_slice %204 {offsets = [0, 0], sizes = [2, 32], strides = [1, 1]} : vector<2x96xf32> to vector<2x32xf32>
    %206 = vector.extract_strided_slice %204 {offsets = [0, 32], sizes = [2, 32], strides = [1, 1]} : vector<2x96xf32> to vector<2x32xf32>
    %207 = vector.extract_strided_slice %204 {offsets = [0, 64], sizes = [2, 32], strides = [1, 1]} : vector<2x96xf32> to vector<2x32xf32>
    %208 = vector.extract_strided_slice %198 {offsets = [0, 96], sizes = [2, 32], strides = [1, 1]} : vector<2x128xf32> to vector<2x32xf32>
    %209 = math.tanh %208 : vector<2x32xf32>
    %210 = arith.mulf %206, %186 : vector<2x32xf32>
    %211 = arith.mulf %205, %209 : vector<2x32xf32>
    %212 = arith.addf %210, %211 : vector<2x32xf32>
    %213 = math.tanh %212 : vector<2x32xf32>
    %214 = arith.mulf %207, %213 : vector<2x32xf32>
    %215 = vector.extract_strided_slice %188 {offsets = [2, 0], sizes = [2, 128], strides = [1, 1]} : vector<16x128xf32> to vector<2x128xf32>
    %216 = arith.addf %215, %193 : vector<2x128xf32>
    %cst_59 = arith.constant dense<0.000000e+00> : vector<2x128xf32>
    %217 = tpu.matmul %214, %194, %cst_59 {dimension_numbers = #tpu.dot_dimension_numbers<[1], [0], [0], [1], [0, 0, 1, 1], [], []>} : vector<2x32xf32>, vector<32x128xf32>, vector<2x128xf32> -> vector<2x128xf32>
    %218 = arith.addf %216, %217 : vector<2x128xf32>
    %219 = vector.extract_strided_slice %218 {offsets = [0, 0], sizes = [2, 96], strides = [1, 1]} : vector<2x128xf32> to vector<2x96xf32>
    %220 = arith.negf %219 : vector<2x96xf32>
    %221 = math.exp %220 : vector<2x96xf32>
    %cst_60 = arith.constant 1.000000e+00 : f32
    %222 = vector.broadcast %cst_60 : f32 to vector<2x96xf32>
    %223 = arith.addf %222, %221 : vector<2x96xf32>
    %224 = arith.divf %222, %223 : vector<2x96xf32>
    %225 = vector.extract_strided_slice %224 {offsets = [0, 0], sizes = [2, 32], strides = [1, 1]} : vector<2x96xf32> to vector<2x32xf32>
    %226 = vector.extract_strided_slice %224 {offsets = [0, 32], sizes = [2, 32], strides = [1, 1]} : vector<2x96xf32> to vector<2x32xf32>
    %227 = vector.extract_strided_slice %224 {offsets = [0, 64], sizes = [2, 32], strides = [1, 1]} : vector<2x96xf32> to vector<2x32xf32>
    %228 = vector.extract_strided_slice %218 {offsets = [0, 96], sizes = [2, 32], strides = [1, 1]} : vector<2x128xf32> to vector<2x32xf32>
    %229 = math.tanh %228 : vector<2x32xf32>
    %230 = arith.mulf %226, %212 : vector<2x32xf32>
    %231 = arith.mulf %225, %229 : vector<2x32xf32>
    %232 = arith.addf %230, %231 : vector<2x32xf32>
    %233 = math.tanh %232 : vector<2x32xf32>
    %234 = arith.mulf %227, %233 : vector<2x32xf32>
    %235 = vector.extract_strided_slice %188 {offsets = [4, 0], sizes = [2, 128], strides = [1, 1]} : vector<16x128xf32> to vector<2x128xf32>
    %236 = arith.addf %235, %193 : vector<2x128xf32>
    %cst_61 = arith.constant dense<0.000000e+00> : vector<2x128xf32>
    %237 = tpu.matmul %234, %194, %cst_61 {dimension_numbers = #tpu.dot_dimension_numbers<[1], [0], [0], [1], [0, 0, 1, 1], [], []>} : vector<2x32xf32>, vector<32x128xf32>, vector<2x128xf32> -> vector<2x128xf32>
    %238 = arith.addf %236, %237 : vector<2x128xf32>
    %239 = vector.extract_strided_slice %238 {offsets = [0, 0], sizes = [2, 96], strides = [1, 1]} : vector<2x128xf32> to vector<2x96xf32>
    %240 = arith.negf %239 : vector<2x96xf32>
    %241 = math.exp %240 : vector<2x96xf32>
    %cst_62 = arith.constant 1.000000e+00 : f32
    %242 = vector.broadcast %cst_62 : f32 to vector<2x96xf32>
    %243 = arith.addf %242, %241 : vector<2x96xf32>
    %244 = arith.divf %242, %243 : vector<2x96xf32>
    %245 = vector.extract_strided_slice %244 {offsets = [0, 0], sizes = [2, 32], strides = [1, 1]} : vector<2x96xf32> to vector<2x32xf32>
    %246 = vector.extract_strided_slice %244 {offsets = [0, 32], sizes = [2, 32], strides = [1, 1]} : vector<2x96xf32> to vector<2x32xf32>
    %247 = vector.extract_strided_slice %244 {offsets = [0, 64], sizes = [2, 32], strides = [1, 1]} : vector<2x96xf32> to vector<2x32xf32>
    %248 = vector.extract_strided_slice %238 {offsets = [0, 96], sizes = [2, 32], strides = [1, 1]} : vector<2x128xf32> to vector<2x32xf32>
    %249 = math.tanh %248 : vector<2x32xf32>
    %250 = arith.mulf %246, %232 : vector<2x32xf32>
    %251 = arith.mulf %245, %249 : vector<2x32xf32>
    %252 = arith.addf %250, %251 : vector<2x32xf32>
    %253 = math.tanh %252 : vector<2x32xf32>
    %254 = arith.mulf %247, %253 : vector<2x32xf32>
    %255 = vector.extract_strided_slice %188 {offsets = [6, 0], sizes = [2, 128], strides = [1, 1]} : vector<16x128xf32> to vector<2x128xf32>
    %256 = arith.addf %255, %193 : vector<2x128xf32>
    %cst_63 = arith.constant dense<0.000000e+00> : vector<2x128xf32>
    %257 = tpu.matmul %254, %194, %cst_63 {dimension_numbers = #tpu.dot_dimension_numbers<[1], [0], [0], [1], [0, 0, 1, 1], [], []>} : vector<2x32xf32>, vector<32x128xf32>, vector<2x128xf32> -> vector<2x128xf32>
    %258 = arith.addf %256, %257 : vector<2x128xf32>
    %259 = vector.extract_strided_slice %258 {offsets = [0, 0], sizes = [2, 96], strides = [1, 1]} : vector<2x128xf32> to vector<2x96xf32>
    %260 = arith.negf %259 : vector<2x96xf32>
    %261 = math.exp %260 : vector<2x96xf32>
    %cst_64 = arith.constant 1.000000e+00 : f32
    %262 = vector.broadcast %cst_64 : f32 to vector<2x96xf32>
    %263 = arith.addf %262, %261 : vector<2x96xf32>
    %264 = arith.divf %262, %263 : vector<2x96xf32>
    %265 = vector.extract_strided_slice %264 {offsets = [0, 0], sizes = [2, 32], strides = [1, 1]} : vector<2x96xf32> to vector<2x32xf32>
    %266 = vector.extract_strided_slice %264 {offsets = [0, 32], sizes = [2, 32], strides = [1, 1]} : vector<2x96xf32> to vector<2x32xf32>
    %267 = vector.extract_strided_slice %264 {offsets = [0, 64], sizes = [2, 32], strides = [1, 1]} : vector<2x96xf32> to vector<2x32xf32>
    %268 = vector.extract_strided_slice %258 {offsets = [0, 96], sizes = [2, 32], strides = [1, 1]} : vector<2x128xf32> to vector<2x32xf32>
    %269 = math.tanh %268 : vector<2x32xf32>
    %270 = arith.mulf %266, %252 : vector<2x32xf32>
    %271 = arith.mulf %265, %269 : vector<2x32xf32>
    %272 = arith.addf %270, %271 : vector<2x32xf32>
    %273 = math.tanh %272 : vector<2x32xf32>
    %274 = arith.mulf %267, %273 : vector<2x32xf32>
    %275 = vector.extract_strided_slice %188 {offsets = [8, 0], sizes = [2, 128], strides = [1, 1]} : vector<16x128xf32> to vector<2x128xf32>
    %276 = arith.addf %275, %193 : vector<2x128xf32>
    %cst_65 = arith.constant dense<0.000000e+00> : vector<2x128xf32>
    %277 = tpu.matmul %274, %194, %cst_65 {dimension_numbers = #tpu.dot_dimension_numbers<[1], [0], [0], [1], [0, 0, 1, 1], [], []>} : vector<2x32xf32>, vector<32x128xf32>, vector<2x128xf32> -> vector<2x128xf32>
    %278 = arith.addf %276, %277 : vector<2x128xf32>
    %279 = vector.extract_strided_slice %278 {offsets = [0, 0], sizes = [2, 96], strides = [1, 1]} : vector<2x128xf32> to vector<2x96xf32>
    %280 = arith.negf %279 : vector<2x96xf32>
    %281 = math.exp %280 : vector<2x96xf32>
    %cst_66 = arith.constant 1.000000e+00 : f32
    %282 = vector.broadcast %cst_66 : f32 to vector<2x96xf32>
    %283 = arith.addf %282, %281 : vector<2x96xf32>
    %284 = arith.divf %282, %283 : vector<2x96xf32>
    %285 = vector.extract_strided_slice %284 {offsets = [0, 0], sizes = [2, 32], strides = [1, 1]} : vector<2x96xf32> to vector<2x32xf32>
    %286 = vector.extract_strided_slice %284 {offsets = [0, 32], sizes = [2, 32], strides = [1, 1]} : vector<2x96xf32> to vector<2x32xf32>
    %287 = vector.extract_strided_slice %284 {offsets = [0, 64], sizes = [2, 32], strides = [1, 1]} : vector<2x96xf32> to vector<2x32xf32>
    %288 = vector.extract_strided_slice %278 {offsets = [0, 96], sizes = [2, 32], strides = [1, 1]} : vector<2x128xf32> to vector<2x32xf32>
    %289 = math.tanh %288 : vector<2x32xf32>
    %290 = arith.mulf %286, %272 : vector<2x32xf32>
    %291 = arith.mulf %285, %289 : vector<2x32xf32>
    %292 = arith.addf %290, %291 : vector<2x32xf32>
    %293 = math.tanh %292 : vector<2x32xf32>
    %294 = arith.mulf %287, %293 : vector<2x32xf32>
    %295 = vector.extract_strided_slice %188 {offsets = [10, 0], sizes = [2, 128], strides = [1, 1]} : vector<16x128xf32> to vector<2x128xf32>
    %296 = arith.addf %295, %193 : vector<2x128xf32>
    %cst_67 = arith.constant dense<0.000000e+00> : vector<2x128xf32>
    %297 = tpu.matmul %294, %194, %cst_67 {dimension_numbers = #tpu.dot_dimension_numbers<[1], [0], [0], [1], [0, 0, 1, 1], [], []>} : vector<2x32xf32>, vector<32x128xf32>, vector<2x128xf32> -> vector<2x128xf32>
    %298 = arith.addf %296, %297 : vector<2x128xf32>
    %299 = vector.extract_strided_slice %298 {offsets = [0, 0], sizes = [2, 96], strides = [1, 1]} : vector<2x128xf32> to vector<2x96xf32>
    %300 = arith.negf %299 : vector<2x96xf32>
    %301 = math.exp %300 : vector<2x96xf32>
    %cst_68 = arith.constant 1.000000e+00 : f32
    %302 = vector.broadcast %cst_68 : f32 to vector<2x96xf32>
    %303 = arith.addf %302, %301 : vector<2x96xf32>
    %304 = arith.divf %302, %303 : vector<2x96xf32>
    %305 = vector.extract_strided_slice %304 {offsets = [0, 0], sizes = [2, 32], strides = [1, 1]} : vector<2x96xf32> to vector<2x32xf32>
    %306 = vector.extract_strided_slice %304 {offsets = [0, 32], sizes = [2, 32], strides = [1, 1]} : vector<2x96xf32> to vector<2x32xf32>
    %307 = vector.extract_strided_slice %304 {offsets = [0, 64], sizes = [2, 32], strides = [1, 1]} : vector<2x96xf32> to vector<2x32xf32>
    %308 = vector.extract_strided_slice %298 {offsets = [0, 96], sizes = [2, 32], strides = [1, 1]} : vector<2x128xf32> to vector<2x32xf32>
    %309 = math.tanh %308 : vector<2x32xf32>
    %310 = arith.mulf %306, %292 : vector<2x32xf32>
    %311 = arith.mulf %305, %309 : vector<2x32xf32>
    %312 = arith.addf %310, %311 : vector<2x32xf32>
    %313 = math.tanh %312 : vector<2x32xf32>
    %314 = arith.mulf %307, %313 : vector<2x32xf32>
    %315 = vector.extract_strided_slice %188 {offsets = [12, 0], sizes = [2, 128], strides = [1, 1]} : vector<16x128xf32> to vector<2x128xf32>
    %316 = arith.addf %315, %193 : vector<2x128xf32>
    %cst_69 = arith.constant dense<0.000000e+00> : vector<2x128xf32>
    %317 = tpu.matmul %314, %194, %cst_69 {dimension_numbers = #tpu.dot_dimension_numbers<[1], [0], [0], [1], [0, 0, 1, 1], [], []>} : vector<2x32xf32>, vector<32x128xf32>, vector<2x128xf32> -> vector<2x128xf32>
    %318 = arith.addf %316, %317 : vector<2x128xf32>
    %319 = vector.extract_strided_slice %318 {offsets = [0, 0], sizes = [2, 96], strides = [1, 1]} : vector<2x128xf32> to vector<2x96xf32>
    %320 = arith.negf %319 : vector<2x96xf32>
    %321 = math.exp %320 : vector<2x96xf32>
    %cst_70 = arith.constant 1.000000e+00 : f32
    %322 = vector.broadcast %cst_70 : f32 to vector<2x96xf32>
    %323 = arith.addf %322, %321 : vector<2x96xf32>
    %324 = arith.divf %322, %323 : vector<2x96xf32>
    %325 = vector.extract_strided_slice %324 {offsets = [0, 0], sizes = [2, 32], strides = [1, 1]} : vector<2x96xf32> to vector<2x32xf32>
    %326 = vector.extract_strided_slice %324 {offsets = [0, 32], sizes = [2, 32], strides = [1, 1]} : vector<2x96xf32> to vector<2x32xf32>
    %327 = vector.extract_strided_slice %324 {offsets = [0, 64], sizes = [2, 32], strides = [1, 1]} : vector<2x96xf32> to vector<2x32xf32>
    %328 = vector.extract_strided_slice %318 {offsets = [0, 96], sizes = [2, 32], strides = [1, 1]} : vector<2x128xf32> to vector<2x32xf32>
    %329 = math.tanh %328 : vector<2x32xf32>
    %330 = arith.mulf %326, %312 : vector<2x32xf32>
    %331 = arith.mulf %325, %329 : vector<2x32xf32>
    %332 = arith.addf %330, %331 : vector<2x32xf32>
    %333 = math.tanh %332 : vector<2x32xf32>
    %334 = arith.mulf %327, %333 : vector<2x32xf32>
    %335 = vector.extract_strided_slice %188 {offsets = [14, 0], sizes = [2, 128], strides = [1, 1]} : vector<16x128xf32> to vector<2x128xf32>
    %336 = arith.addf %335, %193 : vector<2x128xf32>
    %cst_71 = arith.constant dense<0.000000e+00> : vector<2x128xf32>
    %337 = tpu.matmul %334, %194, %cst_71 {dimension_numbers = #tpu.dot_dimension_numbers<[1], [0], [0], [1], [0, 0, 1, 1], [], []>} : vector<2x32xf32>, vector<32x128xf32>, vector<2x128xf32> -> vector<2x128xf32>
    %338 = arith.addf %336, %337 : vector<2x128xf32>
    %339 = vector.extract_strided_slice %338 {offsets = [0, 0], sizes = [2, 96], strides = [1, 1]} : vector<2x128xf32> to vector<2x96xf32>
    %340 = arith.negf %339 : vector<2x96xf32>
    %341 = math.exp %340 : vector<2x96xf32>
    %cst_72 = arith.constant 1.000000e+00 : f32
    %342 = vector.broadcast %cst_72 : f32 to vector<2x96xf32>
    %343 = arith.addf %342, %341 : vector<2x96xf32>
    %344 = arith.divf %342, %343 : vector<2x96xf32>
    %345 = vector.extract_strided_slice %344 {offsets = [0, 0], sizes = [2, 32], strides = [1, 1]} : vector<2x96xf32> to vector<2x32xf32>
    %346 = vector.extract_strided_slice %344 {offsets = [0, 32], sizes = [2, 32], strides = [1, 1]} : vector<2x96xf32> to vector<2x32xf32>
    %347 = vector.extract_strided_slice %344 {offsets = [0, 64], sizes = [2, 32], strides = [1, 1]} : vector<2x96xf32> to vector<2x32xf32>
    %348 = vector.extract_strided_slice %338 {offsets = [0, 96], sizes = [2, 32], strides = [1, 1]} : vector<2x128xf32> to vector<2x32xf32>
    %349 = math.tanh %348 : vector<2x32xf32>
    %350 = arith.mulf %346, %332 : vector<2x32xf32>
    %351 = arith.mulf %345, %349 : vector<2x32xf32>
    %352 = arith.addf %350, %351 : vector<2x32xf32>
    %353 = math.tanh %352 : vector<2x32xf32>
    %354 = arith.mulf %347, %353 : vector<2x32xf32>
    %355 = tpu.concatenate %214, %234, %254, %274, %294, %314, %334, %354 in 0 : vector<2x32xf32>, vector<2x32xf32>, vector<2x32xf32>, vector<2x32xf32>, vector<2x32xf32>, vector<2x32xf32>, vector<2x32xf32>, vector<2x32xf32> -> vector<16x32xf32>
    %c0_73 = arith.constant 0 : index
    %c0_74 = arith.constant 0 : index
    %356 = vector.load %arg15[%c0_73, %c0_74] : memref<32x6xf32, #tpu.memory_space<vmem>>, vector<32x6xf32>
    %cst_75 = arith.constant dense<0.000000e+00> : vector<16x6xf32>
    %357 = tpu.matmul %355, %356, %cst_75 {dimension_numbers = #tpu.dot_dimension_numbers<[1], [0], [0], [1], [0, 0, 1, 1], [], []>} : vector<16x32xf32>, vector<32x6xf32>, vector<16x6xf32> -> vector<16x6xf32>
    %c0_76 = arith.constant 0 : index
    %c0_77 = arith.constant 0 : index
    %358 = vector.load %arg16[%c0_76, %c0_77] : memref<1x6xf32, #tpu.memory_space<vmem>>, vector<1x6xf32>
    %359 = vector.broadcast %358 : vector<1x6xf32> to vector<16x6xf32>
    %360 = arith.addf %357, %359 : vector<16x6xf32>
    %c0_78 = arith.constant 0 : index
    %c0_79 = arith.constant 0 : index
    %361 = vector.load %arg17[%c0_78, %c0_79] : memref<16x6xf32, #tpu.memory_space<vmem>>, vector<16x6xf32>
    tpu.vector_store %arg17[%c0_78, %c0_79], %360 {strides = array<i32>} : memref<16x6xf32, #tpu.memory_space<vmem>>, vector<16x6xf32>,
    return
  }
}

</mosaic_0001>

<llo_original>
// kernel: sketch_rnn_forward.1
$region0: #{sketch_rnn_forward.1}
  #allocation0 [shape = 'u32[]', space=smem, size = 0x4, offset = 0x4, fixed_abs, tag = 'smem constant byte address 0x4 - core index']
  #allocation1 [shape = 'u32[144,128]{1,0:T(1,128)}', space=vmem, size = 0x12000, scoped, tag = 'internal scratch']
  %s0 = inlined_call_operand.vmem [shape: f32[16,10], index: 0, kind: input, shape index: {}]
  %s1 = inlined_call_operand.vmem [shape: f32[2,16], index: 1, kind: input, shape index: {}]
  %s2 = inlined_call_operand.vmem [shape: f32[10,256], index: 2, kind: input, shape index: {}]
  %s3 = inlined_call_operand.vmem [shape: f32[64,256], index: 3, kind: input, shape index: {}]
  %s4 = inlined_call_operand.vmem [shape: f32[1,256], index: 4, kind: input, shape index: {}]
  %s5 = inlined_call_operand.vmem [shape: f32[64,16], index: 5, kind: input, shape index: {}]
  %s6 = inlined_call_operand.vmem [shape: f32[1,16], index: 6, kind: input, shape index: {}]
  %s7 = inlined_call_operand.vmem [shape: f32[64,16], index: 7, kind: input, shape index: {}]
  %s8 = inlined_call_operand.vmem [shape: f32[1,16], index: 8, kind: input, shape index: {}]
  %s9 = inlined_call_operand.vmem [shape: f32[16,64], index: 9, kind: input, shape index: {}]
  %s10 = inlined_call_operand.vmem [shape: f32[1,64], index: 10, kind: input, shape index: {}]
  %s11 = inlined_call_operand.vmem [shape: f32[10,128], index: 11, kind: input, shape index: {}]
  %s12 = inlined_call_operand.vmem [shape: f32[16,128], index: 12, kind: input, shape index: {}]
  %s13 = inlined_call_operand.vmem [shape: f32[32,128], index: 13, kind: input, shape index: {}]
  %s14 = inlined_call_operand.vmem [shape: f32[1,128], index: 14, kind: input, shape index: {}]
  %s15 = inlined_call_operand.vmem [shape: f32[32,6], index: 15, kind: input, shape index: {}]
  %s16 = inlined_call_operand.vmem [shape: f32[1,6], index: 16, kind: input, shape index: {}]
  %s17 = inlined_call_operand.vmem [shape: f32[16,6], index: 17, kind: output, shape index: {0}]
  %s18 = inlined_call_operand.hbm [shape: f32[2,16], index: 18, kind: output, shape index: {1}]
  %s19 = inlined_call_operand.hbm [shape: f32[2,16], index: 19, kind: output, shape index: {2}]
  %20 = xla_tuple %s17, %s18, %s19
  %s21 = sld [smem:[#allocation0]]
  $region94: #{sketch_rnn_forward.1} parent=0
    _
  %s23 = ssub.s32 1, %s21
  %s24 = scalar_select 0, %s23, %s21
  $region1: #{sketch_rnn_forward.1} parent=0
    #allocation2 [shape = 'u8[1024]{0}', space=vmem, size = 0x400, scoped, tag = 'output window, operand 1, single buffered']
    #allocation3 [shape = 's32[1]{0}', space=sflag, size = 0x4, scoped, tag = 'scoped memory for sketch_rnn_forward.1']
    #allocation4 [shape = 'u8[1024]{0}', space=vmem, size = 0x400, scoped, tag = 'output window, operand 2, single buffered']
    #allocation5 [shape = 's32[1]{0}', space=sflag, size = 0x4, scoped, tag = 'scoped memory for sketch_rnn_forward.1']
    %25 = vsyncpa [#allocation3], 0
    %26 = vsyncpa [#allocation5], 0
    // Predicated region
    $region2: #{sketch_rnn_forward.1} parent=1 // pred_check
      _
    $region3: #{sketch_rnn_forward.1} parent=1 // pred_check_branch
      %28 = sbr.rel (0) target = $region5
    $region4: #{sketch_rnn_forward.1} parent=1 // pred_region
      _
    $region5: #{sketch_rnn_forward.1} parent=1 // pred_fallthru
      _
    // Predicated region
    $region6: #{sketch_rnn_forward.1} parent=1 // pred_check
      _
    $region7: #{sketch_rnn_forward.1} parent=1 // pred_check_branch
      %30 = sbr.rel (0) target = $region9
    $region8: #{sketch_rnn_forward.1} parent=1 // pred_region
      _
    $region9: #{sketch_rnn_forward.1} parent=1 // pred_fallthru
      _
    // Predicated region
    $region10: #{sketch_rnn_forward.1} parent=1 // pred_check
      _
    $region11: #{sketch_rnn_forward.1} parent=1 // pred_check_branch
      %32 = sbr.rel (0) target = $region13
    $region12: #{sketch_rnn_forward.1} parent=1 // pred_region
      _
    $region13: #{sketch_rnn_forward.1} parent=1 // pred_fallthru
      _
    // Predicated region
    $region14: #{sketch_rnn_forward.1} parent=1 // pred_check
      _
    $region15: #{sketch_rnn_forward.1} parent=1 // pred_check_branch
      %34 = sbr.rel (0) target = $region17
    $region16: #{sketch_rnn_forward.1} parent=1 // pred_region
      _
    $region17: #{sketch_rnn_forward.1} parent=1 // pred_fallthru
      _
    // Predicated region
    $region18: #{sketch_rnn_forward.1} parent=1 // pred_check
      _
    $region19: #{sketch_rnn_forward.1} parent=1 // pred_check_branch
      %36 = sbr.rel (0) target = $region21
    $region20: #{sketch_rnn_forward.1} parent=1 // pred_region
      _
    $region21: #{sketch_rnn_forward.1} parent=1 // pred_fallthru
      _
    // Predicated region
    $region22: #{sketch_rnn_forward.1} parent=1 // pred_check
      _
    $region23: #{sketch_rnn_forward.1} parent=1 // pred_check_branch
      %38 = sbr.rel (0) target = $region25
    $region24: #{sketch_rnn_forward.1} parent=1 // pred_region
      _
    $region25: #{sketch_rnn_forward.1} parent=1 // pred_fallthru
      _
    // Predicated region
    $region26: #{sketch_rnn_forward.1} parent=1 // pred_check
      _
    $region27: #{sketch_rnn_forward.1} parent=1 // pred_check_branch
      %40 = sbr.rel (0) target = $region29
    $region28: #{sketch_rnn_forward.1} parent=1 // pred_region
      _
    $region29: #{sketch_rnn_forward.1} parent=1 // pred_fallthru
      _
    // Predicated region
    $region30: #{sketch_rnn_forward.1} parent=1 // pred_check
      _
    $region31: #{sketch_rnn_forward.1} parent=1 // pred_check_branch
      %42 = sbr.rel (0) target = $region33
    $region32: #{sketch_rnn_forward.1} parent=1 // pred_region
      _
    $region33: #{sketch_rnn_forward.1} parent=1 // pred_fallthru
      _
    // Predicated region
    $region34: #{sketch_rnn_forward.1} parent=1 // pred_check
      _
    $region35: #{sketch_rnn_forward.1} parent=1 // pred_check_branch
      %44 = sbr.rel (0) target = $region37
    $region36: #{sketch_rnn_forward.1} parent=1 // pred_region
      _
    $region37: #{sketch_rnn_forward.1} parent=1 // pred_fallthru
      _
    // Predicated region
    $region38: #{sketch_rnn_forward.1} parent=1 // pred_check
      _
    $region39: #{sketch_rnn_forward.1} parent=1 // pred_check_branch
      %46 = sbr.rel (0) target = $region41
    $region40: #{sketch_rnn_forward.1} parent=1 // pred_region
      _
    $region41: #{sketch_rnn_forward.1} parent=1 // pred_fallthru
      _
    // Predicated region
    $region42: #{sketch_rnn_forward.1} parent=1 // pred_check
      _
    $region43: #{sketch_rnn_forward.1} parent=1 // pred_check_branch
      %48 = sbr.rel (0) target = $region45
    $region44: #{sketch_rnn_forward.1} parent=1 // pred_region
      _
    $region45: #{sketch_rnn_forward.1} parent=1 // pred_fallthru
      _
    // Predicated region
    $region46: #{sketch_rnn_forward.1} parent=1 // pred_check
      _
    $region47: #{sketch_rnn_forward.1} parent=1 // pred_check_branch
      %50 = sbr.rel (0) target = $region49
    $region48: #{sketch_rnn_forward.1} parent=1 // pred_region
      _
    $region49: #{sketch_rnn_forward.1} parent=1 // pred_fallthru
      _
    // Predicated region
    $region50: #{sketch_rnn_forward.1} parent=1 // pred_check
      _
    $region51: #{sketch_rnn_forward.1} parent=1 // pred_check_branch
      %52 = sbr.rel (0) target = $region53
    $region52: #{sketch_rnn_forward.1} parent=1 // pred_region
      _
    $region53: #{sketch_rnn_forward.1} parent=1 // pred_fallthru
      _
    // Predicated region
    $region54: #{sketch_rnn_forward.1} parent=1 // pred_check
      _
    $region55: #{sketch_rnn_forward.1} parent=1 // pred_check_branch
      %54 = sbr.rel (0) target = $region57
    $region56: #{sketch_rnn_forward.1} parent=1 // pred_region
      _
    $region57: #{sketch_rnn_forward.1} parent=1 // pred_fallthru
      _
    // Predicated region
    $region58: #{sketch_rnn_forward.1} parent=1 // pred_check
      _
    $region59: #{sketch_rnn_forward.1} parent=1 // pred_check_branch
      %56 = sbr.rel (0) target = $region61
    $region60: #{sketch_rnn_forward.1} parent=1 // pred_region
      _
    $region61: #{sketch_rnn_forward.1} parent=1 // pred_fallthru
      _
    // Predicated region
    $region62: #{sketch_rnn_forward.1} parent=1 // pred_check
      _
    $region63: #{sketch_rnn_forward.1} parent=1 // pred_check_branch
      %58 = sbr.rel (0) target = $region65
    $region64: #{sketch_rnn_forward.1} parent=1 // pred_region
      _
    $region65: #{sketch_rnn_forward.1} parent=1 // pred_fallthru
      _
    // Predicated region
    $region66: #{sketch_rnn_forward.1} parent=1 // pred_check
      _
    $region67: #{sketch_rnn_forward.1} parent=1 // pred_check_branch
      %60 = sbr.rel (0) target = $region69
    $region68: #{sketch_rnn_forward.1} parent=1 // pred_region
      _
    $region69: #{sketch_rnn_forward.1} parent=1 // pred_fallthru
      _
    %v61 = vld [vmem:[%s0] sm:$0xff]
    %v62 = vld [vmem:[%s0 + $0x8] sm:$0xff]
    %v63 = vld [vmem:[%s2] sm:$0xff]
    %v64 = vld [vmem:[%s2 + $0x8] sm:$0xff]
    %v65 = vld [vmem:[%s2 + $0x10] sm:$0x3]
    %v66 = vld [vmem:[%s2 + $0x18] sm:$0x3]
    %v67 = vld [vmem:[%s4] sm:$0x3]
    %v69 = vlaneseq
    %v70 = vshrl.u32 %v69, 7
    %v71 = vsub.s32 0, %v70
    %v72 = vrot.slane %v67, %v71
    %v73 = vlaneseq
    %v74 = vshrl.u32 %v73, 7
    %v75 = vsub.s32 1, %v74
    %v76 = vrot.slane %v67, %v75
    %vm79 = vcmask 80896
    %v81 = vsel %vm79, %v61, 0
    %v84 = vsel %vm79, %v62, 0
    %vm86 = vcmask 1041408
    %v88 = vsel %vm86, %v65, 0
    %v91 = vsel %vm86, %v66, 0
    %93 = vmatprep.subr.mxu0 0.0
    %94 = vmatpush1.msra.mxu0 0.0
    %95 = vmatprep.subr.mxu0 0.0
    %96 = vmatpush1.msra.mxu0 0.0
    %97 = vmatprep.subr.mxu0 0.0
    %98 = vmatpush1.msra.mxu0 0.0
    %99 = vmatprep.subr.mxu0 0.0
    %100 = vmatpush1.msra.mxu0 0.0
    %101 = vmatprep.subr.mxu0 0.0
    %102 = vmatpush1.msra.mxu0 0.0
    %103 = vmatprep.subr.mxu0 0.0
    %104 = vmatpush1.msra.mxu0 0.0
    %105 = vmatprep.subr.mxu0 0.0
    %106 = vmatpush1.msra.mxu0 0.0
    %107 = vmatprep.subr.mxu0 0.0
    %108 = vmatpush1.msra.mxu0 0.0
    %109 = vmatprep.subr.mxu0 0.0
    %110 = vmatpush1.msra.mxu0 0.0
    %111 = vmatprep.subr.mxu0 0.0
    %112 = vmatpush1.msra.mxu0 0.0
    %113 = vmatprep.subr.mxu0 0.0
    %114 = vmatpush1.msra.mxu0 0.0
    %115 = vmatprep.subr.mxu0 0.0
    %116 = vmatpush1.msra.mxu0 0.0
    %117 = vmatprep.subr.mxu0 0.0
    %118 = vmatpush1.msra.mxu0 0.0
    %119 = vmatprep.subr.mxu0 0.0
    %120 = vmatpush1.msra.mxu0 0.0
    %121 = vmatprep.subr.mxu0 %v91
    %122 = vmatpush1.msra.mxu0 %v88
    %123 = vmatprep.subr.mxu0 %v64
    %124 = vmatpush1.msra.mxu0 %v63
    %125 = vmatprep.subr.mxu0 0.0
    %126 = vmatpush2.msra.mxu0 0.0
    %127 = vmatprep.subr.mxu0 0.0
    %128 = vmatpush2.msra.mxu0 0.0
    %129 = vmatprep.subr.mxu0 0.0
    %130 = vmatpush2.msra.mxu0 0.0
    %131 = vmatprep.subr.mxu0 0.0
    %132 = vmatpush2.msra.mxu0 0.0
    %133 = vmatprep.subr.mxu0 0.0
    %134 = vmatpush2.msra.mxu0 0.0
    %135 = vmatprep.subr.mxu0 0.0
    %136 = vmatpush2.msra.mxu0 0.0
    %137 = vmatprep.subr.mxu0 0.0
    %138 = vmatpush2.msra.mxu0 0.0
    %139 = vmatprep.subr.mxu0 0.0
    %140 = vmatpush2.msra.mxu0 0.0
    %141 = vmatprep.subr.mxu0 0.0
    %142 = vmatpush2.msra.mxu0 0.0
    %143 = vmatprep.subr.mxu0 0.0
    %144 = vmatpush2.msra.mxu0 0.0
    %145 = vmatprep.subr.mxu0 0.0
    %146 = vmatpush2.msra.mxu0 0.0
    %147 = vmatprep.subr.mxu0 0.0
    %148 = vmatpush2.msra.mxu0 0.0
    %149 = vmatprep.subr.mxu0 0.0
    %150 = vmatpush2.msra.mxu0 0.0
    %151 = vmatprep.subr.mxu0 0.0
    %152 = vmatpush2.msra.mxu0 0.0
    %153 = vmatprep.subr.mxu0 0.0
    %154 = vmatpush2.msra.mxu0 0.0
    %155 = vmatprep.subr.mxu0 0.0
    %156 = vmatpush2.msra.mxu0 0.0
    %157 = vmatprep.mubr.f32.mxu0 0.0
    %158 = vmatmul.mubr.f32.gmra.mxu0 %v81
    %v159 = vpop.f32.mrf.mxu0
    %v160 = vadd.f32 %v72, %v159
    %v161 = vpop.f32.mrf.mxu0
    %v162 = vadd.f32 %v76, %v161
    %163 = vmatprep.mubr.f32.mxu0 0.0
    %164 = vmatmul.mubr.f32.gmra.mxu0 %v84
    %v165 = vpop.f32.mrf.mxu0
    %v166 = vadd.f32 %v72, %v165
    %v167 = vpop.f32.mrf.mxu0
    %v168 = vadd.f32 %v76, %v167
    %169 = vdwg.mxu0
    %v170 = vld [vmem:[%s3] sm:$0xff]
    %v171 = vld [vmem:[%s3 + $0x8] sm:$0xff]
    %v172 = vld [vmem:[%s3 + $0x10] sm:$0xff]
    %v173 = vld [vmem:[%s3 + $0x18] sm:$0xff]
    %v174 = vld [vmem:[%s3 + $0x20] sm:$0xff]
    %v175 = vld [vmem:[%s3 + $0x28] sm:$0xff]
    %v176 = vld [vmem:[%s3 + $0x30] sm:$0xff]
    %v177 = vld [vmem:[%s3 + $0x38] sm:$0xff]
    %v178 = vld [vmem:[%s3 + $0x40] sm:$0xff]
    %v179 = vld [vmem:[%s3 + $0x48] sm:$0xff]
    %v180 = vld [vmem:[%s3 + $0x50] sm:$0xff]
    %v181 = vld [vmem:[%s3 + $0x58] sm:$0xff]
    %v182 = vld [vmem:[%s3 + $0x60] sm:$0xff]
    %v183 = vld [vmem:[%s3 + $0x68] sm:$0xff]
    %v184 = vld [vmem:[%s3 + $0x70] sm:$0xff]
    %v185 = vld [vmem:[%s3 + $0x78] sm:$0xff]
    %vm186 = vcmask 523264
    %v188 = vsel %vm186, 0.0, 0
    %190 = vmatprep.subr.mxu0 0.0
    %191 = vmatpush1.msra.mxu0 0.0
    %192 = vmatprep.subr.mxu0 0.0
    %193 = vmatpush1.msra.mxu0 0.0
    %194 = vmatprep.subr.mxu0 0.0
    %195 = vmatpush1.msra.mxu0 0.0
    %196 = vmatprep.subr.mxu0 0.0
    %197 = vmatpush1.msra.mxu0 0.0
    %198 = vmatprep.subr.mxu0 0.0
    %199 = vmatpush1.msra.mxu0 0.0
    %200 = vmatprep.subr.mxu0 0.0
    %201 = vmatpush1.msra.mxu0 0.0
    %202 = vmatprep.subr.mxu0 0.0
    %203 = vmatpush1.msra.mxu0 0.0
    %204 = vmatprep.subr.mxu0 0.0
    %205 = vmatpush1.msra.mxu0 0.0
    %206 = vmatprep.subr.mxu0 %v185
    %207 = vmatpush1.msra.mxu0 %v184
    %208 = vmatprep.subr.mxu0 %v183
    %209 = vmatpush1.msra.mxu0 %v182
    %210 = vmatprep.subr.mxu0 %v181
    %211 = vmatpush1.msra.mxu0 %v180
    %212 = vmatprep.subr.mxu0 %v179
    %213 = vmatpush1.msra.mxu0 %v178
    %214 = vmatprep.subr.mxu0 %v177
    %215 = vmatpush1.msra.mxu0 %v176
    %216 = vmatprep.subr.mxu0 %v175
    %217 = vmatpush1.msra.mxu0 %v174
    %218 = vmatprep.subr.mxu0 %v173
    %219 = vmatpush1.msra.mxu0 %v172
    %220 = vmatprep.subr.mxu0 %v171
    %221 = vmatpush1.msra.mxu0 %v170
    %222 = vmatprep.subr.mxu0 0.0
    %223 = vmatpush2.msra.mxu0 0.0
    %224 = vmatprep.subr.mxu0 0.0
    %225 = vmatpush2.msra.mxu0 0.0
    %226 = vmatprep.subr.mxu0 0.0
    %227 = vmatpush2.msra.mxu0 0.0
    %228 = vmatprep.subr.mxu0 0.0
    %229 = vmatpush2.msra.mxu0 0.0
    %230 = vmatprep.subr.mxu0 0.0
    %231 = vmatpush2.msra.mxu0 0.0
    %232 = vmatprep.subr.mxu0 0.0
    %233 = vmatpush2.msra.mxu0 0.0
    %234 = vmatprep.subr.mxu0 0.0
    %235 = vmatpush2.msra.mxu0 0.0
    %236 = vmatprep.subr.mxu0 0.0
    %237 = vmatpush2.msra.mxu0 0.0
    %238 = vmatprep.subr.mxu0 0.0
    %239 = vmatpush2.msra.mxu0 0.0
    %240 = vmatprep.subr.mxu0 0.0
    %241 = vmatpush2.msra.mxu0 0.0
    %242 = vmatprep.subr.mxu0 0.0
    %243 = vmatpush2.msra.mxu0 0.0
    %244 = vmatprep.subr.mxu0 0.0
    %245 = vmatpush2.msra.mxu0 0.0
    %246 = vmatprep.subr.mxu0 0.0
    %247 = vmatpush2.msra.mxu0 0.0
    %248 = vmatprep.subr.mxu0 0.0
    %249 = vmatpush2.msra.mxu0 0.0
    %250 = vmatprep.subr.mxu0 0.0
    %251 = vmatpush2.msra.mxu0 0.0
    %252 = vmatprep.subr.mxu0 0.0
    %253 = vmatpush2.msra.mxu0 0.0
    %254 = vmatprep.mubr.f32.mxu0 0.0
    %255 = vmatmul.mubr.f32.gmra.mxu0 %v188
    %v256 = vpop.f32.mrf.mxu0
    %v257 = vadd.f32 0.0, %v256
    %v258 = vpop.f32.mrf.mxu0
    %v259 = vadd.f32 0.0, %v258
    %260 = vdwg.mxu0
    %v261 = vadd.f32 %v160, %v257
    %v262 = vadd.f32 %v162, %v259
    %v263 = vxor.u32 %v261, 2147483648
    %v264 = vxor.u32 %v262, 2147483648
    %v265 = vmul.f32 %v263, 1.442695
    %v266 = vpow.pop %v265
    %v267 = vmul.f32 %v264, 1.442695
    %v268 = vpow.pop %v267
    %v269 = vadd.f32 %v266, 1.0
    %v270 = vadd.f32 %v268, 1.0
    %v271 = vrcp.pop %v269
    %v272 = vmul.f32 1.0, %v271
    %v273 = vrcp.pop %v270
    %v274 = vmul.f32 1.0, %v273
    %v275 = vtanh.pop %v262
    %v276 = vmul.f32 %v272, 0.0
    %278 = vrot.lane.b32.xlu0 %v275, 64
    %v279 = vpop.permute.xlu0 %278
    %v281 = vmul.f32 %v272, %v279
    %283 = vrot.lane.b32.xlu0 %v281, 64
    %v284 = vpop.permute.xlu0 %283
    %v286 = vadd.f32 %v276, %v284
    %v287 = vtanh.pop %v286
    %289 = vrot.lane.b32.xlu0 %v287, 64
    %v290 = vpop.permute.xlu0 %289
    %v292 = vmul.f32 %v274, %v290
    %v294 = vsel %vm186, %v292, 0
    %296 = vmatprep.subr.mxu0 0.0
    %297 = vmatpush1.msra.mxu0 0.0
    %298 = vmatprep.subr.mxu0 0.0
    %299 = vmatpush1.msra.mxu0 0.0
    %300 = vmatprep.subr.mxu0 0.0
    %301 = vmatpush1.msra.mxu0 0.0
    %302 = vmatprep.subr.mxu0 0.0
    %303 = vmatpush1.msra.mxu0 0.0
    %304 = vmatprep.subr.mxu0 0.0
    %305 = vmatpush1.msra.mxu0 0.0
    %306 = vmatprep.subr.mxu0 0.0
    %307 = vmatpush1.msra.mxu0 0.0
    %308 = vmatprep.subr.mxu0 0.0
    %309 = vmatpush1.msra.mxu0 0.0
    %310 = vmatprep.subr.mxu0 0.0
    %311 = vmatpush1.msra.mxu0 0.0
    %312 = vmatprep.subr.mxu0 %v185
    %313 = vmatpush1.msra.mxu0 %v184
    %314 = vmatprep.subr.mxu0 %v183
    %315 = vmatpush1.msra.mxu0 %v182
    %316 = vmatprep.subr.mxu0 %v181
    %317 = vmatpush1.msra.mxu0 %v180
    %318 = vmatprep.subr.mxu0 %v179
    %319 = vmatpush1.msra.mxu0 %v178
    %320 = vmatprep.subr.mxu0 %v177
    %321 = vmatpush1.msra.mxu0 %v176
    %322 = vmatprep.subr.mxu0 %v175
    %323 = vmatpush1.msra.mxu0 %v174
    %324 = vmatprep.subr.mxu0 %v173
    %325 = vmatpush1.msra.mxu0 %v172
    %326 = vmatprep.subr.mxu0 %v171
    %327 = vmatpush1.msra.mxu0 %v170
    %328 = vmatprep.subr.mxu0 0.0
    %329 = vmatpush2.msra.mxu0 0.0
    %330 = vmatprep.subr.mxu0 0.0
    %331 = vmatpush2.msra.mxu0 0.0
    %332 = vmatprep.subr.mxu0 0.0
    %333 = vmatpush2.msra.mxu0 0.0
    %334 = vmatprep.subr.mxu0 0.0
    %335 = vmatpush2.msra.mxu0 0.0
    %336 = vmatprep.subr.mxu0 0.0
    %337 = vmatpush2.msra.mxu0 0.0
    %338 = vmatprep.subr.mxu0 0.0
    %339 = vmatpush2.msra.mxu0 0.0
    %340 = vmatprep.subr.mxu0 0.0
    %341 = vmatpush2.msra.mxu0 0.0
    %342 = vmatprep.subr.mxu0 0.0
    %343 = vmatpush2.msra.mxu0 0.0
    %344 = vmatprep.subr.mxu0 0.0
    %345 = vmatpush2.msra.mxu0 0.0
    %346 = vmatprep.subr.mxu0 0.0
    %347 = vmatpush2.msra.mxu0 0.0
    %348 = vmatprep.subr.mxu0 0.0
    %349 = vmatpush2.msra.mxu0 0.0
    %350 = vmatprep.subr.mxu0 0.0
    %351 = vmatpush2.msra.mxu0 0.0
    %352 = vmatprep.subr.mxu0 0.0
    %353 = vmatpush2.msra.mxu0 0.0
    %354 = vmatprep.subr.mxu0 0.0
    %355 = vmatpush2.msra.mxu0 0.0
    %356 = vmatprep.subr.mxu0 0.0
    %357 = vmatpush2.msra.mxu0 0.0
    %358 = vmatprep.subr.mxu0 0.0
    %359 = vmatpush2.msra.mxu0 0.0
    %360 = vmatprep.mubr.f32.mxu0 0.0
    %361 = vmatmul.mubr.f32.gmra.mxu0 %v294
    %v362 = vpop.f32.mrf.mxu0
    %v363 = vadd.f32 0.0, %v362
    %v364 = vpop.f32.mrf.mxu0
    %v365 = vadd.f32 0.0, %v364
    %366 = vdwg.mxu0
    %v369 = vrot.slane %v363, 6
    %v370 = vrot.slane %v365, 6
    %v373 = vadd.f32 %v160, %v369
    %v374 = vadd.f32 %v162, %v370
    %v375 = vxor.u32 %v373, 2147483648
    %v376 = vxor.u32 %v374, 2147483648
    %v377 = vmul.f32 %v375, 1.442695
    %v378 = vpow.pop %v377
    %v379 = vmul.f32 %v376, 1.442695
    %v380 = vpow.pop %v379
    %v381 = vadd.f32 %v378, 1.0
    %v382 = vadd.f32 %v380, 1.0
    %v383 = vrcp.pop %v381
    %v384 = vmul.f32 1.0, %v383
    %v385 = vrcp.pop %v382
    %v386 = vmul.f32 1.0, %v385
    %v387 = vtanh.pop %v374
    %v389 = vrot.slane %v286, 6
    %v391 = vmul.f32 %v384, %v389
    %393 = vrot.lane.b32.xlu0 %v387, 64
    %v394 = vpop.permute.xlu0 %393
    %v396 = vmul.f32 %v384, %v394
    %398 = vrot.lane.b32.xlu0 %v396, 64
    %v399 = vpop.permute.xlu0 %398
    %v401 = vadd.f32 %v391, %v399
    %v402 = vtanh.pop %v401
    %404 = vrot.lane.b32.xlu0 %v402, 64
    %v405 = vpop.permute.xlu0 %404
    %v407 = vmul.f32 %v386, %v405
    %v409 = vrot.slane %v407, 2
    %v410 = vsel %vm186, %v409, 0
    %412 = vmatprep.subr.mxu0 0.0
    %413 = vmatpush1.msra.mxu0 0.0
    %414 = vmatprep.subr.mxu0 0.0
    %415 = vmatpush1.msra.mxu0 0.0
    %416 = vmatprep.subr.mxu0 0.0
    %417 = vmatpush1.msra.mxu0 0.0
    %418 = vmatprep.subr.mxu0 0.0
    %419 = vmatpush1.msra.mxu0 0.0
    %420 = vmatprep.subr.mxu0 0.0
    %421 = vmatpush1.msra.mxu0 0.0
    %422 = vmatprep.subr.mxu0 0.0
    %423 = vmatpush1.msra.mxu0 0.0
    %424 = vmatprep.subr.mxu0 0.0
    %425 = vmatpush1.msra.mxu0 0.0
    %426 = vmatprep.subr.mxu0 0.0
    %427 = vmatpush1.msra.mxu0 0.0
    %428 = vmatprep.subr.mxu0 %v185
    %429 = vmatpush1.msra.mxu0 %v184
    %430 = vmatprep.subr.mxu0 %v183
    %431 = vmatpush1.msra.mxu0 %v182
    %432 = vmatprep.subr.mxu0 %v181
    %433 = vmatpush1.msra.mxu0 %v180
    %434 = vmatprep.subr.mxu0 %v179
    %435 = vmatpush1.msra.mxu0 %v178
    %436 = vmatprep.subr.mxu0 %v177
    %437 = vmatpush1.msra.mxu0 %v176
    %438 = vmatprep.subr.mxu0 %v175
    %439 = vmatpush1.msra.mxu0 %v174
    %440 = vmatprep.subr.mxu0 %v173
    %441 = vmatpush1.msra.mxu0 %v172
    %442 = vmatprep.subr.mxu0 %v171
    %443 = vmatpush1.msra.mxu0 %v170
    %444 = vmatprep.subr.mxu0 0.0
    %445 = vmatpush2.msra.mxu0 0.0
    %446 = vmatprep.subr.mxu0 0.0
    %447 = vmatpush2.msra.mxu0 0.0
    %448 = vmatprep.subr.mxu0 0.0
    %449 = vmatpush2.msra.mxu0 0.0
    %450 = vmatprep.subr.mxu0 0.0
    %451 = vmatpush2.msra.mxu0 0.0
    %452 = vmatprep.subr.mxu0 0.0
    %453 = vmatpush2.msra.mxu0 0.0
    %454 = vmatprep.subr.mxu0 0.0
    %455 = vmatpush2.msra.mxu0 0.0
    %456 = vmatprep.subr.mxu0 0.0
    %457 = vmatpush2.msra.mxu0 0.0
    %458 = vmatprep.subr.mxu0 0.0
    %459 = vmatpush2.msra.mxu0 0.0
    %460 = vmatprep.subr.mxu0 0.0
    %461 = vmatpush2.msra.mxu0 0.0
    %462 = vmatprep.subr.mxu0 0.0
    %463 = vmatpush2.msra.mxu0 0.0
    %464 = vmatprep.subr.mxu0 0.0
    %465 = vmatpush2.msra.mxu0 0.0
    %466 = vmatprep.subr.mxu0 0.0
    %467 = vmatpush2.msra.mxu0 0.0
    %468 = vmatprep.subr.mxu0 0.0
    %469 = vmatpush2.msra.mxu0 0.0
    %470 = vmatprep.subr.mxu0 0.0
    %471 = vmatpush2.msra.mxu0 0.0
    %472 = vmatprep.subr.mxu0 0.0
    %473 = vmatpush2.msra.mxu0 0.0
    %474 = vmatprep.subr.mxu0 0.0
    %475 = vmatpush2.msra.mxu0 0.0
    %476 = vmatprep.mubr.f32.mxu0 0.0
    %477 = vmatmul.mubr.f32.gmra.mxu0 %v410
    %v478 = vpop.f32.mrf.mxu0
    %v479 = vadd.f32 0.0, %v478
    %v480 = vpop.f32.mrf.mxu0
    %v481 = vadd.f32 0.0, %v480
    %482 = vdwg.mxu0
    %v485 = vrot.slane %v479, 4
    %v486 = vrot.slane %v481, 4
    %v489 = vadd.f32 %v160, %v485
    %v490 = vadd.f32 %v162, %v486
    %v491 = vxor.u32 %v489, 2147483648
    %v492 = vxor.u32 %v490, 2147483648
    %v493 = vmul.f32 %v491, 1.442695
    %v494 = vpow.pop %v493
    %v495 = vmul.f32 %v492, 1.442695
    %v496 = vpow.pop %v495
    %v497 = vadd.f32 %v494, 1.0
    %v498 = vadd.f32 %v496, 1.0
    %v499 = vrcp.pop %v497
    %v500 = vmul.f32 1.0, %v499
    %v501 = vrcp.pop %v498
    %v502 = vmul.f32 1.0, %v501
    %v503 = vtanh.pop %v490
    %v505 = vrot.slane %v401, 6
    %v507 = vmul.f32 %v500, %v505
    %509 = vrot.lane.b32.xlu0 %v503, 64
    %v510 = vpop.permute.xlu0 %509
    %v512 = vmul.f32 %v500, %v510
    %514 = vrot.lane.b32.xlu0 %v512, 64
    %v515 = vpop.permute.xlu0 %514
    %v517 = vadd.f32 %v507, %v515
    %v518 = vtanh.pop %v517
    %520 = vrot.lane.b32.xlu0 %v518, 64
    %v521 = vpop.permute.xlu0 %520
    %v523 = vmul.f32 %v502, %v521
    %v525 = vrot.slane %v523, 4
    %v526 = vsel %vm186, %v525, 0
    %528 = vmatprep.subr.mxu0 0.0
    %529 = vmatpush1.msra.mxu0 0.0
    %530 = vmatprep.subr.mxu0 0.0
    %531 = vmatpush1.msra.mxu0 0.0
    %532 = vmatprep.subr.mxu0 0.0
    %533 = vmatpush1.msra.mxu0 0.0
    %534 = vmatprep.subr.mxu0 0.0
    %535 = vmatpush1.msra.mxu0 0.0
    %536 = vmatprep.subr.mxu0 0.0
    %537 = vmatpush1.msra.mxu0 0.0
    %538 = vmatprep.subr.mxu0 0.0
    %539 = vmatpush1.msra.mxu0 0.0
    %540 = vmatprep.subr.mxu0 0.0
    %541 = vmatpush1.msra.mxu0 0.0
    %542 = vmatprep.subr.mxu0 0.0
    %543 = vmatpush1.msra.mxu0 0.0
    %544 = vmatprep.subr.mxu0 %v185
    %545 = vmatpush1.msra.mxu0 %v184
    %546 = vmatprep.subr.mxu0 %v183
    %547 = vmatpush1.msra.mxu0 %v182
    %548 = vmatprep.subr.mxu0 %v181
    %549 = vmatpush1.msra.mxu0 %v180
    %550 = vmatprep.subr.mxu0 %v179
    %551 = vmatpush1.msra.mxu0 %v178
    %552 = vmatprep.subr.mxu0 %v177
    %553 = vmatpush1.msra.mxu0 %v176
    %554 = vmatprep.subr.mxu0 %v175
    %555 = vmatpush1.msra.mxu0 %v174
    %556 = vmatprep.subr.mxu0 %v173
    %557 = vmatpush1.msra.mxu0 %v172
    %558 = vmatprep.subr.mxu0 %v171
    %559 = vmatpush1.msra.mxu0 %v170
    %560 = vmatprep.subr.mxu0 0.0
    %561 = vmatpush2.msra.mxu0 0.0
    %562 = vmatprep.subr.mxu0 0.0
    %563 = vmatpush2.msra.mxu0 0.0
    %564 = vmatprep.subr.mxu0 0.0
    %565 = vmatpush2.msra.mxu0 0.0
    %566 = vmatprep.subr.mxu0 0.0
    %567 = vmatpush2.msra.mxu0 0.0
    %568 = vmatprep.subr.mxu0 0.0
    %569 = vmatpush2.msra.mxu0 0.0
    %570 = vmatprep.subr.mxu0 0.0
    %571 = vmatpush2.msra.mxu0 0.0
    %572 = vmatprep.subr.mxu0 0.0
    %573 = vmatpush2.msra.mxu0 0.0
    %574 = vmatprep.subr.mxu0 0.0
    %575 = vmatpush2.msra.mxu0 0.0
    %576 = vmatprep.subr.mxu0 0.0
    %577 = vmatpush2.msra.mxu0 0.0
    %578 = vmatprep.subr.mxu0 0.0
    %579 = vmatpush2.msra.mxu0 0.0
    %580 = vmatprep.subr.mxu0 0.0
    %581 = vmatpush2.msra.mxu0 0.0
    %582 = vmatprep.subr.mxu0 0.0
    %583 = vmatpush2.msra.mxu0 0.0
    %584 = vmatprep.subr.mxu0 0.0
    %585 = vmatpush2.msra.mxu0 0.0
    %586 = vmatprep.subr.mxu0 0.0
    %587 = vmatpush2.msra.mxu0 0.0
    %588 = vmatprep.subr.mxu0 0.0
    %589 = vmatpush2.msra.mxu0 0.0
    %590 = vmatprep.subr.mxu0 0.0
    %591 = vmatpush2.msra.mxu0 0.0
    %592 = vmatprep.mubr.f32.mxu0 0.0
    %593 = vmatmul.mubr.f32.gmra.mxu0 %v526
    %v594 = vpop.f32.mrf.mxu0
    %v595 = vadd.f32 0.0, %v594
    %v596 = vpop.f32.mrf.mxu0
    %v597 = vadd.f32 0.0, %v596
    %598 = vdwg.mxu0
    %v601 = vrot.slane %v595, 2
    %v602 = vrot.slane %v597, 2
    %v605 = vadd.f32 %v160, %v601
    %v606 = vadd.f32 %v162, %v602
    %v607 = vxor.u32 %v605, 2147483648
    %v608 = vxor.u32 %v606, 2147483648
    %v609 = vmul.f32 %v607, 1.442695
    %v610 = vpow.pop %v609
    %v611 = vmul.f32 %v608, 1.442695
    %v612 = vpow.pop %v611
    %v613 = vadd.f32 %v610, 1.0
    %v614 = vadd.f32 %v612, 1.0
    %v615 = vrcp.pop %v613
    %v616 = vmul.f32 1.0, %v615
    %v617 = vrcp.pop %v614
    %v618 = vmul.f32 1.0, %v617
    %v619 = vtanh.pop %v606
    %v621 = vrot.slane %v517, 6
    %v623 = vmul.f32 %v616, %v621
    %625 = vrot.lane.b32.xlu0 %v619, 64
    %v626 = vpop.permute.xlu0 %625
    %v628 = vmul.f32 %v616, %v626
    %630 = vrot.lane.b32.xlu0 %v628, 64
    %v631 = vpop.permute.xlu0 %630
    %v633 = vadd.f32 %v623, %v631
    %v634 = vtanh.pop %v633
    %636 = vrot.lane.b32.xlu0 %v634, 64
    %v637 = vpop.permute.xlu0 %636
    %v639 = vmul.f32 %v618, %v637
    %v641 = vrot.slane %v639, 6
    %v642 = vsel %vm186, %v641, 0
    %644 = vmatprep.subr.mxu0 0.0
    %645 = vmatpush1.msra.mxu0 0.0
    %646 = vmatprep.subr.mxu0 0.0
    %647 = vmatpush1.msra.mxu0 0.0
    %648 = vmatprep.subr.mxu0 0.0
    %649 = vmatpush1.msra.mxu0 0.0
    %650 = vmatprep.subr.mxu0 0.0
    %651 = vmatpush1.msra.mxu0 0.0
    %652 = vmatprep.subr.mxu0 0.0
    %653 = vmatpush1.msra.mxu0 0.0
    %654 = vmatprep.subr.mxu0 0.0
    %655 = vmatpush1.msra.mxu0 0.0
    %656 = vmatprep.subr.mxu0 0.0
    %657 = vmatpush1.msra.mxu0 0.0
    %658 = vmatprep.subr.mxu0 0.0
    %659 = vmatpush1.msra.mxu0 0.0
    %660 = vmatprep.subr.mxu0 %v185
    %661 = vmatpush1.msra.mxu0 %v184
    %662 = vmatprep.subr.mxu0 %v183
    %663 = vmatpush1.msra.mxu0 %v182
    %664 = vmatprep.subr.mxu0 %v181
    %665 = vmatpush1.msra.mxu0 %v180
    %666 = vmatprep.subr.mxu0 %v179
    %667 = vmatpush1.msra.mxu0 %v178
    %668 = vmatprep.subr.mxu0 %v177
    %669 = vmatpush1.msra.mxu0 %v176
    %670 = vmatprep.subr.mxu0 %v175
    %671 = vmatpush1.msra.mxu0 %v174
    %672 = vmatprep.subr.mxu0 %v173
    %673 = vmatpush1.msra.mxu0 %v172
    %674 = vmatprep.subr.mxu0 %v171
    %675 = vmatpush1.msra.mxu0 %v170
    %676 = vmatprep.subr.mxu0 0.0
    %677 = vmatpush2.msra.mxu0 0.0
    %678 = vmatprep.subr.mxu0 0.0
    %679 = vmatpush2.msra.mxu0 0.0
    %680 = vmatprep.subr.mxu0 0.0
    %681 = vmatpush2.msra.mxu0 0.0
    %682 = vmatprep.subr.mxu0 0.0
    %683 = vmatpush2.msra.mxu0 0.0
    %684 = vmatprep.subr.mxu0 0.0
    %685 = vmatpush2.msra.mxu0 0.0
    %686 = vmatprep.subr.mxu0 0.0
    %687 = vmatpush2.msra.mxu0 0.0
    %688 = vmatprep.subr.mxu0 0.0
    %689 = vmatpush2.msra.mxu0 0.0
    %690 = vmatprep.subr.mxu0 0.0
    %691 = vmatpush2.msra.mxu0 0.0
    %692 = vmatprep.subr.mxu0 0.0
    %693 = vmatpush2.msra.mxu0 0.0
    %694 = vmatprep.subr.mxu0 0.0
    %695 = vmatpush2.msra.mxu0 0.0
    %696 = vmatprep.subr.mxu0 0.0
    %697 = vmatpush2.msra.mxu0 0.0
    %698 = vmatprep.subr.mxu0 0.0
    %699 = vmatpush2.msra.mxu0 0.0
    %700 = vmatprep.subr.mxu0 0.0
    %701 = vmatpush2.msra.mxu0 0.0
    %702 = vmatprep.subr.mxu0 0.0
    %703 = vmatpush2.msra.mxu0 0.0
    %704 = vmatprep.subr.mxu0 0.0
    %705 = vmatpush2.msra.mxu0 0.0
    %706 = vmatprep.subr.mxu0 0.0
    %707 = vmatpush2.msra.mxu0 0.0
    %708 = vmatprep.mubr.f32.mxu0 0.0
    %709 = vmatmul.mubr.f32.gmra.mxu0 %v642
    %v710 = vpop.f32.mrf.mxu0
    %v711 = vadd.f32 0.0, %v710
    %v712 = vpop.f32.mrf.mxu0
    %v713 = vadd.f32 0.0, %v712
    %714 = vdwg.mxu0
    %v715 = vadd.f32 %v166, %v711
    %v716 = vadd.f32 %v168, %v713
    %v717 = vxor.u32 %v715, 2147483648
    %v718 = vxor.u32 %v716, 2147483648
    %v719 = vmul.f32 %v717, 1.442695
    %v720 = vpow.pop %v719
    %v721 = vmul.f32 %v718, 1.442695
    %v722 = vpow.pop %v721
    %v723 = vadd.f32 %v720, 1.0
    %v724 = vadd.f32 %v722, 1.0
    %v725 = vrcp.pop %v723
    %v726 = vmul.f32 1.0, %v725
    %v727 = vrcp.pop %v724
    %v728 = vmul.f32 1.0, %v727
    %v729 = vtanh.pop %v716
    %v731 = vrot.slane %v633, 6
    %v733 = vmul.f32 %v726, %v731
    %735 = vrot.lane.b32.xlu0 %v729, 64
    %v736 = vpop.permute.xlu0 %735
    %v738 = vmul.f32 %v726, %v736
    %740 = vrot.lane.b32.xlu0 %v738, 64
    %v741 = vpop.permute.xlu0 %740
    %v743 = vadd.f32 %v733, %v741
    %v744 = vtanh.pop %v743
    %746 = vrot.lane.b32.xlu0 %v744, 64
    %v747 = vpop.permute.xlu0 %746
    %v749 = vmul.f32 %v728, %v747
    %v751 = vsel %vm186, %v749, 0
    %753 = vmatprep.subr.mxu0 0.0
    %754 = vmatpush1.msra.mxu0 0.0
    %755 = vmatprep.subr.mxu0 0.0
    %756 = vmatpush1.msra.mxu0 0.0
    %757 = vmatprep.subr.mxu0 0.0
    %758 = vmatpush1.msra.mxu0 0.0
    %759 = vmatprep.subr.mxu0 0.0
    %760 = vmatpush1.msra.mxu0 0.0
    %761 = vmatprep.subr.mxu0 0.0
    %762 = vmatpush1.msra.mxu0 0.0
    %763 = vmatprep.subr.mxu0 0.0
    %764 = vmatpush1.msra.mxu0 0.0
    %765 = vmatprep.subr.mxu0 0.0
    %766 = vmatpush1.msra.mxu0 0.0
    %767 = vmatprep.subr.mxu0 0.0
    %768 = vmatpush1.msra.mxu0 0.0
    %769 = vmatprep.subr.mxu0 %v185
    %770 = vmatpush1.msra.mxu0 %v184
    %771 = vmatprep.subr.mxu0 %v183
    %772 = vmatpush1.msra.mxu0 %v182
    %773 = vmatprep.subr.mxu0 %v181
    %774 = vmatpush1.msra.mxu0 %v180
    %775 = vmatprep.subr.mxu0 %v179
    %776 = vmatpush1.msra.mxu0 %v178
    %777 = vmatprep.subr.mxu0 %v177
    %778 = vmatpush1.msra.mxu0 %v176
    %779 = vmatprep.subr.mxu0 %v175
    %780 = vmatpush1.msra.mxu0 %v174
    %781 = vmatprep.subr.mxu0 %v173
    %782 = vmatpush1.msra.mxu0 %v172
    %783 = vmatprep.subr.mxu0 %v171
    %784 = vmatpush1.msra.mxu0 %v170
    %785 = vmatprep.subr.mxu0 0.0
    %786 = vmatpush2.msra.mxu0 0.0
    %787 = vmatprep.subr.mxu0 0.0
    %788 = vmatpush2.msra.mxu0 0.0
    %789 = vmatprep.subr.mxu0 0.0
    %790 = vmatpush2.msra.mxu0 0.0
    %791 = vmatprep.subr.mxu0 0.0
    %792 = vmatpush2.msra.mxu0 0.0
    %793 = vmatprep.subr.mxu0 0.0
    %794 = vmatpush2.msra.mxu0 0.0
    %795 = vmatprep.subr.mxu0 0.0
    %796 = vmatpush2.msra.mxu0 0.0
    %797 = vmatprep.subr.mxu0 0.0
    %798 = vmatpush2.msra.mxu0 0.0
    %799 = vmatprep.subr.mxu0 0.0
    %800 = vmatpush2.msra.mxu0 0.0
    %801 = vmatprep.subr.mxu0 0.0
    %802 = vmatpush2.msra.mxu0 0.0
    %803 = vmatprep.subr.mxu0 0.0
    %804 = vmatpush2.msra.mxu0 0.0
    %805 = vmatprep.subr.mxu0 0.0
    %806 = vmatpush2.msra.mxu0 0.0
    %807 = vmatprep.subr.mxu0 0.0
    %808 = vmatpush2.msra.mxu0 0.0
    %809 = vmatprep.subr.mxu0 0.0
    %810 = vmatpush2.msra.mxu0 0.0
    %811 = vmatprep.subr.mxu0 0.0
    %812 = vmatpush2.msra.mxu0 0.0
    %813 = vmatprep.subr.mxu0 0.0
    %814 = vmatpush2.msra.mxu0 0.0
    %815 = vmatprep.subr.mxu0 0.0
    %816 = vmatpush2.msra.mxu0 0.0
    %817 = vmatprep.mubr.f32.mxu0 0.0
    %818 = vmatmul.mubr.f32.gmra.mxu0 %v751
    %v819 = vpop.f32.mrf.mxu0
    %v820 = vadd.f32 0.0, %v819
    %v821 = vpop.f32.mrf.mxu0
    %v822 = vadd.f32 0.0, %v821
    %823 = vdwg.mxu0
    %v826 = vrot.slane %v820, 6
    %v827 = vrot.slane %v822, 6
    %v830 = vadd.f32 %v166, %v826
    %v831 = vadd.f32 %v168, %v827
    %v832 = vxor.u32 %v830, 2147483648
    %v833 = vxor.u32 %v831, 2147483648
    %v834 = vmul.f32 %v832, 1.442695
    %v835 = vpow.pop %v834
    %v836 = vmul.f32 %v833, 1.442695
    %v837 = vpow.pop %v836
    %v838 = vadd.f32 %v835, 1.0
    %v839 = vadd.f32 %v837, 1.0
    %v840 = vrcp.pop %v838
    %v841 = vmul.f32 1.0, %v840
    %v842 = vrcp.pop %v839
    %v843 = vmul.f32 1.0, %v842
    %v844 = vtanh.pop %v831
    %v846 = vrot.slane %v743, 6
    %v848 = vmul.f32 %v841, %v846
    %850 = vrot.lane.b32.xlu0 %v844, 64
    %v851 = vpop.permute.xlu0 %850
    %v853 = vmul.f32 %v841, %v851
    %855 = vrot.lane.b32.xlu0 %v853, 64
    %v856 = vpop.permute.xlu0 %855
    %v858 = vadd.f32 %v848, %v856
    %v859 = vtanh.pop %v858
    %861 = vrot.lane.b32.xlu0 %v859, 64
    %v862 = vpop.permute.xlu0 %861
    %v864 = vmul.f32 %v843, %v862
    %v866 = vrot.slane %v864, 2
    %v867 = vsel %vm186, %v866, 0
    %869 = vmatprep.subr.mxu0 0.0
    %870 = vmatpush1.msra.mxu0 0.0
    %871 = vmatprep.subr.mxu0 0.0
    %872 = vmatpush1.msra.mxu0 0.0
    %873 = vmatprep.subr.mxu0 0.0
    %874 = vmatpush1.msra.mxu0 0.0
    %875 = vmatprep.subr.mxu0 0.0
    %876 = vmatpush1.msra.mxu0 0.0
    %877 = vmatprep.subr.mxu0 0.0
    %878 = vmatpush1.msra.mxu0 0.0
    %879 = vmatprep.subr.mxu0 0.0
    %880 = vmatpush1.msra.mxu0 0.0
    %881 = vmatprep.subr.mxu0 0.0
    %882 = vmatpush1.msra.mxu0 0.0
    %883 = vmatprep.subr.mxu0 0.0
    %884 = vmatpush1.msra.mxu0 0.0
    %885 = vmatprep.subr.mxu0 %v185
    %886 = vmatpush1.msra.mxu0 %v184
    %887 = vmatprep.subr.mxu0 %v183
    %888 = vmatpush1.msra.mxu0 %v182
    %889 = vmatprep.subr.mxu0 %v181
    %890 = vmatpush1.msra.mxu0 %v180
    %891 = vmatprep.subr.mxu0 %v179
    %892 = vmatpush1.msra.mxu0 %v178
    %893 = vmatprep.subr.mxu0 %v177
    %894 = vmatpush1.msra.mxu0 %v176
    %895 = vmatprep.subr.mxu0 %v175
    %896 = vmatpush1.msra.mxu0 %v174
    %897 = vmatprep.subr.mxu0 %v173
    %898 = vmatpush1.msra.mxu0 %v172
    %899 = vmatprep.subr.mxu0 %v171
    %900 = vmatpush1.msra.mxu0 %v170
    %901 = vmatprep.subr.mxu0 0.0
    %902 = vmatpush2.msra.mxu0 0.0
    %903 = vmatprep.subr.mxu0 0.0
    %904 = vmatpush2.msra.mxu0 0.0
    %905 = vmatprep.subr.mxu0 0.0
    %906 = vmatpush2.msra.mxu0 0.0
    %907 = vmatprep.subr.mxu0 0.0
    %908 = vmatpush2.msra.mxu0 0.0
    %909 = vmatprep.subr.mxu0 0.0
    %910 = vmatpush2.msra.mxu0 0.0
    %911 = vmatprep.subr.mxu0 0.0
    %912 = vmatpush2.msra.mxu0 0.0
    %913 = vmatprep.subr.mxu0 0.0
    %914 = vmatpush2.msra.mxu0 0.0
    %915 = vmatprep.subr.mxu0 0.0
    %916 = vmatpush2.msra.mxu0 0.0
    %917 = vmatprep.subr.mxu0 0.0
    %918 = vmatpush2.msra.mxu0 0.0
    %919 = vmatprep.subr.mxu0 0.0
    %920 = vmatpush2.msra.mxu0 0.0
    %921 = vmatprep.subr.mxu0 0.0
    %922 = vmatpush2.msra.mxu0 0.0
    %923 = vmatprep.subr.mxu0 0.0
    %924 = vmatpush2.msra.mxu0 0.0
    %925 = vmatprep.subr.mxu0 0.0
    %926 = vmatpush2.msra.mxu0 0.0
    %927 = vmatprep.subr.mxu0 0.0
    %928 = vmatpush2.msra.mxu0 0.0
    %929 = vmatprep.subr.mxu0 0.0
    %930 = vmatpush2.msra.mxu0 0.0
    %931 = vmatprep.subr.mxu0 0.0
    %932 = vmatpush2.msra.mxu0 0.0
    %933 = vmatprep.mubr.f32.mxu0 0.0
    %934 = vmatmul.mubr.f32.gmra.mxu0 %v867
    %v935 = vpop.f32.mrf.mxu0
    %v936 = vadd.f32 0.0, %v935
    %v937 = vpop.f32.mrf.mxu0
    %v938 = vadd.f32 0.0, %v937
    %939 = vdwg.mxu0
    %v942 = vrot.slane %v936, 4
    %v943 = vrot.slane %v938, 4
    %v946 = vadd.f32 %v166, %v942
    %v947 = vadd.f32 %v168, %v943
    %v948 = vxor.u32 %v946, 2147483648
    %v949 = vxor.u32 %v947, 2147483648
    %v950 = vmul.f32 %v948, 1.442695
    %v951 = vpow.pop %v950
    %v952 = vmul.f32 %v949, 1.442695
    %v953 = vpow.pop %v952
    %v954 = vadd.f32 %v951, 1.0
    %v955 = vadd.f32 %v953, 1.0
    %v956 = vrcp.pop %v954
    %v957 = vmul.f32 1.0, %v956
    %v958 = vrcp.pop %v955
    %v959 = vmul.f32 1.0, %v958
    %v960 = vtanh.pop %v947
    %v962 = vrot.slane %v858, 6
    %v964 = vmul.f32 %v957, %v962
    %966 = vrot.lane.b32.xlu0 %v960, 64
    %v967 = vpop.permute.xlu0 %966
    %v969 = vmul.f32 %v957, %v967
    %971 = vrot.lane.b32.xlu0 %v969, 64
    %v972 = vpop.permute.xlu0 %971
    %v974 = vadd.f32 %v964, %v972
    %v975 = vtanh.pop %v974
    %977 = vrot.lane.b32.xlu0 %v975, 64
    %v978 = vpop.permute.xlu0 %977
    %v980 = vmul.f32 %v959, %v978
    %v982 = vrot.slane %v980, 4
    %v983 = vsel %vm186, %v982, 0
    %985 = vmatprep.subr.mxu0 0.0
    %986 = vmatpush1.msra.mxu0 0.0
    %987 = vmatprep.subr.mxu0 0.0
    %988 = vmatpush1.msra.mxu0 0.0
    %989 = vmatprep.subr.mxu0 0.0
    %990 = vmatpush1.msra.mxu0 0.0
    %991 = vmatprep.subr.mxu0 0.0
    %992 = vmatpush1.msra.mxu0 0.0
    %993 = vmatprep.subr.mxu0 0.0
    %994 = vmatpush1.msra.mxu0 0.0
    %995 = vmatprep.subr.mxu0 0.0
    %996 = vmatpush1.msra.mxu0 0.0
    %997 = vmatprep.subr.mxu0 0.0
    %998 = vmatpush1.msra.mxu0 0.0
    %999 = vmatprep.subr.mxu0 0.0
    %1000 = vmatpush1.msra.mxu0 0.0
    %1001 = vmatprep.subr.mxu0 %v185
    %1002 = vmatpush1.msra.mxu0 %v184
    %1003 = vmatprep.subr.mxu0 %v183
    %1004 = vmatpush1.msra.mxu0 %v182
    %1005 = vmatprep.subr.mxu0 %v181
    %1006 = vmatpush1.msra.mxu0 %v180
    %1007 = vmatprep.subr.mxu0 %v179
    %1008 = vmatpush1.msra.mxu0 %v178
    %1009 = vmatprep.subr.mxu0 %v177
    %1010 = vmatpush1.msra.mxu0 %v176
    %1011 = vmatprep.subr.mxu0 %v175
    %1012 = vmatpush1.msra.mxu0 %v174
    %1013 = vmatprep.subr.mxu0 %v173
    %1014 = vmatpush1.msra.mxu0 %v172
    %1015 = vmatprep.subr.mxu0 %v171
    %1016 = vmatpush1.msra.mxu0 %v170
    %1017 = vmatprep.subr.mxu0 0.0
    %1018 = vmatpush2.msra.mxu0 0.0
    %1019 = vmatprep.subr.mxu0 0.0
    %1020 = vmatpush2.msra.mxu0 0.0
    %1021 = vmatprep.subr.mxu0 0.0
    %1022 = vmatpush2.msra.mxu0 0.0
    %1023 = vmatprep.subr.mxu0 0.0
    %1024 = vmatpush2.msra.mxu0 0.0
    %1025 = vmatprep.subr.mxu0 0.0
    %1026 = vmatpush2.msra.mxu0 0.0
    %1027 = vmatprep.subr.mxu0 0.0
    %1028 = vmatpush2.msra.mxu0 0.0
    %1029 = vmatprep.subr.mxu0 0.0
    %1030 = vmatpush2.msra.mxu0 0.0
    %1031 = vmatprep.subr.mxu0 0.0
    %1032 = vmatpush2.msra.mxu0 0.0
    %1033 = vmatprep.subr.mxu0 0.0
    %1034 = vmatpush2.msra.mxu0 0.0
    %1035 = vmatprep.subr.mxu0 0.0
    %1036 = vmatpush2.msra.mxu0 0.0
    %1037 = vmatprep.subr.mxu0 0.0
    %1038 = vmatpush2.msra.mxu0 0.0
    %1039 = vmatprep.subr.mxu0 0.0
    %1040 = vmatpush2.msra.mxu0 0.0
    %1041 = vmatprep.subr.mxu0 0.0
    %1042 = vmatpush2.msra.mxu0 0.0
    %1043 = vmatprep.subr.mxu0 0.0
    %1044 = vmatpush2.msra.mxu0 0.0
    %1045 = vmatprep.subr.mxu0 0.0
    %1046 = vmatpush2.msra.mxu0 0.0
    %1047 = vmatprep.subr.mxu0 0.0
    %1048 = vmatpush2.msra.mxu0 0.0
    %1049 = vmatprep.mubr.f32.mxu0 0.0
    %1050 = vmatmul.mubr.f32.gmra.mxu0 %v983
    %v1051 = vpop.f32.mrf.mxu0
    %v1052 = vadd.f32 0.0, %v1051
    %v1053 = vpop.f32.mrf.mxu0
    %v1054 = vadd.f32 0.0, %v1053
    %1055 = vdwg.mxu0
    %v1058 = vrot.slane %v1052, 2
    %v1059 = vrot.slane %v1054, 2
    %v1062 = vadd.f32 %v166, %v1058
    %v1063 = vadd.f32 %v168, %v1059
    %v1064 = vxor.u32 %v1062, 2147483648
    %v1065 = vxor.u32 %v1063, 2147483648
    %v1066 = vmul.f32 %v1064, 1.442695
    %v1067 = vpow.pop %v1066
    %v1068 = vmul.f32 %v1065, 1.442695
    %v1069 = vpow.pop %v1068
    %v1070 = vadd.f32 %v1067, 1.0
    %v1071 = vadd.f32 %v1069, 1.0
    %v1072 = vrcp.pop %v1070
    %v1073 = vmul.f32 1.0, %v1072
    %v1074 = vrcp.pop %v1071
    %v1075 = vmul.f32 1.0, %v1074
    %v1076 = vtanh.pop %v1063
    %v1078 = vrot.slane %v974, 6
    %v1080 = vmul.f32 %v1073, %v1078
    %1082 = vrot.lane.b32.xlu0 %v1076, 64
    %v1083 = vpop.permute.xlu0 %1082
    %v1085 = vmul.f32 %v1073, %v1083
    %1087 = vrot.lane.b32.xlu0 %v1085, 64
    %v1088 = vpop.permute.xlu0 %1087
    %v1090 = vadd.f32 %v1080, %v1088
    %v1091 = vtanh.pop %v1090
    %1093 = vrot.lane.b32.xlu0 %v1091, 64
    %v1094 = vpop.permute.xlu0 %1093
    %v1096 = vmul.f32 %v1075, %v1094
    %v1097 = vld [vmem:[%s5] sm:$0xff]
    %v1098 = vld [vmem:[%s5 + $0x8] sm:$0xff]
    %v1099 = vld [vmem:[%s5 + $0x10] sm:$0xff]
    %v1100 = vld [vmem:[%s5 + $0x18] sm:$0xff]
    %v1101 = vld [vmem:[%s5 + $0x20] sm:$0xff]
    %v1102 = vld [vmem:[%s5 + $0x28] sm:$0xff]
    %v1103 = vld [vmem:[%s5 + $0x30] sm:$0xff]
    %v1104 = vld [vmem:[%s5 + $0x38] sm:$0xff]
    %v1105 = vld [vmem:[%s6] sm:$0x1]
    %v1107 = vlaneseq
    %v1108 = vshrl.u32 %v1107, 7
    %v1109 = vsub.s32 0, %v1108
    %v1110 = vrot.slane %v1105, %v1109
    %v1113 = vrot.slane %v1096, 6
    %v1114 = vsel %vm186, %v1113, 0
    %1116 = vmatprep.subr.mxu0 0.0
    %1117 = vmatpush1.msra.mxu0 0.0
    %1118 = vmatprep.subr.mxu0 0.0
    %1119 = vmatpush1.msra.mxu0 0.0
    %1120 = vmatprep.subr.mxu0 0.0
    %1121 = vmatpush1.msra.mxu0 0.0
    %1122 = vmatprep.subr.mxu0 0.0
    %1123 = vmatpush1.msra.mxu0 0.0
    %1124 = vmatprep.subr.mxu0 0.0
    %1125 = vmatpush1.msra.mxu0 0.0
    %1126 = vmatprep.subr.mxu0 0.0
    %1127 = vmatpush1.msra.mxu0 0.0
    %1128 = vmatprep.subr.mxu0 0.0
    %1129 = vmatpush1.msra.mxu0 0.0
    %1130 = vmatprep.subr.mxu0 0.0
    %1131 = vmatpush1.msra.mxu0 0.0
    %1132 = vmatprep.subr.mxu0 0.0
    %1133 = vmatpush1.msra.mxu0 %v1104
    %1134 = vmatprep.subr.mxu0 0.0
    %1135 = vmatpush1.msra.mxu0 %v1103
    %1136 = vmatprep.subr.mxu0 0.0
    %1137 = vmatpush1.msra.mxu0 %v1102
    %1138 = vmatprep.subr.mxu0 0.0
    %1139 = vmatpush1.msra.mxu0 %v1101
    %1140 = vmatprep.subr.mxu0 0.0
    %1141 = vmatpush1.msra.mxu0 %v1100
    %1142 = vmatprep.subr.mxu0 0.0
    %1143 = vmatpush1.msra.mxu0 %v1099
    %1144 = vmatprep.subr.mxu0 0.0
    %1145 = vmatpush1.msra.mxu0 %v1098
    %1146 = vmatprep.subr.mxu0 0.0
    %1147 = vmatpush1.msra.mxu0 %v1097
    %1148 = vmatprep.subr.mxu0 0.0
    %1149 = vmatpush2.msra.mxu0 0.0
    %1150 = vmatprep.subr.mxu0 0.0
    %1151 = vmatpush2.msra.mxu0 0.0
    %1152 = vmatprep.subr.mxu0 0.0
    %1153 = vmatpush2.msra.mxu0 0.0
    %1154 = vmatprep.subr.mxu0 0.0
    %1155 = vmatpush2.msra.mxu0 0.0
    %1156 = vmatprep.subr.mxu0 0.0
    %1157 = vmatpush2.msra.mxu0 0.0
    %1158 = vmatprep.subr.mxu0 0.0
    %1159 = vmatpush2.msra.mxu0 0.0
    %1160 = vmatprep.subr.mxu0 0.0
    %1161 = vmatpush2.msra.mxu0 0.0
    %1162 = vmatprep.subr.mxu0 0.0
    %1163 = vmatpush2.msra.mxu0 0.0
    %1164 = vmatprep.subr.mxu0 0.0
    %1165 = vmatpush2.msra.mxu0 0.0
    %1166 = vmatprep.subr.mxu0 0.0
    %1167 = vmatpush2.msra.mxu0 0.0
    %1168 = vmatprep.subr.mxu0 0.0
    %1169 = vmatpush2.msra.mxu0 0.0
    %1170 = vmatprep.subr.mxu0 0.0
    %1171 = vmatpush2.msra.mxu0 0.0
    %1172 = vmatprep.subr.mxu0 0.0
    %1173 = vmatpush2.msra.mxu0 0.0
    %1174 = vmatprep.subr.mxu0 0.0
    %1175 = vmatpush2.msra.mxu0 0.0
    %1176 = vmatprep.subr.mxu0 0.0
    %1177 = vmatpush2.msra.mxu0 0.0
    %1178 = vmatprep.subr.mxu0 0.0
    %1179 = vmatpush2.msra.mxu0 0.0
    %1180 = vmatprep.mubr.f32.mxu0 0.0
    %1181 = vmatmul.mubr.f32.gmra.mxu0 %v1114
    %v1182 = vpop.f32.mrf.mxu0
    %v1183 = vadd.f32 %v1110, %v1182
    %v1184 = vpop.f32.mrf.mxu0
    %1185 = vdwg.mxu0
    %v1186 = vld [vmem:[%s7] sm:$0xff]
    %v1187 = vld [vmem:[%s7 + $0x8] sm:$0xff]
    %v1188 = vld [vmem:[%s7 + $0x10] sm:$0xff]
    %v1189 = vld [vmem:[%s7 + $0x18] sm:$0xff]
    %v1190 = vld [vmem:[%s7 + $0x20] sm:$0xff]
    %v1191 = vld [vmem:[%s7 + $0x28] sm:$0xff]
    %v1192 = vld [vmem:[%s7 + $0x30] sm:$0xff]
    %v1193 = vld [vmem:[%s7 + $0x38] sm:$0xff]
    %v1194 = vld [vmem:[%s8] sm:$0x1]
    %v1196 = vlaneseq
    %v1197 = vshrl.u32 %v1196, 7
    %v1198 = vsub.s32 0, %v1197
    %v1199 = vrot.slane %v1194, %v1198
    %1201 = vmatprep.subr.mxu0 0.0
    %1202 = vmatpush1.msra.mxu0 0.0
    %1203 = vmatprep.subr.mxu0 0.0
    %1204 = vmatpush1.msra.mxu0 0.0
    %1205 = vmatprep.subr.mxu0 0.0
    %1206 = vmatpush1.msra.mxu0 0.0
    %1207 = vmatprep.subr.mxu0 0.0
    %1208 = vmatpush1.msra.mxu0 0.0
    %1209 = vmatprep.subr.mxu0 0.0
    %1210 = vmatpush1.msra.mxu0 0.0
    %1211 = vmatprep.subr.mxu0 0.0
    %1212 = vmatpush1.msra.mxu0 0.0
    %1213 = vmatprep.subr.mxu0 0.0
    %1214 = vmatpush1.msra.mxu0 0.0
    %1215 = vmatprep.subr.mxu0 0.0
    %1216 = vmatpush1.msra.mxu0 0.0
    %1217 = vmatprep.subr.mxu0 0.0
    %1218 = vmatpush1.msra.mxu0 %v1193
    %1219 = vmatprep.subr.mxu0 0.0
    %1220 = vmatpush1.msra.mxu0 %v1192
    %1221 = vmatprep.subr.mxu0 0.0
    %1222 = vmatpush1.msra.mxu0 %v1191
    %1223 = vmatprep.subr.mxu0 0.0
    %1224 = vmatpush1.msra.mxu0 %v1190
    %1225 = vmatprep.subr.mxu0 0.0
    %1226 = vmatpush1.msra.mxu0 %v1189
    %1227 = vmatprep.subr.mxu0 0.0
    %1228 = vmatpush1.msra.mxu0 %v1188
    %1229 = vmatprep.subr.mxu0 0.0
    %1230 = vmatpush1.msra.mxu0 %v1187
    %1231 = vmatprep.subr.mxu0 0.0
    %1232 = vmatpush1.msra.mxu0 %v1186
    %1233 = vmatprep.subr.mxu0 0.0
    %1234 = vmatpush2.msra.mxu0 0.0
    %1235 = vmatprep.subr.mxu0 0.0
    %1236 = vmatpush2.msra.mxu0 0.0
    %1237 = vmatprep.subr.mxu0 0.0
    %1238 = vmatpush2.msra.mxu0 0.0
    %1239 = vmatprep.subr.mxu0 0.0
    %1240 = vmatpush2.msra.mxu0 0.0
    %1241 = vmatprep.subr.mxu0 0.0
    %1242 = vmatpush2.msra.mxu0 0.0
    %1243 = vmatprep.subr.mxu0 0.0
    %1244 = vmatpush2.msra.mxu0 0.0
    %1245 = vmatprep.subr.mxu0 0.0
    %1246 = vmatpush2.msra.mxu0 0.0
    %1247 = vmatprep.subr.mxu0 0.0
    %1248 = vmatpush2.msra.mxu0 0.0
    %1249 = vmatprep.subr.mxu0 0.0
    %1250 = vmatpush2.msra.mxu0 0.0
    %1251 = vmatprep.subr.mxu0 0.0
    %1252 = vmatpush2.msra.mxu0 0.0
    %1253 = vmatprep.subr.mxu0 0.0
    %1254 = vmatpush2.msra.mxu0 0.0
    %1255 = vmatprep.subr.mxu0 0.0
    %1256 = vmatpush2.msra.mxu0 0.0
    %1257 = vmatprep.subr.mxu0 0.0
    %1258 = vmatpush2.msra.mxu0 0.0
    %1259 = vmatprep.subr.mxu0 0.0
    %1260 = vmatpush2.msra.mxu0 0.0
    %1261 = vmatprep.subr.mxu0 0.0
    %1262 = vmatpush2.msra.mxu0 0.0
    %1263 = vmatprep.subr.mxu0 0.0
    %1264 = vmatpush2.msra.mxu0 0.0
    %1265 = vmatprep.mubr.f32.mxu0 0.0
    %1266 = vmatmul.mubr.f32.gmra.mxu0 %v1114
    %v1267 = vpop.f32.mrf.mxu0
    %v1268 = vadd.f32 %v1199, %v1267
    %v1269 = vpop.f32.mrf.mxu0
    %1270 = vdwg.mxu0
    %vm1271 = vcmask 123904
    %1272 = vst.msk [vmem:[#allocation2] sm:$0x3] %vm1271, %v1183
    %1273 = vst.msk [vmem:[#allocation4] sm:$0x3] %vm1271, %v1268
    %v1274 = vmul.f32 %v1268, 0.5
    %v1275 = vmul.f32 %v1274, 1.442695
    %v1276 = vpow.pop %v1275
    %v1277 = vld [vmem:[%s1] sm:$0x3]
    %v1278 = vmul.f32 %v1276, %v1277
    %v1279 = vadd.f32 %v1183, %v1278
    %v1280 = vld [vmem:[%s9] sm:$0xff]
    %v1281 = vld [vmem:[%s9 + $0x8] sm:$0xff]
    %v1282 = vld [vmem:[%s10] sm:$0x1]
    %v1284 = vlaneseq
    %v1285 = vshrl.u32 %v1284, 7
    %v1286 = vsub.s32 0, %v1285
    %v1287 = vrot.slane %v1282, %v1286
    %vm1289 = vcmask 130048
    %v1291 = vsel %vm1289, %v1279, 0
    %1293 = vmatprep.subr.mxu0 0.0
    %1294 = vmatpush1.msra.mxu0 0.0
    %1295 = vmatprep.subr.mxu0 0.0
    %1296 = vmatpush1.msra.mxu0 0.0
    %1297 = vmatprep.subr.mxu0 0.0
    %1298 = vmatpush1.msra.mxu0 0.0
    %1299 = vmatprep.subr.mxu0 0.0
    %1300 = vmatpush1.msra.mxu0 0.0
    %1301 = vmatprep.subr.mxu0 0.0
    %1302 = vmatpush1.msra.mxu0 0.0
    %1303 = vmatprep.subr.mxu0 0.0
    %1304 = vmatpush1.msra.mxu0 0.0
    %1305 = vmatprep.subr.mxu0 0.0
    %1306 = vmatpush1.msra.mxu0 0.0
    %1307 = vmatprep.subr.mxu0 0.0
    %1308 = vmatpush1.msra.mxu0 0.0
    %1309 = vmatprep.subr.mxu0 0.0
    %1310 = vmatpush1.msra.mxu0 0.0
    %1311 = vmatprep.subr.mxu0 0.0
    %1312 = vmatpush1.msra.mxu0 0.0
    %1313 = vmatprep.subr.mxu0 0.0
    %1314 = vmatpush1.msra.mxu0 0.0
    %1315 = vmatprep.subr.mxu0 0.0
    %1316 = vmatpush1.msra.mxu0 0.0
    %1317 = vmatprep.subr.mxu0 0.0
    %1318 = vmatpush1.msra.mxu0 0.0
    %1319 = vmatprep.subr.mxu0 0.0
    %1320 = vmatpush1.msra.mxu0 0.0
    %1321 = vmatprep.subr.mxu0 0.0
    %1322 = vmatpush1.msra.mxu0 %v1281
    %1323 = vmatprep.subr.mxu0 0.0
    %1324 = vmatpush1.msra.mxu0 %v1280
    %1325 = vmatprep.subr.mxu0 0.0
    %1326 = vmatpush2.msra.mxu0 0.0
    %1327 = vmatprep.subr.mxu0 0.0
    %1328 = vmatpush2.msra.mxu0 0.0
    %1329 = vmatprep.subr.mxu0 0.0
    %1330 = vmatpush2.msra.mxu0 0.0
    %1331 = vmatprep.subr.mxu0 0.0
    %1332 = vmatpush2.msra.mxu0 0.0
    %1333 = vmatprep.subr.mxu0 0.0
    %1334 = vmatpush2.msra.mxu0 0.0
    %1335 = vmatprep.subr.mxu0 0.0
    %1336 = vmatpush2.msra.mxu0 0.0
    %1337 = vmatprep.subr.mxu0 0.0
    %1338 = vmatpush2.msra.mxu0 0.0
    %1339 = vmatprep.subr.mxu0 0.0
    %1340 = vmatpush2.msra.mxu0 0.0
    %1341 = vmatprep.subr.mxu0 0.0
    %1342 = vmatpush2.msra.mxu0 0.0
    %1343 = vmatprep.subr.mxu0 0.0
    %1344 = vmatpush2.msra.mxu0 0.0
    %1345 = vmatprep.subr.mxu0 0.0
    %1346 = vmatpush2.msra.mxu0 0.0
    %1347 = vmatprep.subr.mxu0 0.0
    %1348 = vmatpush2.msra.mxu0 0.0
    %1349 = vmatprep.subr.mxu0 0.0
    %1350 = vmatpush2.msra.mxu0 0.0
    %1351 = vmatprep.subr.mxu0 0.0
    %1352 = vmatpush2.msra.mxu0 0.0
    %1353 = vmatprep.subr.mxu0 0.0
    %1354 = vmatpush2.msra.mxu0 0.0
    %1355 = vmatprep.subr.mxu0 0.0
    %1356 = vmatpush2.msra.mxu0 0.0
    %1357 = vmatprep.mubr.f32.mxu0 0.0
    %1358 = vmatmul.mubr.f32.gmra.mxu0 %v1291
    %v1359 = vpop.f32.mrf.mxu0
    %v1360 = vadd.f32 %v1287, %v1359
    %v1361 = vpop.f32.mrf.mxu0
    %1362 = vdwg.mxu0
    %v1363 = vtanh.pop %v1360
    %v1364 = vld [vmem:[%s11] sm:$0xff]
    %v1365 = vld [vmem:[%s11 + $0x8] sm:$0x3]
    %v1367 = vsel %vm86, %v1365, 0
    %1369 = vmatprep.subr.mxu0 0.0
    %1370 = vmatpush1.msra.mxu0 0.0
    %1371 = vmatprep.subr.mxu0 0.0
    %1372 = vmatpush1.msra.mxu0 0.0
    %1373 = vmatprep.subr.mxu0 0.0
    %1374 = vmatpush1.msra.mxu0 0.0
    %1375 = vmatprep.subr.mxu0 0.0
    %1376 = vmatpush1.msra.mxu0 0.0
    %1377 = vmatprep.subr.mxu0 0.0
    %1378 = vmatpush1.msra.mxu0 0.0
    %1379 = vmatprep.subr.mxu0 0.0
    %1380 = vmatpush1.msra.mxu0 0.0
    %1381 = vmatprep.subr.mxu0 0.0
    %1382 = vmatpush1.msra.mxu0 0.0
    %1383 = vmatprep.subr.mxu0 0.0
    %1384 = vmatpush1.msra.mxu0 0.0
    %1385 = vmatprep.subr.mxu0 0.0
    %1386 = vmatpush1.msra.mxu0 0.0
    %1387 = vmatprep.subr.mxu0 0.0
    %1388 = vmatpush1.msra.mxu0 0.0
    %1389 = vmatprep.subr.mxu0 0.0
    %1390 = vmatpush1.msra.mxu0 0.0
    %1391 = vmatprep.subr.mxu0 0.0
    %1392 = vmatpush1.msra.mxu0 0.0
    %1393 = vmatprep.subr.mxu0 0.0
    %1394 = vmatpush1.msra.mxu0 0.0
    %1395 = vmatprep.subr.mxu0 0.0
    %1396 = vmatpush1.msra.mxu0 0.0
    %1397 = vmatprep.subr.mxu0 0.0
    %1398 = vmatpush1.msra.mxu0 %v1367
    %1399 = vmatprep.subr.mxu0 0.0
    %1400 = vmatpush1.msra.mxu0 %v1364
    %1401 = vmatprep.subr.mxu0 0.0
    %1402 = vmatpush2.msra.mxu0 0.0
    %1403 = vmatprep.subr.mxu0 0.0
    %1404 = vmatpush2.msra.mxu0 0.0
    %1405 = vmatprep.subr.mxu0 0.0
    %1406 = vmatpush2.msra.mxu0 0.0
    %1407 = vmatprep.subr.mxu0 0.0
    %1408 = vmatpush2.msra.mxu0 0.0
    %1409 = vmatprep.subr.mxu0 0.0
    %1410 = vmatpush2.msra.mxu0 0.0
    %1411 = vmatprep.subr.mxu0 0.0
    %1412 = vmatpush2.msra.mxu0 0.0
    %1413 = vmatprep.subr.mxu0 0.0
    %1414 = vmatpush2.msra.mxu0 0.0
    %1415 = vmatprep.subr.mxu0 0.0
    %1416 = vmatpush2.msra.mxu0 0.0
    %1417 = vmatprep.subr.mxu0 0.0
    %1418 = vmatpush2.msra.mxu0 0.0
    %1419 = vmatprep.subr.mxu0 0.0
    %1420 = vmatpush2.msra.mxu0 0.0
    %1421 = vmatprep.subr.mxu0 0.0
    %1422 = vmatpush2.msra.mxu0 0.0
    %1423 = vmatprep.subr.mxu0 0.0
    %1424 = vmatpush2.msra.mxu0 0.0
    %1425 = vmatprep.subr.mxu0 0.0
    %1426 = vmatpush2.msra.mxu0 0.0
    %1427 = vmatprep.subr.mxu0 0.0
    %1428 = vmatpush2.msra.mxu0 0.0
    %1429 = vmatprep.subr.mxu0 0.0
    %1430 = vmatpush2.msra.mxu0 0.0
    %1431 = vmatprep.subr.mxu0 0.0
    %1432 = vmatpush2.msra.mxu0 0.0
    %1433 = vmatprep.mubr.f32.mxu0 0.0
    %1434 = vmatmul.mubr.f32.gmra.mxu0 %v81
    %v1435 = vpop.f32.mrf.mxu0
    %v1436 = vadd.f32 0.0, %v1435
    %v1437 = vpop.f32.mrf.mxu0
    %1438 = vmatprep.mubr.f32.mxu0 0.0
    %1439 = vmatmul.mubr.f32.gmra.mxu0 %v84
    %v1440 = vpop.f32.mrf.mxu0
    %v1441 = vadd.f32 0.0, %v1440
    %v1442 = vpop.f32.mrf.mxu0
    %1443 = vdwg.mxu0
    %v1444 = vld [vmem:[%s12] sm:$0xff]
    %v1445 = vld [vmem:[%s12 + $0x8] sm:$0xff]
    %v1446 = vld [vmem:[%s14] sm:$0x1]
    %v1448 = vlaneseq
    %v1449 = vshrl.u32 %v1448, 7
    %v1450 = vsub.s32 0, %v1449
    %v1451 = vrot.slane %v1446, %v1450
    %1453 = vmatprep.subr.mxu0 0.0
    %1454 = vmatpush1.msra.mxu0 0.0
    %1455 = vmatprep.subr.mxu0 0.0
    %1456 = vmatpush1.msra.mxu0 0.0
    %1457 = vmatprep.subr.mxu0 0.0
    %1458 = vmatpush1.msra.mxu0 0.0
    %1459 = vmatprep.subr.mxu0 0.0
    %1460 = vmatpush1.msra.mxu0 0.0
    %1461 = vmatprep.subr.mxu0 0.0
    %1462 = vmatpush1.msra.mxu0 0.0
    %1463 = vmatprep.subr.mxu0 0.0
    %1464 = vmatpush1.msra.mxu0 0.0
    %1465 = vmatprep.subr.mxu0 0.0
    %1466 = vmatpush1.msra.mxu0 0.0
    %1467 = vmatprep.subr.mxu0 0.0
    %1468 = vmatpush1.msra.mxu0 0.0
    %1469 = vmatprep.subr.mxu0 0.0
    %1470 = vmatpush1.msra.mxu0 0.0
    %1471 = vmatprep.subr.mxu0 0.0
    %1472 = vmatpush1.msra.mxu0 0.0
    %1473 = vmatprep.subr.mxu0 0.0
    %1474 = vmatpush1.msra.mxu0 0.0
    %1475 = vmatprep.subr.mxu0 0.0
    %1476 = vmatpush1.msra.mxu0 0.0
    %1477 = vmatprep.subr.mxu0 0.0
    %1478 = vmatpush1.msra.mxu0 0.0
    %1479 = vmatprep.subr.mxu0 0.0
    %1480 = vmatpush1.msra.mxu0 0.0
    %1481 = vmatprep.subr.mxu0 0.0
    %1482 = vmatpush1.msra.mxu0 %v1445
    %1483 = vmatprep.subr.mxu0 0.0
    %1484 = vmatpush1.msra.mxu0 %v1444
    %1485 = vmatprep.subr.mxu0 0.0
    %1486 = vmatpush2.msra.mxu0 0.0
    %1487 = vmatprep.subr.mxu0 0.0
    %1488 = vmatpush2.msra.mxu0 0.0
    %1489 = vmatprep.subr.mxu0 0.0
    %1490 = vmatpush2.msra.mxu0 0.0
    %1491 = vmatprep.subr.mxu0 0.0
    %1492 = vmatpush2.msra.mxu0 0.0
    %1493 = vmatprep.subr.mxu0 0.0
    %1494 = vmatpush2.msra.mxu0 0.0
    %1495 = vmatprep.subr.mxu0 0.0
    %1496 = vmatpush2.msra.mxu0 0.0
    %1497 = vmatprep.subr.mxu0 0.0
    %1498 = vmatpush2.msra.mxu0 0.0
    %1499 = vmatprep.subr.mxu0 0.0
    %1500 = vmatpush2.msra.mxu0 0.0
    %1501 = vmatprep.subr.mxu0 0.0
    %1502 = vmatpush2.msra.mxu0 0.0
    %1503 = vmatprep.subr.mxu0 0.0
    %1504 = vmatpush2.msra.mxu0 0.0
    %1505 = vmatprep.subr.mxu0 0.0
    %1506 = vmatpush2.msra.mxu0 0.0
    %1507 = vmatprep.subr.mxu0 0.0
    %1508 = vmatpush2.msra.mxu0 0.0
    %1509 = vmatprep.subr.mxu0 0.0
    %1510 = vmatpush2.msra.mxu0 0.0
    %1511 = vmatprep.subr.mxu0 0.0
    %1512 = vmatpush2.msra.mxu0 0.0
    %1513 = vmatprep.subr.mxu0 0.0
    %1514 = vmatpush2.msra.mxu0 0.0
    %1515 = vmatprep.subr.mxu0 0.0
    %1516 = vmatpush2.msra.mxu0 0.0
    %1517 = vmatprep.mubr.f32.mxu0 0.0
    %1518 = vmatmul.mubr.f32.gmra.mxu0 %v1291
    %v1519 = vpop.f32.mrf.mxu0
    %v1520 = vadd.f32 %v1451, %v1519
    %v1521 = vpop.f32.mrf.mxu0
    %1522 = vdwg.mxu0
    %v1523 = vld [vmem:[%s13] sm:$0xff]
    %v1524 = vld [vmem:[%s13 + $0x8] sm:$0xff]
    %v1525 = vld [vmem:[%s13 + $0x10] sm:$0xff]
    %v1526 = vld [vmem:[%s13 + $0x18] sm:$0xff]
    %v1527 = vadd.f32 %v1436, %v1520
    %vm1528 = vcmask 261120
    %v1530 = vsel %vm1528, %v1363, 0
    %1532 = vmatprep.subr.mxu0 0.0
    %1533 = vmatpush1.msra.mxu0 0.0
    %1534 = vmatprep.subr.mxu0 0.0
    %1535 = vmatpush1.msra.mxu0 0.0
    %1536 = vmatprep.subr.mxu0 0.0
    %1537 = vmatpush1.msra.mxu0 0.0
    %1538 = vmatprep.subr.mxu0 0.0
    %1539 = vmatpush1.msra.mxu0 0.0
    %1540 = vmatprep.subr.mxu0 0.0
    %1541 = vmatpush1.msra.mxu0 0.0
    %1542 = vmatprep.subr.mxu0 0.0
    %1543 = vmatpush1.msra.mxu0 0.0
    %1544 = vmatprep.subr.mxu0 0.0
    %1545 = vmatpush1.msra.mxu0 0.0
    %1546 = vmatprep.subr.mxu0 0.0
    %1547 = vmatpush1.msra.mxu0 0.0
    %1548 = vmatprep.subr.mxu0 0.0
    %1549 = vmatpush1.msra.mxu0 0.0
    %1550 = vmatprep.subr.mxu0 0.0
    %1551 = vmatpush1.msra.mxu0 0.0
    %1552 = vmatprep.subr.mxu0 0.0
    %1553 = vmatpush1.msra.mxu0 0.0
    %1554 = vmatprep.subr.mxu0 0.0
    %1555 = vmatpush1.msra.mxu0 0.0
    %1556 = vmatprep.subr.mxu0 0.0
    %1557 = vmatpush1.msra.mxu0 %v1526
    %1558 = vmatprep.subr.mxu0 0.0
    %1559 = vmatpush1.msra.mxu0 %v1525
    %1560 = vmatprep.subr.mxu0 0.0
    %1561 = vmatpush1.msra.mxu0 %v1524
    %1562 = vmatprep.subr.mxu0 0.0
    %1563 = vmatpush1.msra.mxu0 %v1523
    %1564 = vmatprep.subr.mxu0 0.0
    %1565 = vmatpush2.msra.mxu0 0.0
    %1566 = vmatprep.subr.mxu0 0.0
    %1567 = vmatpush2.msra.mxu0 0.0
    %1568 = vmatprep.subr.mxu0 0.0
    %1569 = vmatpush2.msra.mxu0 0.0
    %1570 = vmatprep.subr.mxu0 0.0
    %1571 = vmatpush2.msra.mxu0 0.0
    %1572 = vmatprep.subr.mxu0 0.0
    %1573 = vmatpush2.msra.mxu0 0.0
    %1574 = vmatprep.subr.mxu0 0.0
    %1575 = vmatpush2.msra.mxu0 0.0
    %1576 = vmatprep.subr.mxu0 0.0
    %1577 = vmatpush2.msra.mxu0 0.0
    %1578 = vmatprep.subr.mxu0 0.0
    %1579 = vmatpush2.msra.mxu0 0.0
    %1580 = vmatprep.subr.mxu0 0.0
    %1581 = vmatpush2.msra.mxu0 0.0
    %1582 = vmatprep.subr.mxu0 0.0
    %1583 = vmatpush2.msra.mxu0 0.0
    %1584 = vmatprep.subr.mxu0 0.0
    %1585 = vmatpush2.msra.mxu0 0.0
    %1586 = vmatprep.subr.mxu0 0.0
    %1587 = vmatpush2.msra.mxu0 0.0
    %1588 = vmatprep.subr.mxu0 0.0
    %1589 = vmatpush2.msra.mxu0 0.0
    %1590 = vmatprep.subr.mxu0 0.0
    %1591 = vmatpush2.msra.mxu0 0.0
    %1592 = vmatprep.subr.mxu0 0.0
    %1593 = vmatpush2.msra.mxu0 0.0
    %1594 = vmatprep.subr.mxu0 0.0
    %1595 = vmatpush2.msra.mxu0 0.0
    %1596 = vmatprep.mubr.f32.mxu0 0.0
    %1597 = vmatmul.mubr.f32.gmra.mxu0 %v1530
    %v1598 = vpop.f32.mrf.mxu0
    %v1599 = vadd.f32 0.0, %v1598
    %v1600 = vpop.f32.mrf.mxu0
    %1601 = vdwg.mxu0
    %v1602 = vadd.f32 %v1527, %v1599
    %v1603 = vxor.u32 %v1602, 2147483648
    %v1604 = vmul.f32 %v1603, 1.442695
    %v1605 = vpow.pop %v1604
    %v1606 = vadd.f32 %v1605, 1.0
    %v1607 = vrcp.pop %v1606
    %v1608 = vmul.f32 1.0, %v1607
    %v1609 = vtanh.pop %v1602
    %v1610 = vmul.f32 %v1608, %v1363
    %1612 = vrot.lane.b32.xlu0 %v1609, 32
    %v1613 = vpop.permute.xlu0 %1612
    %v1615 = vmul.f32 %v1608, %v1613
    %1617 = vrot.lane.b32.xlu0 %v1615, 32
    %v1618 = vpop.permute.xlu0 %1617
    %v1620 = vadd.f32 %v1610, %v1618
    %v1621 = vtanh.pop %v1620
    %1623 = vrot.lane.b32.xlu0 %v1621, 32
    %v1624 = vpop.permute.xlu0 %1623
    %v1626 = vmul.f32 %v1608, %v1624
    %v1628 = vrot.slane %v1520, 6
    %v1630 = vadd.f32 %v1436, %v1628
    %1632 = vrot.lane.b32.xlu0 %v1626, 64
    %v1633 = vpop.permute.xlu0 %1632
    %v1634 = vsel %vm1528, %v1633, 0
    %1636 = vmatprep.subr.mxu0 0.0
    %1637 = vmatpush1.msra.mxu0 0.0
    %1638 = vmatprep.subr.mxu0 0.0
    %1639 = vmatpush1.msra.mxu0 0.0
    %1640 = vmatprep.subr.mxu0 0.0
    %1641 = vmatpush1.msra.mxu0 0.0
    %1642 = vmatprep.subr.mxu0 0.0
    %1643 = vmatpush1.msra.mxu0 0.0
    %1644 = vmatprep.subr.mxu0 0.0
    %1645 = vmatpush1.msra.mxu0 0.0
    %1646 = vmatprep.subr.mxu0 0.0
    %1647 = vmatpush1.msra.mxu0 0.0
    %1648 = vmatprep.subr.mxu0 0.0
    %1649 = vmatpush1.msra.mxu0 0.0
    %1650 = vmatprep.subr.mxu0 0.0
    %1651 = vmatpush1.msra.mxu0 0.0
    %1652 = vmatprep.subr.mxu0 0.0
    %1653 = vmatpush1.msra.mxu0 0.0
    %1654 = vmatprep.subr.mxu0 0.0
    %1655 = vmatpush1.msra.mxu0 0.0
    %1656 = vmatprep.subr.mxu0 0.0
    %1657 = vmatpush1.msra.mxu0 0.0
    %1658 = vmatprep.subr.mxu0 0.0
    %1659 = vmatpush1.msra.mxu0 0.0
    %1660 = vmatprep.subr.mxu0 0.0
    %1661 = vmatpush1.msra.mxu0 %v1526
    %1662 = vmatprep.subr.mxu0 0.0
    %1663 = vmatpush1.msra.mxu0 %v1525
    %1664 = vmatprep.subr.mxu0 0.0
    %1665 = vmatpush1.msra.mxu0 %v1524
    %1666 = vmatprep.subr.mxu0 0.0
    %1667 = vmatpush1.msra.mxu0 %v1523
    %1668 = vmatprep.subr.mxu0 0.0
    %1669 = vmatpush2.msra.mxu0 0.0
    %1670 = vmatprep.subr.mxu0 0.0
    %1671 = vmatpush2.msra.mxu0 0.0
    %1672 = vmatprep.subr.mxu0 0.0
    %1673 = vmatpush2.msra.mxu0 0.0
    %1674 = vmatprep.subr.mxu0 0.0
    %1675 = vmatpush2.msra.mxu0 0.0
    %1676 = vmatprep.subr.mxu0 0.0
    %1677 = vmatpush2.msra.mxu0 0.0
    %1678 = vmatprep.subr.mxu0 0.0
    %1679 = vmatpush2.msra.mxu0 0.0
    %1680 = vmatprep.subr.mxu0 0.0
    %1681 = vmatpush2.msra.mxu0 0.0
    %1682 = vmatprep.subr.mxu0 0.0
    %1683 = vmatpush2.msra.mxu0 0.0
    %1684 = vmatprep.subr.mxu0 0.0
    %1685 = vmatpush2.msra.mxu0 0.0
    %1686 = vmatprep.subr.mxu0 0.0
    %1687 = vmatpush2.msra.mxu0 0.0
    %1688 = vmatprep.subr.mxu0 0.0
    %1689 = vmatpush2.msra.mxu0 0.0
    %1690 = vmatprep.subr.mxu0 0.0
    %1691 = vmatpush2.msra.mxu0 0.0
    %1692 = vmatprep.subr.mxu0 0.0
    %1693 = vmatpush2.msra.mxu0 0.0
    %1694 = vmatprep.subr.mxu0 0.0
    %1695 = vmatpush2.msra.mxu0 0.0
    %1696 = vmatprep.subr.mxu0 0.0
    %1697 = vmatpush2.msra.mxu0 0.0
    %1698 = vmatprep.subr.mxu0 0.0
    %1699 = vmatpush2.msra.mxu0 0.0
    %1700 = vmatprep.mubr.f32.mxu0 0.0
    %1701 = vmatmul.mubr.f32.gmra.mxu0 %v1634
    %v1702 = vpop.f32.mrf.mxu0
    %v1703 = vadd.f32 0.0, %v1702
    %v1704 = vpop.f32.mrf.mxu0
    %1705 = vdwg.mxu0
    %v1707 = vrot.slane %v1703, 6
    %v1709 = vadd.f32 %v1630, %v1707
    %v1710 = vxor.u32 %v1709, 2147483648
    %v1711 = vmul.f32 %v1710, 1.442695
    %v1712 = vpow.pop %v1711
    %v1713 = vadd.f32 %v1712, 1.0
    %v1714 = vrcp.pop %v1713
    %v1715 = vmul.f32 1.0, %v1714
    %v1716 = vtanh.pop %v1709
    %v1718 = vrot.slane %v1620, 6
    %v1720 = vmul.f32 %v1715, %v1718
    %1722 = vrot.lane.b32.xlu0 %v1716, 32
    %v1723 = vpop.permute.xlu0 %1722
    %v1725 = vmul.f32 %v1715, %v1723
    %1727 = vrot.lane.b32.xlu0 %v1725, 32
    %v1728 = vpop.permute.xlu0 %1727
    %v1730 = vadd.f32 %v1720, %v1728
    %v1731 = vtanh.pop %v1730
    %1733 = vrot.lane.b32.xlu0 %v1731, 32
    %v1734 = vpop.permute.xlu0 %1733
    %v1736 = vmul.f32 %v1715, %v1734
    %v1737 = vrot.slane %v1520, 4
    %v1739 = vadd.f32 %v1436, %v1737
    %v1741 = vrot.slane %v1736, 2
    %1742 = vrot.lane.b32.xlu0 %v1741, 64
    %v1743 = vpop.permute.xlu0 %1742
    %v1744 = vsel %vm1528, %v1743, 0
    %1746 = vmatprep.subr.mxu0 0.0
    %1747 = vmatpush1.msra.mxu0 0.0
    %1748 = vmatprep.subr.mxu0 0.0
    %1749 = vmatpush1.msra.mxu0 0.0
    %1750 = vmatprep.subr.mxu0 0.0
    %1751 = vmatpush1.msra.mxu0 0.0
    %1752 = vmatprep.subr.mxu0 0.0
    %1753 = vmatpush1.msra.mxu0 0.0
    %1754 = vmatprep.subr.mxu0 0.0
    %1755 = vmatpush1.msra.mxu0 0.0
    %1756 = vmatprep.subr.mxu0 0.0
    %1757 = vmatpush1.msra.mxu0 0.0
    %1758 = vmatprep.subr.mxu0 0.0
    %1759 = vmatpush1.msra.mxu0 0.0
    %1760 = vmatprep.subr.mxu0 0.0
    %1761 = vmatpush1.msra.mxu0 0.0
    %1762 = vmatprep.subr.mxu0 0.0
    %1763 = vmatpush1.msra.mxu0 0.0
    %1764 = vmatprep.subr.mxu0 0.0
    %1765 = vmatpush1.msra.mxu0 0.0
    %1766 = vmatprep.subr.mxu0 0.0
    %1767 = vmatpush1.msra.mxu0 0.0
    %1768 = vmatprep.subr.mxu0 0.0
    %1769 = vmatpush1.msra.mxu0 0.0
    %1770 = vmatprep.subr.mxu0 0.0
    %1771 = vmatpush1.msra.mxu0 %v1526
    %1772 = vmatprep.subr.mxu0 0.0
    %1773 = vmatpush1.msra.mxu0 %v1525
    %1774 = vmatprep.subr.mxu0 0.0
    %1775 = vmatpush1.msra.mxu0 %v1524
    %1776 = vmatprep.subr.mxu0 0.0
    %1777 = vmatpush1.msra.mxu0 %v1523
    %1778 = vmatprep.subr.mxu0 0.0
    %1779 = vmatpush2.msra.mxu0 0.0
    %1780 = vmatprep.subr.mxu0 0.0
    %1781 = vmatpush2.msra.mxu0 0.0
    %1782 = vmatprep.subr.mxu0 0.0
    %1783 = vmatpush2.msra.mxu0 0.0
    %1784 = vmatprep.subr.mxu0 0.0
    %1785 = vmatpush2.msra.mxu0 0.0
    %1786 = vmatprep.subr.mxu0 0.0
    %1787 = vmatpush2.msra.mxu0 0.0
    %1788 = vmatprep.subr.mxu0 0.0
    %1789 = vmatpush2.msra.mxu0 0.0
    %1790 = vmatprep.subr.mxu0 0.0
    %1791 = vmatpush2.msra.mxu0 0.0
    %1792 = vmatprep.subr.mxu0 0.0
    %1793 = vmatpush2.msra.mxu0 0.0
    %1794 = vmatprep.subr.mxu0 0.0
    %1795 = vmatpush2.msra.mxu0 0.0
    %1796 = vmatprep.subr.mxu0 0.0
    %1797 = vmatpush2.msra.mxu0 0.0
    %1798 = vmatprep.subr.mxu0 0.0
    %1799 = vmatpush2.msra.mxu0 0.0
    %1800 = vmatprep.subr.mxu0 0.0
    %1801 = vmatpush2.msra.mxu0 0.0
    %1802 = vmatprep.subr.mxu0 0.0
    %1803 = vmatpush2.msra.mxu0 0.0
    %1804 = vmatprep.subr.mxu0 0.0
    %1805 = vmatpush2.msra.mxu0 0.0
    %1806 = vmatprep.subr.mxu0 0.0
    %1807 = vmatpush2.msra.mxu0 0.0
    %1808 = vmatprep.subr.mxu0 0.0
    %1809 = vmatpush2.msra.mxu0 0.0
    %1810 = vmatprep.mubr.f32.mxu0 0.0
    %1811 = vmatmul.mubr.f32.gmra.mxu0 %v1744
    %v1812 = vpop.f32.mrf.mxu0
    %v1813 = vadd.f32 0.0, %v1812
    %v1814 = vpop.f32.mrf.mxu0
    %1815 = vdwg.mxu0
    %v1817 = vrot.slane %v1813, 4
    %v1819 = vadd.f32 %v1739, %v1817
    %v1820 = vxor.u32 %v1819, 2147483648
    %v1821 = vmul.f32 %v1820, 1.442695
    %v1822 = vpow.pop %v1821
    %v1823 = vadd.f32 %v1822, 1.0
    %v1824 = vrcp.pop %v1823
    %v1825 = vmul.f32 1.0, %v1824
    %v1826 = vtanh.pop %v1819
    %v1828 = vrot.slane %v1730, 6
    %v1830 = vmul.f32 %v1825, %v1828
    %1832 = vrot.lane.b32.xlu0 %v1826, 32
    %v1833 = vpop.permute.xlu0 %1832
    %v1835 = vmul.f32 %v1825, %v1833
    %1837 = vrot.lane.b32.xlu0 %v1835, 32
    %v1838 = vpop.permute.xlu0 %1837
    %v1840 = vadd.f32 %v1830, %v1838
    %v1841 = vtanh.pop %v1840
    %1843 = vrot.lane.b32.xlu0 %v1841, 32
    %v1844 = vpop.permute.xlu0 %1843
    %v1846 = vmul.f32 %v1825, %v1844
    %v1847 = vrot.slane %v1520, 2
    %v1849 = vadd.f32 %v1436, %v1847
    %v1851 = vrot.slane %v1846, 4
    %1852 = vrot.lane.b32.xlu0 %v1851, 64
    %v1853 = vpop.permute.xlu0 %1852
    %v1854 = vsel %vm1528, %v1853, 0
    %1856 = vmatprep.subr.mxu0 0.0
    %1857 = vmatpush1.msra.mxu0 0.0
    %1858 = vmatprep.subr.mxu0 0.0
    %1859 = vmatpush1.msra.mxu0 0.0
    %1860 = vmatprep.subr.mxu0 0.0
    %1861 = vmatpush1.msra.mxu0 0.0
    %1862 = vmatprep.subr.mxu0 0.0
    %1863 = vmatpush1.msra.mxu0 0.0
    %1864 = vmatprep.subr.mxu0 0.0
    %1865 = vmatpush1.msra.mxu0 0.0
    %1866 = vmatprep.subr.mxu0 0.0
    %1867 = vmatpush1.msra.mxu0 0.0
    %1868 = vmatprep.subr.mxu0 0.0
    %1869 = vmatpush1.msra.mxu0 0.0
    %1870 = vmatprep.subr.mxu0 0.0
    %1871 = vmatpush1.msra.mxu0 0.0
    %1872 = vmatprep.subr.mxu0 0.0
    %1873 = vmatpush1.msra.mxu0 0.0
    %1874 = vmatprep.subr.mxu0 0.0
    %1875 = vmatpush1.msra.mxu0 0.0
    %1876 = vmatprep.subr.mxu0 0.0
    %1877 = vmatpush1.msra.mxu0 0.0
    %1878 = vmatprep.subr.mxu0 0.0
    %1879 = vmatpush1.msra.mxu0 0.0
    %1880 = vmatprep.subr.mxu0 0.0
    %1881 = vmatpush1.msra.mxu0 %v1526
    %1882 = vmatprep.subr.mxu0 0.0
    %1883 = vmatpush1.msra.mxu0 %v1525
    %1884 = vmatprep.subr.mxu0 0.0
    %1885 = vmatpush1.msra.mxu0 %v1524
    %1886 = vmatprep.subr.mxu0 0.0
    %1887 = vmatpush1.msra.mxu0 %v1523
    %1888 = vmatprep.subr.mxu0 0.0
    %1889 = vmatpush2.msra.mxu0 0.0
    %1890 = vmatprep.subr.mxu0 0.0
    %1891 = vmatpush2.msra.mxu0 0.0
    %1892 = vmatprep.subr.mxu0 0.0
    %1893 = vmatpush2.msra.mxu0 0.0
    %1894 = vmatprep.subr.mxu0 0.0
    %1895 = vmatpush2.msra.mxu0 0.0
    %1896 = vmatprep.subr.mxu0 0.0
    %1897 = vmatpush2.msra.mxu0 0.0
    %1898 = vmatprep.subr.mxu0 0.0
    %1899 = vmatpush2.msra.mxu0 0.0
    %1900 = vmatprep.subr.mxu0 0.0
    %1901 = vmatpush2.msra.mxu0 0.0
    %1902 = vmatprep.subr.mxu0 0.0
    %1903 = vmatpush2.msra.mxu0 0.0
    %1904 = vmatprep.subr.mxu0 0.0
    %1905 = vmatpush2.msra.mxu0 0.0
    %1906 = vmatprep.subr.mxu0 0.0
    %1907 = vmatpush2.msra.mxu0 0.0
    %1908 = vmatprep.subr.mxu0 0.0
    %1909 = vmatpush2.msra.mxu0 0.0
    %1910 = vmatprep.subr.mxu0 0.0
    %1911 = vmatpush2.msra.mxu0 0.0
    %1912 = vmatprep.subr.mxu0 0.0
    %1913 = vmatpush2.msra.mxu0 0.0
    %1914 = vmatprep.subr.mxu0 0.0
    %1915 = vmatpush2.msra.mxu0 0.0
    %1916 = vmatprep.subr.mxu0 0.0
    %1917 = vmatpush2.msra.mxu0 0.0
    %1918 = vmatprep.subr.mxu0 0.0
    %1919 = vmatpush2.msra.mxu0 0.0
    %1920 = vmatprep.mubr.f32.mxu0 0.0
    %1921 = vmatmul.mubr.f32.gmra.mxu0 %v1854
    %v1922 = vpop.f32.mrf.mxu0
    %v1923 = vadd.f32 0.0, %v1922
    %v1924 = vpop.f32.mrf.mxu0
    %1925 = vdwg.mxu0
    %v1927 = vrot.slane %v1923, 2
    %v1929 = vadd.f32 %v1849, %v1927
    %v1930 = vxor.u32 %v1929, 2147483648
    %v1931 = vmul.f32 %v1930, 1.442695
    %v1932 = vpow.pop %v1931
    %v1933 = vadd.f32 %v1932, 1.0
    %v1934 = vrcp.pop %v1933
    %v1935 = vmul.f32 1.0, %v1934
    %v1936 = vtanh.pop %v1929
    %v1938 = vrot.slane %v1840, 6
    %v1940 = vmul.f32 %v1935, %v1938
    %1942 = vrot.lane.b32.xlu0 %v1936, 32
    %v1943 = vpop.permute.xlu0 %1942
    %v1945 = vmul.f32 %v1935, %v1943
    %1947 = vrot.lane.b32.xlu0 %v1945, 32
    %v1948 = vpop.permute.xlu0 %1947
    %v1950 = vadd.f32 %v1940, %v1948
    %v1951 = vtanh.pop %v1950
    %1953 = vrot.lane.b32.xlu0 %v1951, 32
    %v1954 = vpop.permute.xlu0 %1953
    %v1956 = vmul.f32 %v1935, %v1954
    %v1957 = vadd.f32 %v1441, %v1520
    %v1959 = vrot.slane %v1956, 6
    %1960 = vrot.lane.b32.xlu0 %v1959, 64
    %v1961 = vpop.permute.xlu0 %1960
    %v1962 = vsel %vm1528, %v1961, 0
    %1964 = vmatprep.subr.mxu0 0.0
    %1965 = vmatpush1.msra.mxu0 0.0
    %1966 = vmatprep.subr.mxu0 0.0
    %1967 = vmatpush1.msra.mxu0 0.0
    %1968 = vmatprep.subr.mxu0 0.0
    %1969 = vmatpush1.msra.mxu0 0.0
    %1970 = vmatprep.subr.mxu0 0.0
    %1971 = vmatpush1.msra.mxu0 0.0
    %1972 = vmatprep.subr.mxu0 0.0
    %1973 = vmatpush1.msra.mxu0 0.0
    %1974 = vmatprep.subr.mxu0 0.0
    %1975 = vmatpush1.msra.mxu0 0.0
    %1976 = vmatprep.subr.mxu0 0.0
    %1977 = vmatpush1.msra.mxu0 0.0
    %1978 = vmatprep.subr.mxu0 0.0
    %1979 = vmatpush1.msra.mxu0 0.0
    %1980 = vmatprep.subr.mxu0 0.0
    %1981 = vmatpush1.msra.mxu0 0.0
    %1982 = vmatprep.subr.mxu0 0.0
    %1983 = vmatpush1.msra.mxu0 0.0
    %1984 = vmatprep.subr.mxu0 0.0
    %1985 = vmatpush1.msra.mxu0 0.0
    %1986 = vmatprep.subr.mxu0 0.0
    %1987 = vmatpush1.msra.mxu0 0.0
    %1988 = vmatprep.subr.mxu0 0.0
    %1989 = vmatpush1.msra.mxu0 %v1526
    %1990 = vmatprep.subr.mxu0 0.0
    %1991 = vmatpush1.msra.mxu0 %v1525
    %1992 = vmatprep.subr.mxu0 0.0
    %1993 = vmatpush1.msra.mxu0 %v1524
    %1994 = vmatprep.subr.mxu0 0.0
    %1995 = vmatpush1.msra.mxu0 %v1523
    %1996 = vmatprep.subr.mxu0 0.0
    %1997 = vmatpush2.msra.mxu0 0.0
    %1998 = vmatprep.subr.mxu0 0.0
    %1999 = vmatpush2.msra.mxu0 0.0
    %2000 = vmatprep.subr.mxu0 0.0
    %2001 = vmatpush2.msra.mxu0 0.0
    %2002 = vmatprep.subr.mxu0 0.0
    %2003 = vmatpush2.msra.mxu0 0.0
    %2004 = vmatprep.subr.mxu0 0.0
    %2005 = vmatpush2.msra.mxu0 0.0
    %2006 = vmatprep.subr.mxu0 0.0
    %2007 = vmatpush2.msra.mxu0 0.0
    %2008 = vmatprep.subr.mxu0 0.0
    %2009 = vmatpush2.msra.mxu0 0.0
    %2010 = vmatprep.subr.mxu0 0.0
    %2011 = vmatpush2.msra.mxu0 0.0
    %2012 = vmatprep.subr.mxu0 0.0
    %2013 = vmatpush2.msra.mxu0 0.0
    %2014 = vmatprep.subr.mxu0 0.0
    %2015 = vmatpush2.msra.mxu0 0.0
    %2016 = vmatprep.subr.mxu0 0.0
    %2017 = vmatpush2.msra.mxu0 0.0
    %2018 = vmatprep.subr.mxu0 0.0
    %2019 = vmatpush2.msra.mxu0 0.0
    %2020 = vmatprep.subr.mxu0 0.0
    %2021 = vmatpush2.msra.mxu0 0.0
    %2022 = vmatprep.subr.mxu0 0.0
    %2023 = vmatpush2.msra.mxu0 0.0
    %2024 = vmatprep.subr.mxu0 0.0
    %2025 = vmatpush2.msra.mxu0 0.0
    %2026 = vmatprep.subr.mxu0 0.0
    %2027 = vmatpush2.msra.mxu0 0.0
    %2028 = vmatprep.mubr.f32.mxu0 0.0
    %2029 = vmatmul.mubr.f32.gmra.mxu0 %v1962
    %v2030 = vpop.f32.mrf.mxu0
    %v2031 = vadd.f32 0.0, %v2030
    %v2032 = vpop.f32.mrf.mxu0
    %2033 = vdwg.mxu0
    %v2034 = vadd.f32 %v1957, %v2031
    %v2035 = vxor.u32 %v2034, 2147483648
    %v2036 = vmul.f32 %v2035, 1.442695
    %v2037 = vpow.pop %v2036
    %v2038 = vadd.f32 %v2037, 1.0
    %v2039 = vrcp.pop %v2038
    %v2040 = vmul.f32 1.0, %v2039
    %v2041 = vtanh.pop %v2034
    %v2043 = vrot.slane %v1950, 6
    %v2045 = vmul.f32 %v2040, %v2043
    %2047 = vrot.lane.b32.xlu0 %v2041, 32
    %v2048 = vpop.permute.xlu0 %2047
    %v2050 = vmul.f32 %v2040, %v2048
    %2052 = vrot.lane.b32.xlu0 %v2050, 32
    %v2053 = vpop.permute.xlu0 %2052
    %v2055 = vadd.f32 %v2045, %v2053
    %v2056 = vtanh.pop %v2055
    %2058 = vrot.lane.b32.xlu0 %v2056, 32
    %v2059 = vpop.permute.xlu0 %2058
    %v2061 = vmul.f32 %v2040, %v2059
    %v2062 = vadd.f32 %v1441, %v1628
    %2064 = vrot.lane.b32.xlu0 %v2061, 64
    %v2065 = vpop.permute.xlu0 %2064
    %v2066 = vsel %vm1528, %v2065, 0
    %2068 = vmatprep.subr.mxu0 0.0
    %2069 = vmatpush1.msra.mxu0 0.0
    %2070 = vmatprep.subr.mxu0 0.0
    %2071 = vmatpush1.msra.mxu0 0.0
    %2072 = vmatprep.subr.mxu0 0.0
    %2073 = vmatpush1.msra.mxu0 0.0
    %2074 = vmatprep.subr.mxu0 0.0
    %2075 = vmatpush1.msra.mxu0 0.0
    %2076 = vmatprep.subr.mxu0 0.0
    %2077 = vmatpush1.msra.mxu0 0.0
    %2078 = vmatprep.subr.mxu0 0.0
    %2079 = vmatpush1.msra.mxu0 0.0
    %2080 = vmatprep.subr.mxu0 0.0
    %2081 = vmatpush1.msra.mxu0 0.0
    %2082 = vmatprep.subr.mxu0 0.0
    %2083 = vmatpush1.msra.mxu0 0.0
    %2084 = vmatprep.subr.mxu0 0.0
    %2085 = vmatpush1.msra.mxu0 0.0
    %2086 = vmatprep.subr.mxu0 0.0
    %2087 = vmatpush1.msra.mxu0 0.0
    %2088 = vmatprep.subr.mxu0 0.0
    %2089 = vmatpush1.msra.mxu0 0.0
    %2090 = vmatprep.subr.mxu0 0.0
    %2091 = vmatpush1.msra.mxu0 0.0
    %2092 = vmatprep.subr.mxu0 0.0
    %2093 = vmatpush1.msra.mxu0 %v1526
    %2094 = vmatprep.subr.mxu0 0.0
    %2095 = vmatpush1.msra.mxu0 %v1525
    %2096 = vmatprep.subr.mxu0 0.0
    %2097 = vmatpush1.msra.mxu0 %v1524
    %2098 = vmatprep.subr.mxu0 0.0
    %2099 = vmatpush1.msra.mxu0 %v1523
    %2100 = vmatprep.subr.mxu0 0.0
    %2101 = vmatpush2.msra.mxu0 0.0
    %2102 = vmatprep.subr.mxu0 0.0
    %2103 = vmatpush2.msra.mxu0 0.0
    %2104 = vmatprep.subr.mxu0 0.0
    %2105 = vmatpush2.msra.mxu0 0.0
    %2106 = vmatprep.subr.mxu0 0.0
    %2107 = vmatpush2.msra.mxu0 0.0
    %2108 = vmatprep.subr.mxu0 0.0
    %2109 = vmatpush2.msra.mxu0 0.0
    %2110 = vmatprep.subr.mxu0 0.0
    %2111 = vmatpush2.msra.mxu0 0.0
    %2112 = vmatprep.subr.mxu0 0.0
    %2113 = vmatpush2.msra.mxu0 0.0
    %2114 = vmatprep.subr.mxu0 0.0
    %2115 = vmatpush2.msra.mxu0 0.0
    %2116 = vmatprep.subr.mxu0 0.0
    %2117 = vmatpush2.msra.mxu0 0.0
    %2118 = vmatprep.subr.mxu0 0.0
    %2119 = vmatpush2.msra.mxu0 0.0
    %2120 = vmatprep.subr.mxu0 0.0
    %2121 = vmatpush2.msra.mxu0 0.0
    %2122 = vmatprep.subr.mxu0 0.0
    %2123 = vmatpush2.msra.mxu0 0.0
    %2124 = vmatprep.subr.mxu0 0.0
    %2125 = vmatpush2.msra.mxu0 0.0
    %2126 = vmatprep.subr.mxu0 0.0
    %2127 = vmatpush2.msra.mxu0 0.0
    %2128 = vmatprep.subr.mxu0 0.0
    %2129 = vmatpush2.msra.mxu0 0.0
    %2130 = vmatprep.subr.mxu0 0.0
    %2131 = vmatpush2.msra.mxu0 0.0
    %2132 = vmatprep.mubr.f32.mxu0 0.0
    %2133 = vmatmul.mubr.f32.gmra.mxu0 %v2066
    %v2134 = vpop.f32.mrf.mxu0
    %v2135 = vadd.f32 0.0, %v2134
    %v2136 = vpop.f32.mrf.mxu0
    %2137 = vdwg.mxu0
    %v2139 = vrot.slane %v2135, 6
    %v2141 = vadd.f32 %v2062, %v2139
    %v2142 = vxor.u32 %v2141, 2147483648
    %v2143 = vmul.f32 %v2142, 1.442695
    %v2144 = vpow.pop %v2143
    %v2145 = vadd.f32 %v2144, 1.0
    %v2146 = vrcp.pop %v2145
    %v2147 = vmul.f32 1.0, %v2146
    %v2148 = vtanh.pop %v2141
    %v2150 = vrot.slane %v2055, 6
    %v2152 = vmul.f32 %v2147, %v2150
    %2154 = vrot.lane.b32.xlu0 %v2148, 32
    %v2155 = vpop.permute.xlu0 %2154
    %v2157 = vmul.f32 %v2147, %v2155
    %2159 = vrot.lane.b32.xlu0 %v2157, 32
    %v2160 = vpop.permute.xlu0 %2159
    %v2162 = vadd.f32 %v2152, %v2160
    %v2163 = vtanh.pop %v2162
    %2165 = vrot.lane.b32.xlu0 %v2163, 32
    %v2166 = vpop.permute.xlu0 %2165
    %v2168 = vmul.f32 %v2147, %v2166
    %v2169 = vadd.f32 %v1441, %v1737
    %v2171 = vrot.slane %v2168, 2
    %2172 = vrot.lane.b32.xlu0 %v2171, 64
    %v2173 = vpop.permute.xlu0 %2172
    %v2174 = vsel %vm1528, %v2173, 0
    %2176 = vmatprep.subr.mxu0 0.0
    %2177 = vmatpush1.msra.mxu0 0.0
    %2178 = vmatprep.subr.mxu0 0.0
    %2179 = vmatpush1.msra.mxu0 0.0
    %2180 = vmatprep.subr.mxu0 0.0
    %2181 = vmatpush1.msra.mxu0 0.0
    %2182 = vmatprep.subr.mxu0 0.0
    %2183 = vmatpush1.msra.mxu0 0.0
    %2184 = vmatprep.subr.mxu0 0.0
    %2185 = vmatpush1.msra.mxu0 0.0
    %2186 = vmatprep.subr.mxu0 0.0
    %2187 = vmatpush1.msra.mxu0 0.0
    %2188 = vmatprep.subr.mxu0 0.0
    %2189 = vmatpush1.msra.mxu0 0.0
    %2190 = vmatprep.subr.mxu0 0.0
    %2191 = vmatpush1.msra.mxu0 0.0
    %2192 = vmatprep.subr.mxu0 0.0
    %2193 = vmatpush1.msra.mxu0 0.0
    %2194 = vmatprep.subr.mxu0 0.0
    %2195 = vmatpush1.msra.mxu0 0.0
    %2196 = vmatprep.subr.mxu0 0.0
    %2197 = vmatpush1.msra.mxu0 0.0
    %2198 = vmatprep.subr.mxu0 0.0
    %2199 = vmatpush1.msra.mxu0 0.0
    %2200 = vmatprep.subr.mxu0 0.0
    %2201 = vmatpush1.msra.mxu0 %v1526
    %2202 = vmatprep.subr.mxu0 0.0
    %2203 = vmatpush1.msra.mxu0 %v1525
    %2204 = vmatprep.subr.mxu0 0.0
    %2205 = vmatpush1.msra.mxu0 %v1524
    %2206 = vmatprep.subr.mxu0 0.0
    %2207 = vmatpush1.msra.mxu0 %v1523
    %2208 = vmatprep.subr.mxu0 0.0
    %2209 = vmatpush2.msra.mxu0 0.0
    %2210 = vmatprep.subr.mxu0 0.0
    %2211 = vmatpush2.msra.mxu0 0.0
    %2212 = vmatprep.subr.mxu0 0.0
    %2213 = vmatpush2.msra.mxu0 0.0
    %2214 = vmatprep.subr.mxu0 0.0
    %2215 = vmatpush2.msra.mxu0 0.0
    %2216 = vmatprep.subr.mxu0 0.0
    %2217 = vmatpush2.msra.mxu0 0.0
    %2218 = vmatprep.subr.mxu0 0.0
    %2219 = vmatpush2.msra.mxu0 0.0
    %2220 = vmatprep.subr.mxu0 0.0
    %2221 = vmatpush2.msra.mxu0 0.0
    %2222 = vmatprep.subr.mxu0 0.0
    %2223 = vmatpush2.msra.mxu0 0.0
    %2224 = vmatprep.subr.mxu0 0.0
    %2225 = vmatpush2.msra.mxu0 0.0
    %2226 = vmatprep.subr.mxu0 0.0
    %2227 = vmatpush2.msra.mxu0 0.0
    %2228 = vmatprep.subr.mxu0 0.0
    %2229 = vmatpush2.msra.mxu0 0.0
    %2230 = vmatprep.subr.mxu0 0.0
    %2231 = vmatpush2.msra.mxu0 0.0
    %2232 = vmatprep.subr.mxu0 0.0
    %2233 = vmatpush2.msra.mxu0 0.0
    %2234 = vmatprep.subr.mxu0 0.0
    %2235 = vmatpush2.msra.mxu0 0.0
    %2236 = vmatprep.subr.mxu0 0.0
    %2237 = vmatpush2.msra.mxu0 0.0
    %2238 = vmatprep.subr.mxu0 0.0
    %2239 = vmatpush2.msra.mxu0 0.0
    %2240 = vmatprep.mubr.f32.mxu0 0.0
    %2241 = vmatmul.mubr.f32.gmra.mxu0 %v2174
    %v2242 = vpop.f32.mrf.mxu0
    %v2243 = vadd.f32 0.0, %v2242
    %v2244 = vpop.f32.mrf.mxu0
    %2245 = vdwg.mxu0
    %v2247 = vrot.slane %v2243, 4
    %v2249 = vadd.f32 %v2169, %v2247
    %v2250 = vxor.u32 %v2249, 2147483648
    %v2251 = vmul.f32 %v2250, 1.442695
    %v2252 = vpow.pop %v2251
    %v2253 = vadd.f32 %v2252, 1.0
    %v2254 = vrcp.pop %v2253
    %v2255 = vmul.f32 1.0, %v2254
    %v2256 = vtanh.pop %v2249
    %v2258 = vrot.slane %v2162, 6
    %v2260 = vmul.f32 %v2255, %v2258
    %2262 = vrot.lane.b32.xlu0 %v2256, 32
    %v2263 = vpop.permute.xlu0 %2262
    %v2265 = vmul.f32 %v2255, %v2263
    %2267 = vrot.lane.b32.xlu0 %v2265, 32
    %v2268 = vpop.permute.xlu0 %2267
    %v2270 = vadd.f32 %v2260, %v2268
    %v2271 = vtanh.pop %v2270
    %2273 = vrot.lane.b32.xlu0 %v2271, 32
    %v2274 = vpop.permute.xlu0 %2273
    %v2276 = vmul.f32 %v2255, %v2274
    %v2277 = vadd.f32 %v1441, %v1847
    %v2279 = vrot.slane %v2276, 4
    %2280 = vrot.lane.b32.xlu0 %v2279, 64
    %v2281 = vpop.permute.xlu0 %2280
    %v2282 = vsel %vm1528, %v2281, 0
    %2284 = vmatprep.subr.mxu0 0.0
    %2285 = vmatpush1.msra.mxu0 0.0
    %2286 = vmatprep.subr.mxu0 0.0
    %2287 = vmatpush1.msra.mxu0 0.0
    %2288 = vmatprep.subr.mxu0 0.0
    %2289 = vmatpush1.msra.mxu0 0.0
    %2290 = vmatprep.subr.mxu0 0.0
    %2291 = vmatpush1.msra.mxu0 0.0
    %2292 = vmatprep.subr.mxu0 0.0
    %2293 = vmatpush1.msra.mxu0 0.0
    %2294 = vmatprep.subr.mxu0 0.0
    %2295 = vmatpush1.msra.mxu0 0.0
    %2296 = vmatprep.subr.mxu0 0.0
    %2297 = vmatpush1.msra.mxu0 0.0
    %2298 = vmatprep.subr.mxu0 0.0
    %2299 = vmatpush1.msra.mxu0 0.0
    %2300 = vmatprep.subr.mxu0 0.0
    %2301 = vmatpush1.msra.mxu0 0.0
    %2302 = vmatprep.subr.mxu0 0.0
    %2303 = vmatpush1.msra.mxu0 0.0
    %2304 = vmatprep.subr.mxu0 0.0
    %2305 = vmatpush1.msra.mxu0 0.0
    %2306 = vmatprep.subr.mxu0 0.0
    %2307 = vmatpush1.msra.mxu0 0.0
    %2308 = vmatprep.subr.mxu0 0.0
    %2309 = vmatpush1.msra.mxu0 %v1526
    %2310 = vmatprep.subr.mxu0 0.0
    %2311 = vmatpush1.msra.mxu0 %v1525
    %2312 = vmatprep.subr.mxu0 0.0
    %2313 = vmatpush1.msra.mxu0 %v1524
    %2314 = vmatprep.subr.mxu0 0.0
    %2315 = vmatpush1.msra.mxu0 %v1523
    %2316 = vmatprep.subr.mxu0 0.0
    %2317 = vmatpush2.msra.mxu0 0.0
    %2318 = vmatprep.subr.mxu0 0.0
    %2319 = vmatpush2.msra.mxu0 0.0
    %2320 = vmatprep.subr.mxu0 0.0
    %2321 = vmatpush2.msra.mxu0 0.0
    %2322 = vmatprep.subr.mxu0 0.0
    %2323 = vmatpush2.msra.mxu0 0.0
    %2324 = vmatprep.subr.mxu0 0.0
    %2325 = vmatpush2.msra.mxu0 0.0
    %2326 = vmatprep.subr.mxu0 0.0
    %2327 = vmatpush2.msra.mxu0 0.0
    %2328 = vmatprep.subr.mxu0 0.0
    %2329 = vmatpush2.msra.mxu0 0.0
    %2330 = vmatprep.subr.mxu0 0.0
    %2331 = vmatpush2.msra.mxu0 0.0
    %2332 = vmatprep.subr.mxu0 0.0
    %2333 = vmatpush2.msra.mxu0 0.0
    %2334 = vmatprep.subr.mxu0 0.0
    %2335 = vmatpush2.msra.mxu0 0.0
    %2336 = vmatprep.subr.mxu0 0.0
    %2337 = vmatpush2.msra.mxu0 0.0
    %2338 = vmatprep.subr.mxu0 0.0
    %2339 = vmatpush2.msra.mxu0 0.0
    %2340 = vmatprep.subr.mxu0 0.0
    %2341 = vmatpush2.msra.mxu0 0.0
    %2342 = vmatprep.subr.mxu0 0.0
    %2343 = vmatpush2.msra.mxu0 0.0
    %2344 = vmatprep.subr.mxu0 0.0
    %2345 = vmatpush2.msra.mxu0 0.0
    %2346 = vmatprep.subr.mxu0 0.0
    %2347 = vmatpush2.msra.mxu0 0.0
    %2348 = vmatprep.mubr.f32.mxu0 0.0
    %2349 = vmatmul.mubr.f32.gmra.mxu0 %v2282
    %v2350 = vpop.f32.mrf.mxu0
    %v2351 = vadd.f32 0.0, %v2350
    %v2352 = vpop.f32.mrf.mxu0
    %2353 = vdwg.mxu0
    %v2355 = vrot.slane %v2351, 2
    %v2357 = vadd.f32 %v2277, %v2355
    %v2358 = vxor.u32 %v2357, 2147483648
    %v2359 = vmul.f32 %v2358, 1.442695
    %v2360 = vpow.pop %v2359
    %v2361 = vadd.f32 %v2360, 1.0
    %v2362 = vrcp.pop %v2361
    %v2363 = vmul.f32 1.0, %v2362
    %v2364 = vtanh.pop %v2357
    %v2366 = vrot.slane %v2270, 6
    %v2368 = vmul.f32 %v2363, %v2366
    %2370 = vrot.lane.b32.xlu0 %v2364, 32
    %v2371 = vpop.permute.xlu0 %2370
    %v2373 = vmul.f32 %v2363, %v2371
    %2375 = vrot.lane.b32.xlu0 %v2373, 32
    %v2376 = vpop.permute.xlu0 %2375
    %v2378 = vadd.f32 %v2368, %v2376
    %v2379 = vtanh.pop %v2378
    %2381 = vrot.lane.b32.xlu0 %v2379, 32
    %v2382 = vpop.permute.xlu0 %2381
    %v2384 = vmul.f32 %v2363, %v2382
    %v2385 = vsel %vm86, %v1626, %v1736
    %vm2386 = vcmask 1043456
    %v2387 = vsel %vm2386, %v2385, %v1846
    %vm2388 = vcmask 1045504
    %v2389 = vsel %vm2388, %v2387, %v1956
    %v2390 = vsel %vm86, %v2061, %v2168
    %v2391 = vsel %vm2386, %v2390, %v2276
    %v2392 = vsel %vm2388, %v2391, %v2384
    %v2393 = vld [vmem:[%s15] sm:$0xff]
    %v2394 = vld [vmem:[%s15 + $0x8] sm:$0xff]
    %v2395 = vld [vmem:[%s15 + $0x10] sm:$0xff]
    %v2396 = vld [vmem:[%s15 + $0x18] sm:$0xff]
    %v2397 = vld [vmem:[%s16] sm:$0x1]
    %v2399 = vlaneseq
    %v2400 = vshrl.u32 %v2399, 7
    %v2401 = vsub.s32 0, %v2400
    %v2402 = vrot.slane %v2397, %v2401
    %2406 = vrot.lane.b32.xlu0 %v2389, 64
    %v2407 = vpop.permute.xlu0 %2406
    %2408 = vrot.lane.b32.xlu0 %v2392, 64
    %v2409 = vpop.permute.xlu0 %2408
    %v2410 = vsel %vm1528, %v2407, 0
    %v2412 = vsel %vm1528, %v2409, 0
    %2414 = vmatprep.subr.mxu0 0.0
    %2415 = vmatpush1.msra.mxu0 0.0
    %2416 = vmatprep.subr.mxu0 0.0
    %2417 = vmatpush1.msra.mxu0 0.0
    %2418 = vmatprep.subr.mxu0 0.0
    %2419 = vmatpush1.msra.mxu0 0.0
    %2420 = vmatprep.subr.mxu0 0.0
    %2421 = vmatpush1.msra.mxu0 0.0
    %2422 = vmatprep.subr.mxu0 0.0
    %2423 = vmatpush1.msra.mxu0 0.0
    %2424 = vmatprep.subr.mxu0 0.0
    %2425 = vmatpush1.msra.mxu0 0.0
    %2426 = vmatprep.subr.mxu0 0.0
    %2427 = vmatpush1.msra.mxu0 0.0
    %2428 = vmatprep.subr.mxu0 0.0
    %2429 = vmatpush1.msra.mxu0 0.0
    %2430 = vmatprep.subr.mxu0 0.0
    %2431 = vmatpush1.msra.mxu0 0.0
    %2432 = vmatprep.subr.mxu0 0.0
    %2433 = vmatpush1.msra.mxu0 0.0
    %2434 = vmatprep.subr.mxu0 0.0
    %2435 = vmatpush1.msra.mxu0 0.0
    %2436 = vmatprep.subr.mxu0 0.0
    %2437 = vmatpush1.msra.mxu0 0.0
    %2438 = vmatprep.subr.mxu0 0.0
    %2439 = vmatpush1.msra.mxu0 %v2396
    %2440 = vmatprep.subr.mxu0 0.0
    %2441 = vmatpush1.msra.mxu0 %v2395
    %2442 = vmatprep.subr.mxu0 0.0
    %2443 = vmatpush1.msra.mxu0 %v2394
    %2444 = vmatprep.subr.mxu0 0.0
    %2445 = vmatpush1.msra.mxu0 %v2393
    %2446 = vmatprep.subr.mxu0 0.0
    %2447 = vmatpush2.msra.mxu0 0.0
    %2448 = vmatprep.subr.mxu0 0.0
    %2449 = vmatpush2.msra.mxu0 0.0
    %2450 = vmatprep.subr.mxu0 0.0
    %2451 = vmatpush2.msra.mxu0 0.0
    %2452 = vmatprep.subr.mxu0 0.0
    %2453 = vmatpush2.msra.mxu0 0.0
    %2454 = vmatprep.subr.mxu0 0.0
    %2455 = vmatpush2.msra.mxu0 0.0
    %2456 = vmatprep.subr.mxu0 0.0
    %2457 = vmatpush2.msra.mxu0 0.0
    %2458 = vmatprep.subr.mxu0 0.0
    %2459 = vmatpush2.msra.mxu0 0.0
    %2460 = vmatprep.subr.mxu0 0.0
    %2461 = vmatpush2.msra.mxu0 0.0
    %2462 = vmatprep.subr.mxu0 0.0
    %2463 = vmatpush2.msra.mxu0 0.0
    %2464 = vmatprep.subr.mxu0 0.0
    %2465 = vmatpush2.msra.mxu0 0.0
    %2466 = vmatprep.subr.mxu0 0.0
    %2467 = vmatpush2.msra.mxu0 0.0
    %2468 = vmatprep.subr.mxu0 0.0
    %2469 = vmatpush2.msra.mxu0 0.0
    %2470 = vmatprep.subr.mxu0 0.0
    %2471 = vmatpush2.msra.mxu0 0.0
    %2472 = vmatprep.subr.mxu0 0.0
    %2473 = vmatpush2.msra.mxu0 0.0
    %2474 = vmatprep.subr.mxu0 0.0
    %2475 = vmatpush2.msra.mxu0 0.0
    %2476 = vmatprep.subr.mxu0 0.0
    %2477 = vmatpush2.msra.mxu0 0.0
    %2478 = vmatprep.mubr.f32.mxu0 0.0
    %2479 = vmatmul.mubr.f32.gmra.mxu0 %v2410
    %v2480 = vpop.f32.mrf.mxu0
    %v2481 = vadd.f32 %v2402, %v2480
    %v2482 = vpop.f32.mrf.mxu0
    %2483 = vmatprep.mubr.f32.mxu0 0.0
    %2484 = vmatmul.mubr.f32.gmra.mxu0 %v2412
    %v2485 = vpop.f32.mrf.mxu0
    %v2486 = vadd.f32 %v2402, %v2485
    %v2487 = vpop.f32.mrf.mxu0
    %2488 = vdwg.mxu0
    %vm2489 = vcmask 48128
    %2490 = vst.msk [vmem:[%s17] sm:$0xff] %vm2489, %v2481
    %2491 = vst.msk [vmem:[%s17 + $0x8] sm:$0xff] %vm2489, %v2486
    // Predicated region
    $region70: #{sketch_rnn_forward.1} parent=1 // pred_check
      _
    $region71: #{sketch_rnn_forward.1} parent=1 // pred_check_branch
      %2493 = sbr.rel (0) target = $region73
    $region72: #{sketch_rnn_forward.1} parent=1 // pred_region
      _
    $region73: #{sketch_rnn_forward.1} parent=1 // pred_fallthru
      _
    // Predicated region
    $region74: #{sketch_rnn_forward.1} parent=1 // pred_check
      _
    $region75: #{sketch_rnn_forward.1} parent=1 // pred_check_branch
      %2495 = sbr.rel (0) target = $region77
    $region76: #{sketch_rnn_forward.1} parent=1 // pred_region
      %s2497 = ssub.s32 32, 32
      %2498 = vsyncadd [#allocation3], %s2497
      %s2500 = sshll.u32 [#allocation2], 4
      %s2501 = int_to_ptr.vmem [resolvable:$true] %s2500
      %2503 = dma.vmem_to_hbm [thread:$0]  %s2501, 32, %s18, [#allocation3]
    $region77: #{sketch_rnn_forward.1} parent=1 // pred_fallthru
      _
    // Predicated region
    $region78: #{sketch_rnn_forward.1} parent=1 // pred_check
      _
    $region79: #{sketch_rnn_forward.1} parent=1 // pred_check_branch
      %2505 = sbr.rel (0) target = $region81
    $region80: #{sketch_rnn_forward.1} parent=1 // pred_region
      %s2507 = ssub.s32 32, 32
      %2508 = vsyncadd [#allocation5], %s2507
      %s2510 = sshll.u32 [#allocation4], 4
      %s2511 = int_to_ptr.vmem [resolvable:$true] %s2510
      %2513 = dma.vmem_to_hbm [thread:$0]  %s2511, 32, %s19, [#allocation5]
    $region81: #{sketch_rnn_forward.1} parent=1 // pred_fallthru
      _
    // Predicated region
    $region82: #{sketch_rnn_forward.1} parent=1 // pred_check
      _
    $region83: #{sketch_rnn_forward.1} parent=1 // pred_check_branch
      %2515 = sbr.rel (0) target = $region85
    $region84: #{sketch_rnn_forward.1} parent=1 // pred_region
      _
    $region85: #{sketch_rnn_forward.1} parent=1 // pred_fallthru
      _
    // Predicated region
    $region86: #{sketch_rnn_forward.1} parent=1 // pred_check
      _
    $region87: #{sketch_rnn_forward.1} parent=1 // pred_check_branch
      %2517 = sbr.rel (0) target = $region89
    $region88: #{sketch_rnn_forward.1} parent=1 // pred_region
      %2518 = dma.done [#allocation3], 32
    $region89: #{sketch_rnn_forward.1} parent=1 // pred_fallthru
      _
    // Predicated region
    $region90: #{sketch_rnn_forward.1} parent=1 // pred_check
      _
    $region91: #{sketch_rnn_forward.1} parent=1 // pred_check_branch
      %2520 = sbr.rel (0) target = $region93
    $region92: #{sketch_rnn_forward.1} parent=1 // pred_region
      %2521 = dma.done [#allocation5], 32
    $region93: #{sketch_rnn_forward.1} parent=1 // pred_fallthru
      _
    %2522 = vsyncpa [#allocation3], 1
    %2523 = vsyncpa [#allocation5], 1

</llo_original>
